<compile_context>
chip_gen: v6e
topology: v6e:2x2x1
jax: 0.10.0
libtpu: 0.0.40
codegen_flags: <defaults>
</compile_context>

<pallas_src>
import jax
import jax.numpy as jnp
from jax.experimental import pallas as pl
from jax.experimental.pallas import tpu as pltpu


def _pick_block_batch(B, cap=16):
    """Largest divisor of B <= cap (VMEM budget ~<=16 samples/step is comfortably
    inside a 32 MiB scoped-VMEM limit even on v7x).  When B is large enough, prefer
    a split that keeps >=2 grid blocks so the 'parallel' grid axis can be sharded
    across v7x's two TensorCores."""
    divisors = [d for d in range(1, min(cap, B) + 1) if B % d == 0]
    bb = max(divisors)
    if B // bb == 1 and B >= 4:
        two_plus = [d for d in divisors if B // d >= 2]
        if two_plus:
            bb = max(two_plus)
    return bb


def combined_cnn_forward(x, params, *, mxu_dtype=jnp.float32, block_batch=None,
                         eps=1e-5):
    # Mirror the PyTorch forward's dim handling.
    if x.ndim == 4:
        x = x.reshape(x.shape[0], x.shape[1], -1)
    elif x.ndim != 3:
        raise ValueError(f"Expected input to be 3D or 4D, got shape: {x.shape}")
    B, C, T = x.shape

    Bb = _pick_block_batch(B) if block_batch is None else block_batch
    assert B % Bb == 0, (B, Bb)
    n_blocks = B // Bb
    N = Bb * T                          # lanes (batch*time) per grid step
    if n_blocks > 1:
        assert N % 128 == 0, "Bb*T must be a multiple of 128 with multiple grid blocks"
        # TODO(synk): pad T (and zero the padded columns in the pooling matrix) to
        # support T that is not a multiple of 128 with n_blocks > 1.
    n_classes = params["wfc"].shape[0]

    # Lane-dense layout: channels on sublanes, (batch, time) flattened onto lanes.
    # One tiny HBM transpose in the wrapper; everything in-kernel stays lane-dense.
    x_cn = jnp.transpose(x.astype(jnp.float32), (1, 0, 2)).reshape(C, B * T)

    # Fold conv bias + BatchNorm (eval) per layer:  scale -> into the weights (f32,
    # then cast once to the MXU dtype);  shift -> a single per-channel add in-kernel.
    layer_ops = []
    for lyr in params["layers"]:
        w = lyr["w"].astype(jnp.float32)                      # (Co, Ci, 3)
        b = lyr["b"].astype(jnp.float32)                      # (Co,)
        scale = lyr["gamma"] / jnp.sqrt(lyr["var"] + eps)     # (Co,)
        shift = (b - lyr["mean"]) * scale + lyr["beta"]       # (Co,)
        w_fold = (w * scale[:, None, None]).transpose(2, 0, 1)  # (3, Co, Ci), scaled
        layer_ops.append((w_fold.astype(mxu_dtype),
                          shift.reshape(-1, 1).astype(jnp.float32)))
    wfc = params["wfc"].astype(jnp.float32)                   # (n_classes, 128)
    bfc = params["bfc"].astype(jnp.float32).reshape(-1, 1)    # (n_classes, 1)

    # Per-sample average-pool matrix: pool[b, n] = 1/T if n // T == b else 0.
    pool = jnp.repeat(jnp.eye(Bb, dtype=jnp.float32), T, axis=1) / T   # (Bb, N)

    def kernel(x_ref, w1, s1, w2, s2, w3, s3, w4, s4,
               wfc_ref, bfc_ref, pool_ref, out_ref):
        # Lane index mod T -> conv boundary masks.  They implement the k=3 zero
        # padding exactly AND neutralize cross-sample leakage of the circular rolls.
        lane_t = jax.lax.broadcasted_iota(jnp.int32, (1, N), 1) % T
        not_first = (lane_t != 0).astype(mxu_dtype)       # zero the "t-1" tap at t==0
        not_last = (lane_t != (T - 1)).astype(mxu_dtype)  # zero the "t+1" tap at t==T-1

        def conv_bn_relu(h, w_ref, s_ref):
            hm = h.astype(mxu_dtype)                                 # (Ci, N)
            h_prev = pltpu.roll(hm, shift=1, axis=1) * not_first     # h[:, t-1]
            h_next = pltpu.roll(hm, shift=N - 1, axis=1) * not_last  # h[:, t+1]
            y = (jnp.dot(w_ref[0], h_prev, preferred_element_type=jnp.float32)
                 + jnp.dot(w_ref[1], hm, preferred_element_type=jnp.float32)
                 + jnp.dot(w_ref[2], h_next, preferred_element_type=jnp.float32))
            y = y + s_ref[...]                  # folded conv-bias + BN shift
            return jnp.maximum(y, 0.0)          # ReLU; Dropout(0.5) is identity in eval

        h = x_ref[...]                          # (C, N) f32
        h = conv_bn_relu(h, w1, s1)             # (16, N)
        h = conv_bn_relu(h, w2, s2)             # (32, N)
        h = conv_bn_relu(h, w3, s3)             # (64, N)
        h = conv_bn_relu(h, w4, s4)             # (128, N)

        # AdaptiveAvgPool1d(1): per-sample mean over T lanes as one MXU contraction.
        pooled = jax.lax.dot_general(h, pool_ref[...],
                                     (((1,), (1,)), ((), ())),
                                     preferred_element_type=jnp.float32)  # (128, Bb)
        logits = jnp.dot(wfc_ref[...], pooled,
                         preferred_element_type=jnp.float32) + bfc_ref[...]  # (ncls, Bb)
        # LogSoftmax over the class (sublane) axis.
        m = jnp.max(logits, axis=0, keepdims=True)
        lse = m + jnp.log(jnp.sum(jnp.exp(logits - m), axis=0, keepdims=True))
        out_ref[0] = logits - lse

    inputs = [x_cn]
    in_specs = [pl.BlockSpec((C, N), lambda i: (0, i))]
    for (w_fold, shift) in layer_ops:           # constants: same block every step
        inputs += [w_fold, shift]
        in_specs += [pl.BlockSpec(w_fold.shape, lambda i: (0, 0, 0)),
                     pl.BlockSpec(shift.shape, lambda i: (0, 0))]
    inputs += [wfc, bfc, pool]
    in_specs += [pl.BlockSpec(wfc.shape, lambda i: (0, 0)),
                 pl.BlockSpec(bfc.shape, lambda i: (0, 0)),
                 pl.BlockSpec(pool.shape, lambda i: (0, 0))]

    out = pl.pallas_call(
        kernel,
        out_shape=jax.ShapeDtypeStruct((n_blocks, n_classes, Bb), jnp.float32),
        grid_spec=pltpu.PrefetchScalarGridSpec(
            num_scalar_prefetch=0,
            grid=(n_blocks,),
            in_specs=in_specs,
            out_specs=pl.BlockSpec((1, n_classes, Bb), lambda i: (i, 0, 0)),
        ),
        compiler_params=pltpu.CompilerParams(
            dimension_semantics=("parallel",),
            vmem_limit_bytes=32 * 1024 * 1024),
    )(*inputs)
    # (n_blocks, n_classes, Bb) -> (B, n_classes)
    return out.transpose(0, 2, 1).reshape(B, n_classes)


def init_params(key, n_classes, in_channels):
    """Deterministic synthetic params in raw PyTorch layout (folding is done in the
    wrapper, so the reference genuinely checks the fold).  Conv/FC weights use
    PyTorch-style uniform(-1/sqrt(fan_in), 1/sqrt(fan_in)); BN stats are non-trivial
    so the eval-mode affine is actually exercised."""
    channels = [in_channels, 16, 32, 64, 128]
    keys = jax.random.split(key, 5)
    layers = []
    for i in range(4):
        cin, cout = channels[i], channels[i + 1]
        kw, kb, kg, kbt, km, kv = jax.random.split(keys[i], 6)
        bound = 1.0 / float((cin * 3) ** 0.5)
        layers.append(dict(
            w=jax.random.uniform(kw, (cout, cin, 3), minval=-bound, maxval=bound,
                                 dtype=jnp.float32),
            b=jax.random.uniform(kb, (cout,), minval=-bound, maxval=bound,
                                 dtype=jnp.float32),
            gamma=jax.random.uniform(kg, (cout,), minval=0.5, maxval=1.5,
                                     dtype=jnp.float32),
            beta=0.1 * jax.random.normal(kbt, (cout,), dtype=jnp.float32),
            mean=0.1 * jax.random.normal(km, (cout,), dtype=jnp.float32),
            var=jax.random.uniform(kv, (cout,), minval=0.5, maxval=1.5,
                                   dtype=jnp.float32),
        ))
    kw, kb = jax.random.split(keys[4])
    bound = 1.0 / float(128 ** 0.5)
    wfc = jax.random.uniform(kw, (n_classes, 128), minval=-bound, maxval=bound,
                             dtype=jnp.float32)
    bfc = jax.random.uniform(kb, (n_classes,), minval=-bound, maxval=bound,
                             dtype=jnp.float32)
    return {"layers": layers, "wfc": wfc, "bfc": bfc}


def reference_forward(x, params, eps=1e-5):
    """Pure-JAX f32 reference (explicit pad + per-tap matmuls, un-folded BN)."""
    if x.ndim == 4:
        x = x.reshape(x.shape[0], x.shape[1], -1)
    h = jnp.transpose(x, (0, 2, 1)).astype(jnp.float32)            # (B, T, C)
    for lyr in params["layers"]:
        w, b = lyr["w"], lyr["b"]
        scale = lyr["gamma"] / jnp.sqrt(lyr["var"] + eps)
        shift = lyr["beta"] - lyr["mean"] * scale
        hp = jnp.pad(h, ((0, 0), (1, 1), (0, 0)))
        y = (hp[:, :-2] @ w[:, :, 0].T + hp[:, 1:-1] @ w[:, :, 1].T
             + hp[:, 2:] @ w[:, :, 2].T) + b                       # Conv1d(k=3, pad=1)
        y = y * scale + shift                                      # BatchNorm1d (eval)
        h = jnp.maximum(y, 0.0)                                    # ReLU
    pooled = jnp.mean(h, axis=1)                                   # AdaptiveAvgPool1d(1)
    logits = pooled @ params["wfc"].T + params["bfc"]              # Linear
    return jax.nn.log_softmax(logits, axis=-1)


if __name__ == "__main__":
    key = jax.random.PRNGKey(0)
    kx, kp, kx2 = jax.random.split(key, 3)

    B, C, H, W = 2, 4, 16, 16            # input (B, C, H, W) -> flattened T = 256
    n_classes = 5

    x = jax.random.normal(kx, (B, C, H, W), dtype=jnp.float32)
    params = init_params(kp, n_classes, C)
    ref = reference_forward(x, params)

    # Default path: f32 MXU inputs -> exact semantics, tight tolerance.
    out = jax.block_until_ready(combined_cnn_forward(x, params))
    assert out.shape == (B, n_classes)
    assert jnp.allclose(out, ref, atol=1e-4, rtol=1e-4), (out, ref)

    # Optional fast path: bf16 MXU inputs (weights scaled in f32 then cast once).
    # Accepted fast-path rounding: activations re-cast to bf16 each layer.
    out_bf16 = jax.block_until_ready(
        combined_cnn_forward(x, params, mxu_dtype=jnp.bfloat16))
    assert out_bf16.shape == (B, n_classes)
    assert jnp.allclose(out_bf16, ref, atol=3e-2, rtol=3e-2), (out_bf16, ref)

    # Multi-sample-per-block and multi-grid-step case: exercises the per-sample
    # boundary masks that also block cross-sample leakage of the lane rolls.
    B2 = 4
    x2 = jax.random.normal(kx2, (B2, C, H, W), dtype=jnp.float32)
    ref2 = reference_forward(x2, params)
    out2 = jax.block_until_ready(combined_cnn_forward(x2, params, block_batch=2))
    assert out2.shape == (B2, n_classes)
    assert jnp.allclose(out2, ref2, atol=1e-4, rtol=1e-4), (out2, ref2)

    print("KERNEL_OK")
</pallas_src>

<mosaic_0001>
module attributes {stable_mosaic.version = 11 : i64} {
  func.func @kernel(%arg0: i32, %arg1: memref<4x512xf32, #tpu.memory_space<vmem>>, %arg2: memref<3x16x4xf32, #tpu.memory_space<vmem>>, %arg3: memref<16x1xf32, #tpu.memory_space<vmem>>, %arg4: memref<3x32x16xf32, #tpu.memory_space<vmem>>, %arg5: memref<32x1xf32, #tpu.memory_space<vmem>>, %arg6: memref<3x64x32xf32, #tpu.memory_space<vmem>>, %arg7: memref<64x1xf32, #tpu.memory_space<vmem>>, %arg8: memref<3x128x64xf32, #tpu.memory_space<vmem>>, %arg9: memref<128x1xf32, #tpu.memory_space<vmem>>, %arg10: memref<5x128xf32, #tpu.memory_space<vmem>>, %arg11: memref<5x1xf32, #tpu.memory_space<vmem>>, %arg12: memref<2x512xf32, #tpu.memory_space<vmem>>, %arg13: memref<1x5x2xf32, #tpu.memory_space<vmem>>) attributes {dimension_semantics = [#tpu.dimension_semantics<parallel>], iteration_bounds = array<i64: 1>, scalar_prefetch = 0 : i64, scratch_operands = 0 : i64, tpu.core_type = #tpu.core_type<tc>, window_params = [{transform_indices = @transform_0, window_bounds = array<i64: 4, 512>}, {pipeline_mode = #tpu.pipeline_mode<synchronous>, transform_indices = @transform_1, window_bounds = array<i64: 3, 16, 4>}, {pipeline_mode = #tpu.pipeline_mode<synchronous>, transform_indices = @transform_2, window_bounds = array<i64: 16, 1>}, {pipeline_mode = #tpu.pipeline_mode<synchronous>, transform_indices = @transform_3, window_bounds = array<i64: 3, 32, 16>}, {pipeline_mode = #tpu.pipeline_mode<synchronous>, transform_indices = @transform_4, window_bounds = array<i64: 32, 1>}, {pipeline_mode = #tpu.pipeline_mode<synchronous>, transform_indices = @transform_5, window_bounds = array<i64: 3, 64, 32>}, {pipeline_mode = #tpu.pipeline_mode<synchronous>, transform_indices = @transform_6, window_bounds = array<i64: 64, 1>}, {pipeline_mode = #tpu.pipeline_mode<synchronous>, transform_indices = @transform_7, window_bounds = array<i64: 3, 128, 64>}, {pipeline_mode = #tpu.pipeline_mode<synchronous>, transform_indices = @transform_8, window_bounds = array<i64: 128, 1>}, {pipeline_mode = #tpu.pipeline_mode<synchronous>, transform_indices = @transform_9, window_bounds = array<i64: 5, 128>}, {pipeline_mode = #tpu.pipeline_mode<synchronous>, transform_indices = @transform_10, window_bounds = array<i64: 5, 1>}, {pipeline_mode = #tpu.pipeline_mode<synchronous>, transform_indices = @transform_11, window_bounds = array<i64: 2, 512>}, {transform_indices = @transform_12, window_bounds = array<i64: 1, 5, 2>}]} {
    %0 = tpu.iota {dimensions = array<i32: 1>} : vector<1x512xi32>
    %c256_i32 = arith.constant 256 : i32
    %c0_i32 = arith.constant 0 : i32
    %1 = arith.cmpi eq, %c256_i32, %c0_i32 : i32
    %c1_i32 = arith.constant 1 : i32
    %2 = arith.select %1, %c1_i32, %c256_i32 : i32
    %3 = vector.broadcast %2 : i32 to vector<1x512xi32>
    %4 = arith.remsi %0, %3 : vector<1x512xi32>
    %c0_i32_0 = arith.constant 0 : i32
    %5 = vector.broadcast %c0_i32_0 : i32 to vector<1x512xi32>
    %6 = arith.cmpi ne, %4, %5 : vector<1x512xi32>
    %c0_i32_1 = arith.constant 0 : i32
    %7 = vector.broadcast %c0_i32_1 : i32 to vector<1x512xi32>
    %8 = arith.cmpi slt, %4, %7 : vector<1x512xi32>
    %c0_i32_2 = arith.constant 0 : i32
    %9 = arith.cmpi slt, %2, %c0_i32_2 : i32
    %10 = vector.broadcast %9 : i1 to vector<1x512xi1>
    %11 = vector.broadcast %10 : vector<1x512xi1> to vector<1x512xi1>
    %12 = arith.xori %8, %11 : vector<1x512xi1>
    %13 = arith.andi %12, %6 : vector<1x512xi1>
    %14 = vector.broadcast %2 : i32 to vector<1x512xi32>
    %15 = arith.addi %4, %14 : vector<1x512xi32>
    %16 = arith.select %13, %15, %4 : vector<1x512xi1>, vector<1x512xi32>
    %c0_i32_3 = arith.constant 0 : i32
    %17 = vector.broadcast %c0_i32_3 : i32 to vector<1x512xi32>
    %18 = arith.cmpi ne, %16, %17 : vector<1x512xi32>
    %19 = arith.extui %18 : vector<1x512xi1> to vector<1x512xi32>
    %20 = arith.sitofp %19 : vector<1x512xi32> to vector<1x512xf32>
    %c255_i32 = arith.constant 255 : i32
    %21 = vector.broadcast %c255_i32 : i32 to vector<1x512xi32>
    %22 = arith.cmpi ne, %16, %21 : vector<1x512xi32>
    %23 = arith.extui %22 : vector<1x512xi1> to vector<1x512xi32>
    %24 = arith.sitofp %23 : vector<1x512xi32> to vector<1x512xf32>
    %c0 = arith.constant 0 : index
    %c0_4 = arith.constant 0 : index
    %25 = vector.load %arg1[%c0, %c0_4] : memref<4x512xf32, #tpu.memory_space<vmem>>, vector<4x512xf32>
    %c1_i32_5 = arith.constant 1 : i32
    %26 = tpu.dynamic_rotate %25 by %c1_i32_5 dim 1 : vector<4x512xf32>, i32 -> vector<4x512xf32>
    %27 = vector.broadcast %20 : vector<1x512xf32> to vector<4x512xf32>
    %28 = arith.mulf %26, %27 : vector<4x512xf32>
    %c511_i32 = arith.constant 511 : i32
    %29 = tpu.dynamic_rotate %25 by %c511_i32 dim 1 : vector<4x512xf32>, i32 -> vector<4x512xf32>
    %30 = vector.broadcast %24 : vector<1x512xf32> to vector<4x512xf32>
    %31 = arith.mulf %29, %30 : vector<4x512xf32>
    %c0_6 = arith.constant 0 : index
    %c0_7 = arith.constant 0 : index
    %c0_8 = arith.constant 0 : index
    %32 = vector.load %arg2[%c0_6, %c0_7, %c0_8] : memref<3x16x4xf32, #tpu.memory_space<vmem>>, vector<1x16x4xf32>
    %33 = vector.shape_cast %32 : vector<1x16x4xf32> to vector<16x4xf32>
    %cst = arith.constant dense<0.000000e+00> : vector<16x512xf32>
    %34 = tpu.matmul %33, %28, %cst {dimension_numbers = #tpu.dot_dimension_numbers<[1], [0], [0], [1], [0, 0, 1, 1], [], []>} : vector<16x4xf32>, vector<4x512xf32>, vector<16x512xf32> -> vector<16x512xf32>
    %c1 = arith.constant 1 : index
    %c0_9 = arith.constant 0 : index
    %c0_10 = arith.constant 0 : index
    %35 = vector.load %arg2[%c1, %c0_9, %c0_10] : memref<3x16x4xf32, #tpu.memory_space<vmem>>, vector<1x16x4xf32>
    %36 = vector.shape_cast %35 : vector<1x16x4xf32> to vector<16x4xf32>
    %cst_11 = arith.constant dense<0.000000e+00> : vector<16x512xf32>
    %37 = tpu.matmul %36, %25, %cst_11 {dimension_numbers = #tpu.dot_dimension_numbers<[1], [0], [0], [1], [0, 0, 1, 1], [], []>} : vector<16x4xf32>, vector<4x512xf32>, vector<16x512xf32> -> vector<16x512xf32>
    %38 = arith.addf %34, %37 : vector<16x512xf32>
    %c2 = arith.constant 2 : index
    %c0_12 = arith.constant 0 : index
    %c0_13 = arith.constant 0 : index
    %39 = vector.load %arg2[%c2, %c0_12, %c0_13] : memref<3x16x4xf32, #tpu.memory_space<vmem>>, vector<1x16x4xf32>
    %40 = vector.shape_cast %39 : vector<1x16x4xf32> to vector<16x4xf32>
    %cst_14 = arith.constant dense<0.000000e+00> : vector<16x512xf32>
    %41 = tpu.matmul %40, %31, %cst_14 {dimension_numbers = #tpu.dot_dimension_numbers<[1], [0], [0], [1], [0, 0, 1, 1], [], []>} : vector<16x4xf32>, vector<4x512xf32>, vector<16x512xf32> -> vector<16x512xf32>
    %42 = arith.addf %38, %41 : vector<16x512xf32>
    %c0_15 = arith.constant 0 : index
    %c0_16 = arith.constant 0 : index
    %43 = vector.load %arg3[%c0_15, %c0_16] : memref<16x1xf32, #tpu.memory_space<vmem>>, vector<16x1xf32>
    %44 = vector.broadcast %43 : vector<16x1xf32> to vector<16x512xf32>
    %45 = arith.addf %42, %44 : vector<16x512xf32>
    %cst_17 = arith.constant 0.000000e+00 : f32
    %46 = vector.broadcast %cst_17 : f32 to vector<16x512xf32>
    %47 = arith.maximumf %45, %46 : vector<16x512xf32>
    %c1_i32_18 = arith.constant 1 : i32
    %48 = tpu.dynamic_rotate %47 by %c1_i32_18 dim 1 : vector<16x512xf32>, i32 -> vector<16x512xf32>
    %49 = vector.broadcast %20 : vector<1x512xf32> to vector<16x512xf32>
    %50 = arith.mulf %48, %49 : vector<16x512xf32>
    %c511_i32_19 = arith.constant 511 : i32
    %51 = tpu.dynamic_rotate %47 by %c511_i32_19 dim 1 : vector<16x512xf32>, i32 -> vector<16x512xf32>
    %52 = vector.broadcast %24 : vector<1x512xf32> to vector<16x512xf32>
    %53 = arith.mulf %51, %52 : vector<16x512xf32>
    %c0_20 = arith.constant 0 : index
    %c0_21 = arith.constant 0 : index
    %c0_22 = arith.constant 0 : index
    %54 = vector.load %arg4[%c0_20, %c0_21, %c0_22] : memref<3x32x16xf32, #tpu.memory_space<vmem>>, vector<1x32x16xf32>
    %55 = vector.shape_cast %54 : vector<1x32x16xf32> to vector<32x16xf32>
    %cst_23 = arith.constant dense<0.000000e+00> : vector<32x512xf32>
    %56 = tpu.matmul %55, %50, %cst_23 {dimension_numbers = #tpu.dot_dimension_numbers<[1], [0], [0], [1], [0, 0, 1, 1], [], []>} : vector<32x16xf32>, vector<16x512xf32>, vector<32x512xf32> -> vector<32x512xf32>
    %c1_24 = arith.constant 1 : index
    %c0_25 = arith.constant 0 : index
    %c0_26 = arith.constant 0 : index
    %57 = vector.load %arg4[%c1_24, %c0_25, %c0_26] : memref<3x32x16xf32, #tpu.memory_space<vmem>>, vector<1x32x16xf32>
    %58 = vector.shape_cast %57 : vector<1x32x16xf32> to vector<32x16xf32>
    %cst_27 = arith.constant dense<0.000000e+00> : vector<32x512xf32>
    %59 = tpu.matmul %58, %47, %cst_27 {dimension_numbers = #tpu.dot_dimension_numbers<[1], [0], [0], [1], [0, 0, 1, 1], [], []>} : vector<32x16xf32>, vector<16x512xf32>, vector<32x512xf32> -> vector<32x512xf32>
    %60 = arith.addf %56, %59 : vector<32x512xf32>
    %c2_28 = arith.constant 2 : index
    %c0_29 = arith.constant 0 : index
    %c0_30 = arith.constant 0 : index
    %61 = vector.load %arg4[%c2_28, %c0_29, %c0_30] : memref<3x32x16xf32, #tpu.memory_space<vmem>>, vector<1x32x16xf32>
    %62 = vector.shape_cast %61 : vector<1x32x16xf32> to vector<32x16xf32>
    %cst_31 = arith.constant dense<0.000000e+00> : vector<32x512xf32>
    %63 = tpu.matmul %62, %53, %cst_31 {dimension_numbers = #tpu.dot_dimension_numbers<[1], [0], [0], [1], [0, 0, 1, 1], [], []>} : vector<32x16xf32>, vector<16x512xf32>, vector<32x512xf32> -> vector<32x512xf32>
    %64 = arith.addf %60, %63 : vector<32x512xf32>
    %c0_32 = arith.constant 0 : index
    %c0_33 = arith.constant 0 : index
    %65 = vector.load %arg5[%c0_32, %c0_33] : memref<32x1xf32, #tpu.memory_space<vmem>>, vector<32x1xf32>
    %66 = vector.broadcast %65 : vector<32x1xf32> to vector<32x512xf32>
    %67 = arith.addf %64, %66 : vector<32x512xf32>
    %cst_34 = arith.constant 0.000000e+00 : f32
    %68 = vector.broadcast %cst_34 : f32 to vector<32x512xf32>
    %69 = arith.maximumf %67, %68 : vector<32x512xf32>
    %c1_i32_35 = arith.constant 1 : i32
    %70 = tpu.dynamic_rotate %69 by %c1_i32_35 dim 1 : vector<32x512xf32>, i32 -> vector<32x512xf32>
    %71 = vector.broadcast %20 : vector<1x512xf32> to vector<32x512xf32>
    %72 = arith.mulf %70, %71 : vector<32x512xf32>
    %c511_i32_36 = arith.constant 511 : i32
    %73 = tpu.dynamic_rotate %69 by %c511_i32_36 dim 1 : vector<32x512xf32>, i32 -> vector<32x512xf32>
    %74 = vector.broadcast %24 : vector<1x512xf32> to vector<32x512xf32>
    %75 = arith.mulf %73, %74 : vector<32x512xf32>
    %c0_37 = arith.constant 0 : index
    %c0_38 = arith.constant 0 : index
    %c0_39 = arith.constant 0 : index
    %76 = vector.load %arg6[%c0_37, %c0_38, %c0_39] : memref<3x64x32xf32, #tpu.memory_space<vmem>>, vector<1x64x32xf32>
    %77 = vector.shape_cast %76 : vector<1x64x32xf32> to vector<64x32xf32>
    %cst_40 = arith.constant dense<0.000000e+00> : vector<64x512xf32>
    %78 = tpu.matmul %77, %72, %cst_40 {dimension_numbers = #tpu.dot_dimension_numbers<[1], [0], [0], [1], [0, 0, 1, 1], [], []>} : vector<64x32xf32>, vector<32x512xf32>, vector<64x512xf32> -> vector<64x512xf32>
    %c1_41 = arith.constant 1 : index
    %c0_42 = arith.constant 0 : index
    %c0_43 = arith.constant 0 : index
    %79 = vector.load %arg6[%c1_41, %c0_42, %c0_43] : memref<3x64x32xf32, #tpu.memory_space<vmem>>, vector<1x64x32xf32>
    %80 = vector.shape_cast %79 : vector<1x64x32xf32> to vector<64x32xf32>
    %cst_44 = arith.constant dense<0.000000e+00> : vector<64x512xf32>
    %81 = tpu.matmul %80, %69, %cst_44 {dimension_numbers = #tpu.dot_dimension_numbers<[1], [0], [0], [1], [0, 0, 1, 1], [], []>} : vector<64x32xf32>, vector<32x512xf32>, vector<64x512xf32> -> vector<64x512xf32>
    %82 = arith.addf %78, %81 : vector<64x512xf32>
    %c2_45 = arith.constant 2 : index
    %c0_46 = arith.constant 0 : index
    %c0_47 = arith.constant 0 : index
    %83 = vector.load %arg6[%c2_45, %c0_46, %c0_47] : memref<3x64x32xf32, #tpu.memory_space<vmem>>, vector<1x64x32xf32>
    %84 = vector.shape_cast %83 : vector<1x64x32xf32> to vector<64x32xf32>
    %cst_48 = arith.constant dense<0.000000e+00> : vector<64x512xf32>
    %85 = tpu.matmul %84, %75, %cst_48 {dimension_numbers = #tpu.dot_dimension_numbers<[1], [0], [0], [1], [0, 0, 1, 1], [], []>} : vector<64x32xf32>, vector<32x512xf32>, vector<64x512xf32> -> vector<64x512xf32>
    %86 = arith.addf %82, %85 : vector<64x512xf32>
    %c0_49 = arith.constant 0 : index
    %c0_50 = arith.constant 0 : index
    %87 = vector.load %arg7[%c0_49, %c0_50] : memref<64x1xf32, #tpu.memory_space<vmem>>, vector<64x1xf32>
    %88 = vector.broadcast %87 : vector<64x1xf32> to vector<64x512xf32>
    %89 = arith.addf %86, %88 : vector<64x512xf32>
    %cst_51 = arith.constant 0.000000e+00 : f32
    %90 = vector.broadcast %cst_51 : f32 to vector<64x512xf32>
    %91 = arith.maximumf %89, %90 : vector<64x512xf32>
    %c1_i32_52 = arith.constant 1 : i32
    %92 = tpu.dynamic_rotate %91 by %c1_i32_52 dim 1 : vector<64x512xf32>, i32 -> vector<64x512xf32>
    %93 = vector.broadcast %20 : vector<1x512xf32> to vector<64x512xf32>
    %94 = arith.mulf %92, %93 : vector<64x512xf32>
    %c511_i32_53 = arith.constant 511 : i32
    %95 = tpu.dynamic_rotate %91 by %c511_i32_53 dim 1 : vector<64x512xf32>, i32 -> vector<64x512xf32>
    %96 = vector.broadcast %24 : vector<1x512xf32> to vector<64x512xf32>
    %97 = arith.mulf %95, %96 : vector<64x512xf32>
    %c0_54 = arith.constant 0 : index
    %c0_55 = arith.constant 0 : index
    %c0_56 = arith.constant 0 : index
    %98 = vector.load %arg8[%c0_54, %c0_55, %c0_56] : memref<3x128x64xf32, #tpu.memory_space<vmem>>, vector<1x128x64xf32>
    %99 = vector.shape_cast %98 : vector<1x128x64xf32> to vector<128x64xf32>
    %cst_57 = arith.constant dense<0.000000e+00> : vector<128x512xf32>
    %100 = tpu.matmul %99, %94, %cst_57 {dimension_numbers = #tpu.dot_dimension_numbers<[1], [0], [0], [1], [0, 0, 1, 1], [], []>} : vector<128x64xf32>, vector<64x512xf32>, vector<128x512xf32> -> vector<128x512xf32>
    %c1_58 = arith.constant 1 : index
    %c0_59 = arith.constant 0 : index
    %c0_60 = arith.constant 0 : index
    %101 = vector.load %arg8[%c1_58, %c0_59, %c0_60] : memref<3x128x64xf32, #tpu.memory_space<vmem>>, vector<1x128x64xf32>
    %102 = vector.shape_cast %101 : vector<1x128x64xf32> to vector<128x64xf32>
    %cst_61 = arith.constant dense<0.000000e+00> : vector<128x512xf32>
    %103 = tpu.matmul %102, %91, %cst_61 {dimension_numbers = #tpu.dot_dimension_numbers<[1], [0], [0], [1], [0, 0, 1, 1], [], []>} : vector<128x64xf32>, vector<64x512xf32>, vector<128x512xf32> -> vector<128x512xf32>
    %104 = arith.addf %100, %103 : vector<128x512xf32>
    %c2_62 = arith.constant 2 : index
    %c0_63 = arith.constant 0 : index
    %c0_64 = arith.constant 0 : index
    %105 = vector.load %arg8[%c2_62, %c0_63, %c0_64] : memref<3x128x64xf32, #tpu.memory_space<vmem>>, vector<1x128x64xf32>
    %106 = vector.shape_cast %105 : vector<1x128x64xf32> to vector<128x64xf32>
    %cst_65 = arith.constant dense<0.000000e+00> : vector<128x512xf32>
    %107 = tpu.matmul %106, %97, %cst_65 {dimension_numbers = #tpu.dot_dimension_numbers<[1], [0], [0], [1], [0, 0, 1, 1], [], []>} : vector<128x64xf32>, vector<64x512xf32>, vector<128x512xf32> -> vector<128x512xf32>
    %108 = arith.addf %104, %107 : vector<128x512xf32>
    %c0_66 = arith.constant 0 : index
    %c0_67 = arith.constant 0 : index
    %109 = vector.load %arg9[%c0_66, %c0_67] : memref<128x1xf32, #tpu.memory_space<vmem>>, vector<128x1xf32>
    %110 = vector.broadcast %109 : vector<128x1xf32> to vector<128x512xf32>
    %111 = arith.addf %108, %110 : vector<128x512xf32>
    %cst_68 = arith.constant 0.000000e+00 : f32
    %112 = vector.broadcast %cst_68 : f32 to vector<128x512xf32>
    %113 = arith.maximumf %111, %112 : vector<128x512xf32>
    %c0_69 = arith.constant 0 : index
    %c0_70 = arith.constant 0 : index
    %114 = vector.load %arg12[%c0_69, %c0_70] : memref<2x512xf32, #tpu.memory_space<vmem>>, vector<2x512xf32>
    %cst_71 = arith.constant dense<0.000000e+00> : vector<128x2xf32>
    %115 = tpu.matmul %113, %114, %cst_71 {dimension_numbers = #tpu.dot_dimension_numbers<[1], [1], [0], [0], [0, 0, 1, 0], [], []>} : vector<128x512xf32>, vector<2x512xf32>, vector<128x2xf32> -> vector<128x2xf32>
    %c0_72 = arith.constant 0 : index
    %c0_73 = arith.constant 0 : index
    %116 = vector.load %arg10[%c0_72, %c0_73] : memref<5x128xf32, #tpu.memory_space<vmem>>, vector<5x128xf32>
    %cst_74 = arith.constant dense<0.000000e+00> : vector<5x2xf32>
    %117 = tpu.matmul %116, %115, %cst_74 {dimension_numbers = #tpu.dot_dimension_numbers<[1], [0], [0], [1], [0, 0, 1, 1], [], []>} : vector<5x128xf32>, vector<128x2xf32>, vector<5x2xf32> -> vector<5x2xf32>
    %c0_75 = arith.constant 0 : index
    %c0_76 = arith.constant 0 : index
    %118 = vector.load %arg11[%c0_75, %c0_76] : memref<5x1xf32, #tpu.memory_space<vmem>>, vector<5x1xf32>
    %119 = vector.broadcast %118 : vector<5x1xf32> to vector<5x2xf32>
    %120 = arith.addf %117, %119 : vector<5x2xf32>
    %cst_77 = arith.constant dense<0xFF800000> : vector<2xf32>
    %121 = vector.multi_reduction <maximumf>, %120, %cst_77 [0] : vector<5x2xf32> to vector<2xf32>
    %122 = vector.shape_cast %121 : vector<2xf32> to vector<1x2xf32>
    %123 = vector.broadcast %122 : vector<1x2xf32> to vector<5x2xf32>
    %124 = arith.subf %120, %123 : vector<5x2xf32>
    %125 = math.exp %124 : vector<5x2xf32>
    %cst_78 = arith.constant dense<0.000000e+00> : vector<2xf32>
    %126 = vector.multi_reduction <add>, %125, %cst_78 [0] : vector<5x2xf32> to vector<2xf32>
    %127 = vector.shape_cast %126 : vector<2xf32> to vector<1x2xf32>
    %128 = math.log %127 : vector<1x2xf32>
    %129 = arith.addf %122, %128 : vector<1x2xf32>
    %130 = vector.broadcast %129 : vector<1x2xf32> to vector<5x2xf32>
    %131 = arith.subf %120, %130 : vector<5x2xf32>
    %c0_79 = arith.constant 0 : index
    %c0_80 = arith.constant 0 : index
    %c0_81 = arith.constant 0 : index
    %132 = vector.load %arg13[%c0_79, %c0_80, %c0_81] : memref<1x5x2xf32, #tpu.memory_space<vmem>>, vector<1x5x2xf32>
    %133 = vector.shape_cast %132 : vector<1x5x2xf32> to vector<5x2xf32>
    %134 = vector.shape_cast %131 : vector<5x2xf32> to vector<1x5x2xf32>
    tpu.vector_store %arg13[%c0_79, %c0_80, %c0_81], %134 {strides = array<i32>} : memref<1x5x2xf32, #tpu.memory_space<vmem>>, vector<1x5x2xf32>,
    return
  }
  func.func @transform_0(%arg0: i32) -> (i32, i32) {
    %c0_i32 = arith.constant 0 : i32
    %c0_i32_0 = arith.constant 0 : i32
    return %c0_i32, %arg0 : i32, i32
  }
  func.func @transform_1(%arg0: i32) -> (i32, i32, i32) {
    %c0_i32 = arith.constant 0 : i32
    %c0_i32_0 = arith.constant 0 : i32
    %c0_i32_1 = arith.constant 0 : i32
    %c0_i32_2 = arith.constant 0 : i32
    return %c0_i32, %c0_i32_0, %c0_i32_1 : i32, i32, i32
  }
  func.func @transform_2(%arg0: i32) -> (i32, i32) {
    %c0_i32 = arith.constant 0 : i32
    %c0_i32_0 = arith.constant 0 : i32
    %c0_i32_1 = arith.constant 0 : i32
    return %c0_i32, %c0_i32_0 : i32, i32
  }
  func.func @transform_3(%arg0: i32) -> (i32, i32, i32) {
    %c0_i32 = arith.constant 0 : i32
    %c0_i32_0 = arith.constant 0 : i32
    %c0_i32_1 = arith.constant 0 : i32
    %c0_i32_2 = arith.constant 0 : i32
    return %c0_i32, %c0_i32_0, %c0_i32_1 : i32, i32, i32
  }
  func.func @transform_4(%arg0: i32) -> (i32, i32) {
    %c0_i32 = arith.constant 0 : i32
    %c0_i32_0 = arith.constant 0 : i32
    %c0_i32_1 = arith.constant 0 : i32
    return %c0_i32, %c0_i32_0 : i32, i32
  }
  func.func @transform_5(%arg0: i32) -> (i32, i32, i32) {
    %c0_i32 = arith.constant 0 : i32
    %c0_i32_0 = arith.constant 0 : i32
    %c0_i32_1 = arith.constant 0 : i32
    %c0_i32_2 = arith.constant 0 : i32
    return %c0_i32, %c0_i32_0, %c0_i32_1 : i32, i32, i32
  }
  func.func @transform_6(%arg0: i32) -> (i32, i32) {
    %c0_i32 = arith.constant 0 : i32
    %c0_i32_0 = arith.constant 0 : i32
    %c0_i32_1 = arith.constant 0 : i32
    return %c0_i32, %c0_i32_0 : i32, i32
  }
  func.func @transform_7(%arg0: i32) -> (i32, i32, i32) {
    %c0_i32 = arith.constant 0 : i32
    %c0_i32_0 = arith.constant 0 : i32
    %c0_i32_1 = arith.constant 0 : i32
    %c0_i32_2 = arith.constant 0 : i32
    return %c0_i32, %c0_i32_0, %c0_i32_1 : i32, i32, i32
  }
  func.func @transform_8(%arg0: i32) -> (i32, i32) {
    %c0_i32 = arith.constant 0 : i32
    %c0_i32_0 = arith.constant 0 : i32
    %c0_i32_1 = arith.constant 0 : i32
    return %c0_i32, %c0_i32_0 : i32, i32
  }
  func.func @transform_9(%arg0: i32) -> (i32, i32) {
    %c0_i32 = arith.constant 0 : i32
    %c0_i32_0 = arith.constant 0 : i32
    %c0_i32_1 = arith.constant 0 : i32
    return %c0_i32, %c0_i32_0 : i32, i32
  }
  func.func @transform_10(%arg0: i32) -> (i32, i32) {
    %c0_i32 = arith.constant 0 : i32
    %c0_i32_0 = arith.constant 0 : i32
    %c0_i32_1 = arith.constant 0 : i32
    return %c0_i32, %c0_i32_0 : i32, i32
  }
  func.func @transform_11(%arg0: i32) -> (i32, i32) {
    %c0_i32 = arith.constant 0 : i32
    %c0_i32_0 = arith.constant 0 : i32
    %c0_i32_1 = arith.constant 0 : i32
    return %c0_i32, %c0_i32_0 : i32, i32
  }
  func.func @transform_12(%arg0: i32) -> (i32, i32, i32) {
    %c0_i32 = arith.constant 0 : i32
    %c0_i32_0 = arith.constant 0 : i32
    %c0_i32_1 = arith.constant 0 : i32
    return %arg0, %c0_i32, %c0_i32_0 : i32, i32, i32
  }
}

</mosaic_0001>

<llo_original>
// kernel: tpu_custom_call.1
$region0: #{tpu_custom_call.1}
  #allocation0 [shape = 'u32[]', space=smem, size = 0x4, offset = 0x4, fixed_abs, tag = 'smem constant byte address 0x4 - core index']
  #allocation1 [shape = 'u32[144,128]{1,0:T(1,128)}', space=vmem, size = 0x12000, scoped, tag = 'internal scratch']
  %s0 = inlined_call_operand.vmem [shape: f32[4,512], index: 0, kind: input, shape index: {}]
  %s1 = inlined_call_operand.vmem [shape: f32[3,16,4], index: 1, kind: input, shape index: {}]
  %s2 = inlined_call_operand.vmem [shape: f32[16,1], index: 2, kind: input, shape index: {}]
  %s3 = inlined_call_operand.vmem [shape: f32[3,32,16], index: 3, kind: input, shape index: {}]
  %s4 = inlined_call_operand.vmem [shape: f32[32,1], index: 4, kind: input, shape index: {}]
  %s5 = inlined_call_operand.vmem [shape: f32[3,64,32], index: 5, kind: input, shape index: {}]
  %s6 = inlined_call_operand.vmem [shape: f32[64,1], index: 6, kind: input, shape index: {}]
  %s7 = inlined_call_operand.vmem [shape: f32[3,128,64], index: 7, kind: input, shape index: {}]
  %s8 = inlined_call_operand.vmem [shape: f32[128,1], index: 8, kind: input, shape index: {}]
  %s9 = inlined_call_operand.vmem [shape: f32[5,128], index: 9, kind: input, shape index: {}]
  %s10 = inlined_call_operand.vmem [shape: f32[5,1], index: 10, kind: input, shape index: {}]
  %s11 = inlined_call_operand.vmem [shape: f32[2,512], index: 11, kind: input, shape index: {}]
  %s12 = inlined_call_operand.vmem [shape: f32[1,5,2], index: 12, kind: output, shape index: {}]
  %s13 = sld [smem:[#allocation0]]
  $region58: #{tpu_custom_call.1} parent=0
    _
  %s15 = ssub.s32 1, %s13
  %s16 = scalar_select 0, %s15, %s13
  // Predicated region
  $region2: #{tpu_custom_call.1} parent=0 // pred_check
    _
  $region3: #{tpu_custom_call.1} parent=0 // pred_check_branch
    %18 = sbr.rel (0) target = $region5
  $region4: #{tpu_custom_call.1} parent=0 // pred_region
    _
  $region5: #{tpu_custom_call.1} parent=0 // pred_fallthru
    _
  // Predicated region
  $region6: #{tpu_custom_call.1} parent=0 // pred_check
    _
  $region7: #{tpu_custom_call.1} parent=0 // pred_check_branch
    %20 = sbr.rel (0) target = $region9
  $region8: #{tpu_custom_call.1} parent=0 // pred_region
    _
  $region9: #{tpu_custom_call.1} parent=0 // pred_fallthru
    _
  // Predicated region
  $region10: #{tpu_custom_call.1} parent=0 // pred_check
    _
  $region11: #{tpu_custom_call.1} parent=0 // pred_check_branch
    %22 = sbr.rel (0) target = $region13
  $region12: #{tpu_custom_call.1} parent=0 // pred_region
    _
  $region13: #{tpu_custom_call.1} parent=0 // pred_fallthru
    _
  // Predicated region
  $region14: #{tpu_custom_call.1} parent=0 // pred_check
    _
  $region15: #{tpu_custom_call.1} parent=0 // pred_check_branch
    %24 = sbr.rel (0) target = $region17
  $region16: #{tpu_custom_call.1} parent=0 // pred_region
    _
  $region17: #{tpu_custom_call.1} parent=0 // pred_fallthru
    _
  // Predicated region
  $region18: #{tpu_custom_call.1} parent=0 // pred_check
    _
  $region19: #{tpu_custom_call.1} parent=0 // pred_check_branch
    %26 = sbr.rel (0) target = $region21
  $region20: #{tpu_custom_call.1} parent=0 // pred_region
    _
  $region21: #{tpu_custom_call.1} parent=0 // pred_fallthru
    _
  // Predicated region
  $region22: #{tpu_custom_call.1} parent=0 // pred_check
    _
  $region23: #{tpu_custom_call.1} parent=0 // pred_check_branch
    %28 = sbr.rel (0) target = $region25
  $region24: #{tpu_custom_call.1} parent=0 // pred_region
    _
  $region25: #{tpu_custom_call.1} parent=0 // pred_fallthru
    _
  // Predicated region
  $region26: #{tpu_custom_call.1} parent=0 // pred_check
    _
  $region27: #{tpu_custom_call.1} parent=0 // pred_check_branch
    %30 = sbr.rel (0) target = $region29
  $region28: #{tpu_custom_call.1} parent=0 // pred_region
    _
  $region29: #{tpu_custom_call.1} parent=0 // pred_fallthru
    _
  // Predicated region
  $region30: #{tpu_custom_call.1} parent=0 // pred_check
    _
  $region31: #{tpu_custom_call.1} parent=0 // pred_check_branch
    %32 = sbr.rel (0) target = $region33
  $region32: #{tpu_custom_call.1} parent=0 // pred_region
    _
  $region33: #{tpu_custom_call.1} parent=0 // pred_fallthru
    _
  // Predicated region
  $region34: #{tpu_custom_call.1} parent=0 // pred_check
    _
  $region35: #{tpu_custom_call.1} parent=0 // pred_check_branch
    %34 = sbr.rel (0) target = $region37
  $region36: #{tpu_custom_call.1} parent=0 // pred_region
    _
  $region37: #{tpu_custom_call.1} parent=0 // pred_fallthru
    _
  // Predicated region
  $region38: #{tpu_custom_call.1} parent=0 // pred_check
    _
  $region39: #{tpu_custom_call.1} parent=0 // pred_check_branch
    %36 = sbr.rel (0) target = $region41
  $region40: #{tpu_custom_call.1} parent=0 // pred_region
    _
  $region41: #{tpu_custom_call.1} parent=0 // pred_fallthru
    _
  // Predicated region
  $region42: #{tpu_custom_call.1} parent=0 // pred_check
    _
  $region43: #{tpu_custom_call.1} parent=0 // pred_check_branch
    %38 = sbr.rel (0) target = $region45
  $region44: #{tpu_custom_call.1} parent=0 // pred_region
    _
  $region45: #{tpu_custom_call.1} parent=0 // pred_fallthru
    _
  // Predicated region
  $region46: #{tpu_custom_call.1} parent=0 // pred_check
    _
  $region47: #{tpu_custom_call.1} parent=0 // pred_check_branch
    %40 = sbr.rel (0) target = $region49
  $region48: #{tpu_custom_call.1} parent=0 // pred_region
    _
  $region49: #{tpu_custom_call.1} parent=0 // pred_fallthru
    _
  %v41 = vlaneseq
  %v42 = vand.u32 %v41, 127
  %v43 = vadd.s32 %v42, 128
  %v44 = vadd.s32 %v42, 256
  %v45 = vadd.s32 %v42, 384
  %vm46 = vcmp.lt.s32.totalorder %v42, 0
  %v47 = vsub.s32 0, %v42
  %v48 = vsel %vm46, %v47, %v42
  %v49 = vshrl.u32 %v48, 8
  %v50 = vand.u32 %v48, 255
  %v51 = vsub.s32 0, %v50
  %v52 = vsel %vm46, %v51, %v50
  %vm53 = vcmp.lt.s32.totalorder %v43, 0
  %v54 = vsub.s32 0, %v43
  %v55 = vsel %vm53, %v54, %v43
  %v56 = vshrl.u32 %v55, 8
  %v57 = vand.u32 %v55, 255
  %v58 = vsub.s32 0, %v57
  %v59 = vsel %vm53, %v58, %v57
  %vm60 = vcmp.lt.s32.totalorder %v44, 0
  %v61 = vsub.s32 0, %v44
  %v62 = vsel %vm60, %v61, %v44
  %v63 = vshrl.u32 %v62, 8
  %v64 = vand.u32 %v62, 255
  %v65 = vsub.s32 0, %v64
  %v66 = vsel %vm60, %v65, %v64
  %vm67 = vcmp.lt.s32.totalorder %v45, 0
  %v68 = vsub.s32 0, %v45
  %v69 = vsel %vm67, %v68, %v45
  %v70 = vshrl.u32 %v69, 8
  %v71 = vand.u32 %v69, 255
  %v72 = vsub.s32 0, %v71
  %v73 = vsel %vm67, %v72, %v71
  %vm74 = vcmp.ne.s32.totalorder %v52, 0
  %vm75 = vcmp.ne.s32.totalorder %v59, 0
  %vm76 = vcmp.ne.s32.totalorder %v66, 0
  %vm77 = vcmp.ne.s32.totalorder %v73, 0
  %vm78 = vcmp.lt.s32.totalorder %v52, 0
  %vm79 = vcmp.lt.s32.totalorder %v59, 0
  %vm80 = vcmp.lt.s32.totalorder %v66, 0
  %vm81 = vcmp.lt.s32.totalorder %v73, 0
  %vm82 = vmand %vm78, %vm74
  %vm83 = vmand %vm79, %vm75
  %vm84 = vmand %vm80, %vm76
  %vm85 = vmand %vm81, %vm77
  %v86 = vadd.s32 %v52, 256
  %v87 = vadd.s32 %v59, 256
  %v88 = vadd.s32 %v66, 256
  %v89 = vadd.s32 %v73, 256
  %v90 = vsel %vm82, %v86, %v52
  %v91 = vsel %vm83, %v87, %v59
  %v92 = vsel %vm84, %v88, %v66
  %v93 = vsel %vm85, %v89, %v73
  %vm94 = vcmp.ne.s32.totalorder %v90, 0
  %vm95 = vcmp.ne.s32.totalorder %v91, 0
  %vm96 = vcmp.ne.s32.totalorder %v92, 0
  %vm97 = vcmp.ne.s32.totalorder %v93, 0
  %v98 = vsel %vm94, 1, 0
  %v99 = vsel %vm95, 1, 0
  %v100 = vsel %vm96, 1, 0
  %v101 = vsel %vm97, 1, 0
  %v102 = vcvt.s32.f32 %v98
  %v103 = vcvt.s32.f32 %v99
  %v104 = vcvt.s32.f32 %v100
  %v105 = vcvt.s32.f32 %v101
  %vm106 = vcmp.ne.s32.totalorder %v90, 255
  %vm107 = vcmp.ne.s32.totalorder %v91, 255
  %vm108 = vcmp.ne.s32.totalorder %v92, 255
  %vm109 = vcmp.ne.s32.totalorder %v93, 255
  %v110 = vsel %vm106, 1, 0
  %v111 = vsel %vm107, 1, 0
  %v112 = vsel %vm108, 1, 0
  %v113 = vsel %vm109, 1, 0
  %v114 = vcvt.s32.f32 %v110
  %v115 = vcvt.s32.f32 %v111
  %v116 = vcvt.s32.f32 %v112
  %v117 = vcvt.s32.f32 %v113
  %v118 = vld [vmem:[%s0] sm:$0xff]
  %v119 = vld [vmem:[%s0 + $0x8] sm:$0xff]
  %v122 = vcombine.high %v118, %v118
  %v123 = vcombine.high %v119, %v119
  %126 = vrot.lane.b32.xlu0 %v118, 1
  %v127 = vpop.permute.xlu0 %126
  %128 = vrot.lane.b32.xlu0 %v122, 1
  %v129 = vpop.permute.xlu0 %128
  %130 = vrot.lane.b32.xlu0 %v119, 1
  %v131 = vpop.permute.xlu0 %130
  %132 = vrot.lane.b32.xlu0 %v123, 1
  %v133 = vpop.permute.xlu0 %132
  %vm134 = vcmp.lt.s32.totalorder %v42, 1
  %v135 = vsel %vm134, %v131, %v133
  %v136 = vsel %vm134, %v129, %v131
  %v137 = vsel %vm134, %v127, %v129
  %v138 = vsel %vm134, %v133, %v127
  %v139 = vmul.f32 %v138, %v102
  %v140 = vmul.f32 %v137, %v103
  %v141 = vmul.f32 %v136, %v104
  %v142 = vmul.f32 %v135, %v105
  %143 = vrot.lane.b32.xlu0 %v118, 127
  %v144 = vpop.permute.xlu0 %143
  %145 = vrot.lane.b32.xlu0 %v122, 127
  %v146 = vpop.permute.xlu0 %145
  %147 = vrot.lane.b32.xlu0 %v119, 127
  %v148 = vpop.permute.xlu0 %147
  %149 = vrot.lane.b32.xlu0 %v123, 127
  %v150 = vpop.permute.xlu0 %149
  %vm151 = vcmp.lt.s32.totalorder %v42, 127
  %v152 = vsel %vm151, %v148, %v150
  %v153 = vsel %vm151, %v146, %v148
  %v154 = vsel %vm151, %v144, %v146
  %v155 = vsel %vm151, %v150, %v144
  %v156 = vmul.f32 %v154, %v114
  %v157 = vmul.f32 %v153, %v115
  %v158 = vmul.f32 %v152, %v116
  %v159 = vmul.f32 %v155, %v117
  %v160 = vld [vmem:[%s1] sm:$0xff]
  %v161 = vld [vmem:[%s1 + $0x8] sm:$0xff]
  %s162 = scalar_lea.vmem %s1, 16
  %v163 = vld [vmem:[%s162] sm:$0xff]
  %v164 = vld [vmem:[%s162 + $0x8] sm:$0xff]
  %vm165 = vcmask 31744
  %v167 = vsel %vm165, %v163, 0
  %v170 = vsel %vm165, %v164, 0
  %vm172 = vcmask 1043456
  %v173 = vsel %vm172, %v118, 0
  %v175 = vsel %vm172, %v122, 0
  %v177 = vsel %vm172, %v119, 0
  %v179 = vsel %vm172, %v123, 0
  %181 = vmatprep.subr.mxu0 0.0
  %182 = vmatpush1.msra.mxu0 0.0
  %183 = vmatprep.subr.mxu0 0.0
  %184 = vmatpush1.msra.mxu0 0.0
  %185 = vmatprep.subr.mxu0 0.0
  %186 = vmatpush1.msra.mxu0 0.0
  %187 = vmatprep.subr.mxu0 0.0
  %188 = vmatpush1.msra.mxu0 0.0
  %189 = vmatprep.subr.mxu0 0.0
  %190 = vmatpush1.msra.mxu0 0.0
  %191 = vmatprep.subr.mxu0 0.0
  %192 = vmatpush1.msra.mxu0 0.0
  %193 = vmatprep.subr.mxu0 0.0
  %194 = vmatpush1.msra.mxu0 0.0
  %195 = vmatprep.subr.mxu0 0.0
  %196 = vmatpush1.msra.mxu0 0.0
  %197 = vmatprep.subr.mxu0 0.0
  %198 = vmatpush1.msra.mxu0 0.0
  %199 = vmatprep.subr.mxu0 0.0
  %200 = vmatpush1.msra.mxu0 0.0
  %201 = vmatprep.subr.mxu0 0.0
  %202 = vmatpush1.msra.mxu0 0.0
  %203 = vmatprep.subr.mxu0 0.0
  %204 = vmatpush1.msra.mxu0 0.0
  %205 = vmatprep.subr.mxu0 0.0
  %206 = vmatpush1.msra.mxu0 0.0
  %207 = vmatprep.subr.mxu0 0.0
  %208 = vmatpush1.msra.mxu0 0.0
  %209 = vmatprep.subr.mxu0 0.0
  %210 = vmatpush1.msra.mxu0 0.0
  %211 = vmatprep.subr.mxu0 %v175
  %212 = vmatpush1.msra.mxu0 %v173
  %213 = vmatprep.subr.mxu0 0.0
  %214 = vmatpush2.msra.mxu0 0.0
  %215 = vmatprep.subr.mxu0 0.0
  %216 = vmatpush2.msra.mxu0 0.0
  %217 = vmatprep.subr.mxu0 0.0
  %218 = vmatpush2.msra.mxu0 0.0
  %219 = vmatprep.subr.mxu0 0.0
  %220 = vmatpush2.msra.mxu0 0.0
  %221 = vmatprep.subr.mxu0 0.0
  %222 = vmatpush2.msra.mxu0 0.0
  %223 = vmatprep.subr.mxu0 0.0
  %224 = vmatpush2.msra.mxu0 0.0
  %225 = vmatprep.subr.mxu0 0.0
  %226 = vmatpush2.msra.mxu0 0.0
  %227 = vmatprep.subr.mxu0 0.0
  %228 = vmatpush2.msra.mxu0 0.0
  %229 = vmatprep.subr.mxu0 0.0
  %230 = vmatpush2.msra.mxu0 0.0
  %231 = vmatprep.subr.mxu0 0.0
  %232 = vmatpush2.msra.mxu0 0.0
  %233 = vmatprep.subr.mxu0 0.0
  %234 = vmatpush2.msra.mxu0 0.0
  %235 = vmatprep.subr.mxu0 0.0
  %236 = vmatpush2.msra.mxu0 0.0
  %237 = vmatprep.subr.mxu0 0.0
  %238 = vmatpush2.msra.mxu0 0.0
  %239 = vmatprep.subr.mxu0 0.0
  %240 = vmatpush2.msra.mxu0 0.0
  %241 = vmatprep.subr.mxu0 0.0
  %242 = vmatpush2.msra.mxu0 0.0
  %243 = vmatprep.subr.mxu0 0.0
  %244 = vmatpush2.msra.mxu0 0.0
  %245 = vmatprep.mubr.f32.mxu0 0.0
  %246 = vmatmul.mubr.f32.gmra.mxu0 %v167
  %v247 = vpop.f32.mrf.mxu0
  %v248 = vadd.f32 0.0, %v247
  %v249 = vpop.f32.mrf.mxu0
  %v250 = vadd.f32 0.0, %v249
  %251 = vmatprep.mubr.f32.mxu0 0.0
  %252 = vmatmul.mubr.f32.gmra.mxu0 %v170
  %v253 = vpop.f32.mrf.mxu0
  %v254 = vadd.f32 0.0, %v253
  %v255 = vpop.f32.mrf.mxu0
  %v256 = vadd.f32 0.0, %v255
  %257 = vdwg.mxu0
  %258 = vmatprep.subr.mxu0 0.0
  %259 = vmatpush1.msra.mxu0 0.0
  %260 = vmatprep.subr.mxu0 0.0
  %261 = vmatpush1.msra.mxu0 0.0
  %262 = vmatprep.subr.mxu0 0.0
  %263 = vmatpush1.msra.mxu0 0.0
  %264 = vmatprep.subr.mxu0 0.0
  %265 = vmatpush1.msra.mxu0 0.0
  %266 = vmatprep.subr.mxu0 0.0
  %267 = vmatpush1.msra.mxu0 0.0
  %268 = vmatprep.subr.mxu0 0.0
  %269 = vmatpush1.msra.mxu0 0.0
  %270 = vmatprep.subr.mxu0 0.0
  %271 = vmatpush1.msra.mxu0 0.0
  %272 = vmatprep.subr.mxu0 0.0
  %273 = vmatpush1.msra.mxu0 0.0
  %274 = vmatprep.subr.mxu0 0.0
  %275 = vmatpush1.msra.mxu0 0.0
  %276 = vmatprep.subr.mxu0 0.0
  %277 = vmatpush1.msra.mxu0 0.0
  %278 = vmatprep.subr.mxu0 0.0
  %279 = vmatpush1.msra.mxu0 0.0
  %280 = vmatprep.subr.mxu0 0.0
  %281 = vmatpush1.msra.mxu0 0.0
  %282 = vmatprep.subr.mxu0 0.0
  %283 = vmatpush1.msra.mxu0 0.0
  %284 = vmatprep.subr.mxu0 0.0
  %285 = vmatpush1.msra.mxu0 0.0
  %286 = vmatprep.subr.mxu0 0.0
  %287 = vmatpush1.msra.mxu0 0.0
  %288 = vmatprep.subr.mxu0 %v179
  %289 = vmatpush1.msra.mxu0 %v177
  %290 = vmatprep.subr.mxu0 0.0
  %291 = vmatpush2.msra.mxu0 0.0
  %292 = vmatprep.subr.mxu0 0.0
  %293 = vmatpush2.msra.mxu0 0.0
  %294 = vmatprep.subr.mxu0 0.0
  %295 = vmatpush2.msra.mxu0 0.0
  %296 = vmatprep.subr.mxu0 0.0
  %297 = vmatpush2.msra.mxu0 0.0
  %298 = vmatprep.subr.mxu0 0.0
  %299 = vmatpush2.msra.mxu0 0.0
  %300 = vmatprep.subr.mxu0 0.0
  %301 = vmatpush2.msra.mxu0 0.0
  %302 = vmatprep.subr.mxu0 0.0
  %303 = vmatpush2.msra.mxu0 0.0
  %304 = vmatprep.subr.mxu0 0.0
  %305 = vmatpush2.msra.mxu0 0.0
  %306 = vmatprep.subr.mxu0 0.0
  %307 = vmatpush2.msra.mxu0 0.0
  %308 = vmatprep.subr.mxu0 0.0
  %309 = vmatpush2.msra.mxu0 0.0
  %310 = vmatprep.subr.mxu0 0.0
  %311 = vmatpush2.msra.mxu0 0.0
  %312 = vmatprep.subr.mxu0 0.0
  %313 = vmatpush2.msra.mxu0 0.0
  %314 = vmatprep.subr.mxu0 0.0
  %315 = vmatpush2.msra.mxu0 0.0
  %316 = vmatprep.subr.mxu0 0.0
  %317 = vmatpush2.msra.mxu0 0.0
  %318 = vmatprep.subr.mxu0 0.0
  %319 = vmatpush2.msra.mxu0 0.0
  %320 = vmatprep.subr.mxu0 0.0
  %321 = vmatpush2.msra.mxu0 0.0
  %322 = vmatprep.mubr.f32.mxu0 0.0
  %323 = vmatmul.mubr.f32.gmra.mxu0 %v167
  %v324 = vpop.f32.mrf.mxu0
  %v325 = vadd.f32 0.0, %v324
  %v326 = vpop.f32.mrf.mxu0
  %v327 = vadd.f32 0.0, %v326
  %328 = vmatprep.mubr.f32.mxu0 0.0
  %329 = vmatmul.mubr.f32.gmra.mxu0 %v170
  %v330 = vpop.f32.mrf.mxu0
  %v331 = vadd.f32 0.0, %v330
  %v332 = vpop.f32.mrf.mxu0
  %v333 = vadd.f32 0.0, %v332
  %334 = vdwg.mxu0
  %v336 = vsel %vm165, %v160, 0
  %v339 = vsel %vm165, %v161, 0
  %v342 = vsel %vm172, %v139, 0
  %v345 = vsel %vm172, %v140, 0
  %v348 = vsel %vm172, %v141, 0
  %v351 = vsel %vm172, %v142, 0
  %353 = vmatprep.subr.mxu0 0.0
  %354 = vmatpush1.msra.mxu0 0.0
  %355 = vmatprep.subr.mxu0 0.0
  %356 = vmatpush1.msra.mxu0 0.0
  %357 = vmatprep.subr.mxu0 0.0
  %358 = vmatpush1.msra.mxu0 0.0
  %359 = vmatprep.subr.mxu0 0.0
  %360 = vmatpush1.msra.mxu0 0.0
  %361 = vmatprep.subr.mxu0 0.0
  %362 = vmatpush1.msra.mxu0 0.0
  %363 = vmatprep.subr.mxu0 0.0
  %364 = vmatpush1.msra.mxu0 0.0
  %365 = vmatprep.subr.mxu0 0.0
  %366 = vmatpush1.msra.mxu0 0.0
  %367 = vmatprep.subr.mxu0 0.0
  %368 = vmatpush1.msra.mxu0 0.0
  %369 = vmatprep.subr.mxu0 0.0
  %370 = vmatpush1.msra.mxu0 0.0
  %371 = vmatprep.subr.mxu0 0.0
  %372 = vmatpush1.msra.mxu0 0.0
  %373 = vmatprep.subr.mxu0 0.0
  %374 = vmatpush1.msra.mxu0 0.0
  %375 = vmatprep.subr.mxu0 0.0
  %376 = vmatpush1.msra.mxu0 0.0
  %377 = vmatprep.subr.mxu0 0.0
  %378 = vmatpush1.msra.mxu0 0.0
  %379 = vmatprep.subr.mxu0 0.0
  %380 = vmatpush1.msra.mxu0 0.0
  %381 = vmatprep.subr.mxu0 0.0
  %382 = vmatpush1.msra.mxu0 0.0
  %383 = vmatprep.subr.mxu0 %v345
  %384 = vmatpush1.msra.mxu0 %v342
  %385 = vmatprep.subr.mxu0 0.0
  %386 = vmatpush2.msra.mxu0 0.0
  %387 = vmatprep.subr.mxu0 0.0
  %388 = vmatpush2.msra.mxu0 0.0
  %389 = vmatprep.subr.mxu0 0.0
  %390 = vmatpush2.msra.mxu0 0.0
  %391 = vmatprep.subr.mxu0 0.0
  %392 = vmatpush2.msra.mxu0 0.0
  %393 = vmatprep.subr.mxu0 0.0
  %394 = vmatpush2.msra.mxu0 0.0
  %395 = vmatprep.subr.mxu0 0.0
  %396 = vmatpush2.msra.mxu0 0.0
  %397 = vmatprep.subr.mxu0 0.0
  %398 = vmatpush2.msra.mxu0 0.0
  %399 = vmatprep.subr.mxu0 0.0
  %400 = vmatpush2.msra.mxu0 0.0
  %401 = vmatprep.subr.mxu0 0.0
  %402 = vmatpush2.msra.mxu0 0.0
  %403 = vmatprep.subr.mxu0 0.0
  %404 = vmatpush2.msra.mxu0 0.0
  %405 = vmatprep.subr.mxu0 0.0
  %406 = vmatpush2.msra.mxu0 0.0
  %407 = vmatprep.subr.mxu0 0.0
  %408 = vmatpush2.msra.mxu0 0.0
  %409 = vmatprep.subr.mxu0 0.0
  %410 = vmatpush2.msra.mxu0 0.0
  %411 = vmatprep.subr.mxu0 0.0
  %412 = vmatpush2.msra.mxu0 0.0
  %413 = vmatprep.subr.mxu0 0.0
  %414 = vmatpush2.msra.mxu0 0.0
  %415 = vmatprep.subr.mxu0 0.0
  %416 = vmatpush2.msra.mxu0 0.0
  %417 = vmatprep.mubr.f32.mxu0 0.0
  %418 = vmatmul.mubr.f32.gmra.mxu0 %v336
  %v419 = vpop.f32.mrf.mxu0
  %v420 = vadd.f32 %v248, %v419
  %v421 = vpop.f32.mrf.mxu0
  %v422 = vadd.f32 %v250, %v421
  %423 = vmatprep.mubr.f32.mxu0 0.0
  %424 = vmatmul.mubr.f32.gmra.mxu0 %v339
  %v425 = vpop.f32.mrf.mxu0
  %v426 = vadd.f32 %v254, %v425
  %v427 = vpop.f32.mrf.mxu0
  %v428 = vadd.f32 %v256, %v427
  %429 = vdwg.mxu0
  %430 = vmatprep.subr.mxu0 0.0
  %431 = vmatpush1.msra.mxu0 0.0
  %432 = vmatprep.subr.mxu0 0.0
  %433 = vmatpush1.msra.mxu0 0.0
  %434 = vmatprep.subr.mxu0 0.0
  %435 = vmatpush1.msra.mxu0 0.0
  %436 = vmatprep.subr.mxu0 0.0
  %437 = vmatpush1.msra.mxu0 0.0
  %438 = vmatprep.subr.mxu0 0.0
  %439 = vmatpush1.msra.mxu0 0.0
  %440 = vmatprep.subr.mxu0 0.0
  %441 = vmatpush1.msra.mxu0 0.0
  %442 = vmatprep.subr.mxu0 0.0
  %443 = vmatpush1.msra.mxu0 0.0
  %444 = vmatprep.subr.mxu0 0.0
  %445 = vmatpush1.msra.mxu0 0.0
  %446 = vmatprep.subr.mxu0 0.0
  %447 = vmatpush1.msra.mxu0 0.0
  %448 = vmatprep.subr.mxu0 0.0
  %449 = vmatpush1.msra.mxu0 0.0
  %450 = vmatprep.subr.mxu0 0.0
  %451 = vmatpush1.msra.mxu0 0.0
  %452 = vmatprep.subr.mxu0 0.0
  %453 = vmatpush1.msra.mxu0 0.0
  %454 = vmatprep.subr.mxu0 0.0
  %455 = vmatpush1.msra.mxu0 0.0
  %456 = vmatprep.subr.mxu0 0.0
  %457 = vmatpush1.msra.mxu0 0.0
  %458 = vmatprep.subr.mxu0 0.0
  %459 = vmatpush1.msra.mxu0 0.0
  %460 = vmatprep.subr.mxu0 %v351
  %461 = vmatpush1.msra.mxu0 %v348
  %462 = vmatprep.subr.mxu0 0.0
  %463 = vmatpush2.msra.mxu0 0.0
  %464 = vmatprep.subr.mxu0 0.0
  %465 = vmatpush2.msra.mxu0 0.0
  %466 = vmatprep.subr.mxu0 0.0
  %467 = vmatpush2.msra.mxu0 0.0
  %468 = vmatprep.subr.mxu0 0.0
  %469 = vmatpush2.msra.mxu0 0.0
  %470 = vmatprep.subr.mxu0 0.0
  %471 = vmatpush2.msra.mxu0 0.0
  %472 = vmatprep.subr.mxu0 0.0
  %473 = vmatpush2.msra.mxu0 0.0
  %474 = vmatprep.subr.mxu0 0.0
  %475 = vmatpush2.msra.mxu0 0.0
  %476 = vmatprep.subr.mxu0 0.0
  %477 = vmatpush2.msra.mxu0 0.0
  %478 = vmatprep.subr.mxu0 0.0
  %479 = vmatpush2.msra.mxu0 0.0
  %480 = vmatprep.subr.mxu0 0.0
  %481 = vmatpush2.msra.mxu0 0.0
  %482 = vmatprep.subr.mxu0 0.0
  %483 = vmatpush2.msra.mxu0 0.0
  %484 = vmatprep.subr.mxu0 0.0
  %485 = vmatpush2.msra.mxu0 0.0
  %486 = vmatprep.subr.mxu0 0.0
  %487 = vmatpush2.msra.mxu0 0.0
  %488 = vmatprep.subr.mxu0 0.0
  %489 = vmatpush2.msra.mxu0 0.0
  %490 = vmatprep.subr.mxu0 0.0
  %491 = vmatpush2.msra.mxu0 0.0
  %492 = vmatprep.subr.mxu0 0.0
  %493 = vmatpush2.msra.mxu0 0.0
  %494 = vmatprep.mubr.f32.mxu0 0.0
  %495 = vmatmul.mubr.f32.gmra.mxu0 %v336
  %v496 = vpop.f32.mrf.mxu0
  %v497 = vadd.f32 %v325, %v496
  %v498 = vpop.f32.mrf.mxu0
  %v499 = vadd.f32 %v327, %v498
  %500 = vmatprep.mubr.f32.mxu0 0.0
  %501 = vmatmul.mubr.f32.gmra.mxu0 %v339
  %v502 = vpop.f32.mrf.mxu0
  %v503 = vadd.f32 %v331, %v502
  %v504 = vpop.f32.mrf.mxu0
  %v505 = vadd.f32 %v333, %v504
  %506 = vdwg.mxu0
  %s507 = scalar_lea.vmem %s1, 32
  %v508 = vld [vmem:[%s507] sm:$0xff]
  %v509 = vld [vmem:[%s507 + $0x8] sm:$0xff]
  %v511 = vsel %vm165, %v508, 0
  %v514 = vsel %vm165, %v509, 0
  %v517 = vsel %vm172, %v156, 0
  %v520 = vsel %vm172, %v157, 0
  %v523 = vsel %vm172, %v158, 0
  %v526 = vsel %vm172, %v159, 0
  %528 = vmatprep.subr.mxu0 0.0
  %529 = vmatpush1.msra.mxu0 0.0
  %530 = vmatprep.subr.mxu0 0.0
  %531 = vmatpush1.msra.mxu0 0.0
  %532 = vmatprep.subr.mxu0 0.0
  %533 = vmatpush1.msra.mxu0 0.0
  %534 = vmatprep.subr.mxu0 0.0
  %535 = vmatpush1.msra.mxu0 0.0
  %536 = vmatprep.subr.mxu0 0.0
  %537 = vmatpush1.msra.mxu0 0.0
  %538 = vmatprep.subr.mxu0 0.0
  %539 = vmatpush1.msra.mxu0 0.0
  %540 = vmatprep.subr.mxu0 0.0
  %541 = vmatpush1.msra.mxu0 0.0
  %542 = vmatprep.subr.mxu0 0.0
  %543 = vmatpush1.msra.mxu0 0.0
  %544 = vmatprep.subr.mxu0 0.0
  %545 = vmatpush1.msra.mxu0 0.0
  %546 = vmatprep.subr.mxu0 0.0
  %547 = vmatpush1.msra.mxu0 0.0
  %548 = vmatprep.subr.mxu0 0.0
  %549 = vmatpush1.msra.mxu0 0.0
  %550 = vmatprep.subr.mxu0 0.0
  %551 = vmatpush1.msra.mxu0 0.0
  %552 = vmatprep.subr.mxu0 0.0
  %553 = vmatpush1.msra.mxu0 0.0
  %554 = vmatprep.subr.mxu0 0.0
  %555 = vmatpush1.msra.mxu0 0.0
  %556 = vmatprep.subr.mxu0 0.0
  %557 = vmatpush1.msra.mxu0 0.0
  %558 = vmatprep.subr.mxu0 %v520
  %559 = vmatpush1.msra.mxu0 %v517
  %560 = vmatprep.subr.mxu0 0.0
  %561 = vmatpush2.msra.mxu0 0.0
  %562 = vmatprep.subr.mxu0 0.0
  %563 = vmatpush2.msra.mxu0 0.0
  %564 = vmatprep.subr.mxu0 0.0
  %565 = vmatpush2.msra.mxu0 0.0
  %566 = vmatprep.subr.mxu0 0.0
  %567 = vmatpush2.msra.mxu0 0.0
  %568 = vmatprep.subr.mxu0 0.0
  %569 = vmatpush2.msra.mxu0 0.0
  %570 = vmatprep.subr.mxu0 0.0
  %571 = vmatpush2.msra.mxu0 0.0
  %572 = vmatprep.subr.mxu0 0.0
  %573 = vmatpush2.msra.mxu0 0.0
  %574 = vmatprep.subr.mxu0 0.0
  %575 = vmatpush2.msra.mxu0 0.0
  %576 = vmatprep.subr.mxu0 0.0
  %577 = vmatpush2.msra.mxu0 0.0
  %578 = vmatprep.subr.mxu0 0.0
  %579 = vmatpush2.msra.mxu0 0.0
  %580 = vmatprep.subr.mxu0 0.0
  %581 = vmatpush2.msra.mxu0 0.0
  %582 = vmatprep.subr.mxu0 0.0
  %583 = vmatpush2.msra.mxu0 0.0
  %584 = vmatprep.subr.mxu0 0.0
  %585 = vmatpush2.msra.mxu0 0.0
  %586 = vmatprep.subr.mxu0 0.0
  %587 = vmatpush2.msra.mxu0 0.0
  %588 = vmatprep.subr.mxu0 0.0
  %589 = vmatpush2.msra.mxu0 0.0
  %590 = vmatprep.subr.mxu0 0.0
  %591 = vmatpush2.msra.mxu0 0.0
  %592 = vmatprep.mubr.f32.mxu0 0.0
  %593 = vmatmul.mubr.f32.gmra.mxu0 %v511
  %v594 = vpop.f32.mrf.mxu0
  %v595 = vadd.f32 0.0, %v594
  %v596 = vpop.f32.mrf.mxu0
  %v597 = vadd.f32 0.0, %v596
  %598 = vmatprep.mubr.f32.mxu0 0.0
  %599 = vmatmul.mubr.f32.gmra.mxu0 %v514
  %v600 = vpop.f32.mrf.mxu0
  %v601 = vadd.f32 0.0, %v600
  %v602 = vpop.f32.mrf.mxu0
  %v603 = vadd.f32 0.0, %v602
  %604 = vdwg.mxu0
  %605 = vmatprep.subr.mxu0 0.0
  %606 = vmatpush1.msra.mxu0 0.0
  %607 = vmatprep.subr.mxu0 0.0
  %608 = vmatpush1.msra.mxu0 0.0
  %609 = vmatprep.subr.mxu0 0.0
  %610 = vmatpush1.msra.mxu0 0.0
  %611 = vmatprep.subr.mxu0 0.0
  %612 = vmatpush1.msra.mxu0 0.0
  %613 = vmatprep.subr.mxu0 0.0
  %614 = vmatpush1.msra.mxu0 0.0
  %615 = vmatprep.subr.mxu0 0.0
  %616 = vmatpush1.msra.mxu0 0.0
  %617 = vmatprep.subr.mxu0 0.0
  %618 = vmatpush1.msra.mxu0 0.0
  %619 = vmatprep.subr.mxu0 0.0
  %620 = vmatpush1.msra.mxu0 0.0
  %621 = vmatprep.subr.mxu0 0.0
  %622 = vmatpush1.msra.mxu0 0.0
  %623 = vmatprep.subr.mxu0 0.0
  %624 = vmatpush1.msra.mxu0 0.0
  %625 = vmatprep.subr.mxu0 0.0
  %626 = vmatpush1.msra.mxu0 0.0
  %627 = vmatprep.subr.mxu0 0.0
  %628 = vmatpush1.msra.mxu0 0.0
  %629 = vmatprep.subr.mxu0 0.0
  %630 = vmatpush1.msra.mxu0 0.0
  %631 = vmatprep.subr.mxu0 0.0
  %632 = vmatpush1.msra.mxu0 0.0
  %633 = vmatprep.subr.mxu0 0.0
  %634 = vmatpush1.msra.mxu0 0.0
  %635 = vmatprep.subr.mxu0 %v526
  %636 = vmatpush1.msra.mxu0 %v523
  %637 = vmatprep.subr.mxu0 0.0
  %638 = vmatpush2.msra.mxu0 0.0
  %639 = vmatprep.subr.mxu0 0.0
  %640 = vmatpush2.msra.mxu0 0.0
  %641 = vmatprep.subr.mxu0 0.0
  %642 = vmatpush2.msra.mxu0 0.0
  %643 = vmatprep.subr.mxu0 0.0
  %644 = vmatpush2.msra.mxu0 0.0
  %645 = vmatprep.subr.mxu0 0.0
  %646 = vmatpush2.msra.mxu0 0.0
  %647 = vmatprep.subr.mxu0 0.0
  %648 = vmatpush2.msra.mxu0 0.0
  %649 = vmatprep.subr.mxu0 0.0
  %650 = vmatpush2.msra.mxu0 0.0
  %651 = vmatprep.subr.mxu0 0.0
  %652 = vmatpush2.msra.mxu0 0.0
  %653 = vmatprep.subr.mxu0 0.0
  %654 = vmatpush2.msra.mxu0 0.0
  %655 = vmatprep.subr.mxu0 0.0
  %656 = vmatpush2.msra.mxu0 0.0
  %657 = vmatprep.subr.mxu0 0.0
  %658 = vmatpush2.msra.mxu0 0.0
  %659 = vmatprep.subr.mxu0 0.0
  %660 = vmatpush2.msra.mxu0 0.0
  %661 = vmatprep.subr.mxu0 0.0
  %662 = vmatpush2.msra.mxu0 0.0
  %663 = vmatprep.subr.mxu0 0.0
  %664 = vmatpush2.msra.mxu0 0.0
  %665 = vmatprep.subr.mxu0 0.0
  %666 = vmatpush2.msra.mxu0 0.0
  %667 = vmatprep.subr.mxu0 0.0
  %668 = vmatpush2.msra.mxu0 0.0
  %669 = vmatprep.mubr.f32.mxu0 0.0
  %670 = vmatmul.mubr.f32.gmra.mxu0 %v511
  %v671 = vpop.f32.mrf.mxu0
  %v672 = vadd.f32 0.0, %v671
  %v673 = vpop.f32.mrf.mxu0
  %v674 = vadd.f32 0.0, %v673
  %675 = vmatprep.mubr.f32.mxu0 0.0
  %676 = vmatmul.mubr.f32.gmra.mxu0 %v514
  %v677 = vpop.f32.mrf.mxu0
  %v678 = vadd.f32 0.0, %v677
  %v679 = vpop.f32.mrf.mxu0
  %v680 = vadd.f32 0.0, %v679
  %681 = vdwg.mxu0
  %v682 = vadd.f32 %v420, %v595
  %v683 = vadd.f32 %v422, %v597
  %v684 = vadd.f32 %v497, %v672
  %v685 = vadd.f32 %v499, %v674
  %v686 = vadd.f32 %v426, %v601
  %v687 = vadd.f32 %v428, %v603
  %v688 = vadd.f32 %v503, %v678
  %v689 = vadd.f32 %v505, %v680
  %v690 = vld [vmem:[%s2] sm:$0xff]
  %v691 = vld [vmem:[%s2 + $0x8] sm:$0xff]
  %693 = vset.pattern.permute.xlu0 0
  %694 = vperm.xlu0 %693, %v690
  %v695 = vpop.permute.xlu0 %694
  %698 = vset.pattern.permute.xlu0 0
  %699 = vperm.xlu0 %698, %v691
  %v700 = vpop.permute.xlu0 %699
  %v702 = vadd.f32 %v682, %v695
  %v703 = vadd.f32 %v683, %v695
  %v704 = vadd.f32 %v684, %v695
  %v705 = vadd.f32 %v685, %v695
  %v706 = vadd.f32 %v686, %v700
  %v707 = vadd.f32 %v687, %v700
  %v708 = vadd.f32 %v688, %v700
  %v709 = vadd.f32 %v689, %v700
  %v710 = vmax.f32 %v702, 0.0
  %v711 = vmax.f32 %v703, 0.0
  %v712 = vmax.f32 %v704, 0.0
  %v713 = vmax.f32 %v705, 0.0
  %v714 = vmax.f32 %v706, 0.0
  %v715 = vmax.f32 %v707, 0.0
  %v716 = vmax.f32 %v708, 0.0
  %v717 = vmax.f32 %v709, 0.0
  %718 = vrot.lane.b32.xlu0 %v710, 1
  %v719 = vpop.permute.xlu0 %718
  %720 = vrot.lane.b32.xlu0 %v714, 1
  %v721 = vpop.permute.xlu0 %720
  %722 = vrot.lane.b32.xlu0 %v711, 1
  %v723 = vpop.permute.xlu0 %722
  %724 = vrot.lane.b32.xlu0 %v715, 1
  %v725 = vpop.permute.xlu0 %724
  %726 = vrot.lane.b32.xlu0 %v712, 1
  %v727 = vpop.permute.xlu0 %726
  %728 = vrot.lane.b32.xlu0 %v716, 1
  %v729 = vpop.permute.xlu0 %728
  %730 = vrot.lane.b32.xlu0 %v713, 1
  %v731 = vpop.permute.xlu0 %730
  %732 = vrot.lane.b32.xlu0 %v717, 1
  %v733 = vpop.permute.xlu0 %732
  %v734 = vsel %vm134, %v727, %v731
  %v735 = vsel %vm134, %v729, %v733
  %v736 = vsel %vm134, %v723, %v727
  %v737 = vsel %vm134, %v725, %v729
  %v738 = vsel %vm134, %v719, %v723
  %v739 = vsel %vm134, %v721, %v725
  %v740 = vsel %vm134, %v731, %v719
  %v741 = vsel %vm134, %v733, %v721
  %v742 = vmul.f32 %v740, %v102
  %v743 = vmul.f32 %v738, %v103
  %v744 = vmul.f32 %v736, %v104
  %v745 = vmul.f32 %v734, %v105
  %v746 = vmul.f32 %v741, %v102
  %v747 = vmul.f32 %v739, %v103
  %v748 = vmul.f32 %v737, %v104
  %v749 = vmul.f32 %v735, %v105
  %750 = vrot.lane.b32.xlu0 %v710, 127
  %v751 = vpop.permute.xlu0 %750
  %752 = vrot.lane.b32.xlu0 %v714, 127
  %v753 = vpop.permute.xlu0 %752
  %754 = vrot.lane.b32.xlu0 %v711, 127
  %v755 = vpop.permute.xlu0 %754
  %756 = vrot.lane.b32.xlu0 %v715, 127
  %v757 = vpop.permute.xlu0 %756
  %758 = vrot.lane.b32.xlu0 %v712, 127
  %v759 = vpop.permute.xlu0 %758
  %760 = vrot.lane.b32.xlu0 %v716, 127
  %v761 = vpop.permute.xlu0 %760
  %762 = vrot.lane.b32.xlu0 %v713, 127
  %v763 = vpop.permute.xlu0 %762
  %764 = vrot.lane.b32.xlu0 %v717, 127
  %v765 = vpop.permute.xlu0 %764
  %v766 = vsel %vm151, %v759, %v763
  %v767 = vsel %vm151, %v761, %v765
  %v768 = vsel %vm151, %v755, %v759
  %v769 = vsel %vm151, %v757, %v761
  %v770 = vsel %vm151, %v751, %v755
  %v771 = vsel %vm151, %v753, %v757
  %v772 = vsel %vm151, %v763, %v751
  %v773 = vsel %vm151, %v765, %v753
  %v774 = vmul.f32 %v770, %v114
  %v775 = vmul.f32 %v768, %v115
  %v776 = vmul.f32 %v766, %v116
  %v777 = vmul.f32 %v772, %v117
  %v778 = vmul.f32 %v771, %v114
  %v779 = vmul.f32 %v769, %v115
  %v780 = vmul.f32 %v767, %v116
  %v781 = vmul.f32 %v773, %v117
  %v782 = vld [vmem:[%s3] sm:$0xff]
  %v783 = vld [vmem:[%s3 + $0x8] sm:$0xff]
  %v784 = vld [vmem:[%s3 + $0x10] sm:$0xff]
  %v785 = vld [vmem:[%s3 + $0x18] sm:$0xff]
  %s786 = scalar_lea.vmem %s3, 32
  %v787 = vld [vmem:[%s786] sm:$0xff]
  %v788 = vld [vmem:[%s786 + $0x8] sm:$0xff]
  %v789 = vld [vmem:[%s786 + $0x10] sm:$0xff]
  %v790 = vld [vmem:[%s786 + $0x18] sm:$0xff]
  %vm791 = vcmask 130048
  %v793 = vsel %vm791, %v787, 0
  %v796 = vsel %vm791, %v788, 0
  %v799 = vsel %vm791, %v789, 0
  %v802 = vsel %vm791, %v790, 0
  %804 = vmatprep.subr.mxu0 0.0
  %805 = vmatpush1.msra.mxu0 0.0
  %806 = vmatprep.subr.mxu0 0.0
  %807 = vmatpush1.msra.mxu0 0.0
  %808 = vmatprep.subr.mxu0 0.0
  %809 = vmatpush1.msra.mxu0 0.0
  %810 = vmatprep.subr.mxu0 0.0
  %811 = vmatpush1.msra.mxu0 0.0
  %812 = vmatprep.subr.mxu0 0.0
  %813 = vmatpush1.msra.mxu0 0.0
  %814 = vmatprep.subr.mxu0 0.0
  %815 = vmatpush1.msra.mxu0 0.0
  %816 = vmatprep.subr.mxu0 0.0
  %817 = vmatpush1.msra.mxu0 0.0
  %818 = vmatprep.subr.mxu0 0.0
  %819 = vmatpush1.msra.mxu0 0.0
  %820 = vmatprep.subr.mxu0 0.0
  %821 = vmatpush1.msra.mxu0 0.0
  %822 = vmatprep.subr.mxu0 0.0
  %823 = vmatpush1.msra.mxu0 0.0
  %824 = vmatprep.subr.mxu0 0.0
  %825 = vmatpush1.msra.mxu0 0.0
  %826 = vmatprep.subr.mxu0 0.0
  %827 = vmatpush1.msra.mxu0 0.0
  %828 = vmatprep.subr.mxu0 0.0
  %829 = vmatpush1.msra.mxu0 0.0
  %830 = vmatprep.subr.mxu0 0.0
  %831 = vmatpush1.msra.mxu0 0.0
  %832 = vmatprep.subr.mxu0 %v715
  %833 = vmatpush1.msra.mxu0 %v714
  %834 = vmatprep.subr.mxu0 %v711
  %835 = vmatpush1.msra.mxu0 %v710
  %836 = vmatprep.subr.mxu0 0.0
  %837 = vmatpush2.msra.mxu0 0.0
  %838 = vmatprep.subr.mxu0 0.0
  %839 = vmatpush2.msra.mxu0 0.0
  %840 = vmatprep.subr.mxu0 0.0
  %841 = vmatpush2.msra.mxu0 0.0
  %842 = vmatprep.subr.mxu0 0.0
  %843 = vmatpush2.msra.mxu0 0.0
  %844 = vmatprep.subr.mxu0 0.0
  %845 = vmatpush2.msra.mxu0 0.0
  %846 = vmatprep.subr.mxu0 0.0
  %847 = vmatpush2.msra.mxu0 0.0
  %848 = vmatprep.subr.mxu0 0.0
  %849 = vmatpush2.msra.mxu0 0.0
  %850 = vmatprep.subr.mxu0 0.0
  %851 = vmatpush2.msra.mxu0 0.0
  %852 = vmatprep.subr.mxu0 0.0
  %853 = vmatpush2.msra.mxu0 0.0
  %854 = vmatprep.subr.mxu0 0.0
  %855 = vmatpush2.msra.mxu0 0.0
  %856 = vmatprep.subr.mxu0 0.0
  %857 = vmatpush2.msra.mxu0 0.0
  %858 = vmatprep.subr.mxu0 0.0
  %859 = vmatpush2.msra.mxu0 0.0
  %860 = vmatprep.subr.mxu0 0.0
  %861 = vmatpush2.msra.mxu0 0.0
  %862 = vmatprep.subr.mxu0 0.0
  %863 = vmatpush2.msra.mxu0 0.0
  %864 = vmatprep.subr.mxu0 0.0
  %865 = vmatpush2.msra.mxu0 0.0
  %866 = vmatprep.subr.mxu0 0.0
  %867 = vmatpush2.msra.mxu0 0.0
  %868 = vmatprep.mubr.f32.mxu0 0.0
  %869 = vmatmul.mubr.f32.gmra.mxu0 %v793
  %v870 = vpop.f32.mrf.mxu0
  %v871 = vadd.f32 0.0, %v870
  %v872 = vpop.f32.mrf.mxu0
  %v873 = vadd.f32 0.0, %v872
  %874 = vmatprep.mubr.f32.mxu0 0.0
  %875 = vmatmul.mubr.f32.gmra.mxu0 %v796
  %v876 = vpop.f32.mrf.mxu0
  %v877 = vadd.f32 0.0, %v876
  %v878 = vpop.f32.mrf.mxu0
  %v879 = vadd.f32 0.0, %v878
  %880 = vmatprep.mubr.f32.mxu0 0.0
  %881 = vmatmul.mubr.f32.gmra.mxu0 %v799
  %v882 = vpop.f32.mrf.mxu0
  %v883 = vadd.f32 0.0, %v882
  %v884 = vpop.f32.mrf.mxu0
  %v885 = vadd.f32 0.0, %v884
  %886 = vmatprep.mubr.f32.mxu0 0.0
  %887 = vmatmul.mubr.f32.gmra.mxu0 %v802
  %v888 = vpop.f32.mrf.mxu0
  %v889 = vadd.f32 0.0, %v888
  %v890 = vpop.f32.mrf.mxu0
  %v891 = vadd.f32 0.0, %v890
  %892 = vdwg.mxu0
  %893 = vmatprep.subr.mxu0 0.0
  %894 = vmatpush1.msra.mxu0 0.0
  %895 = vmatprep.subr.mxu0 0.0
  %896 = vmatpush1.msra.mxu0 0.0
  %897 = vmatprep.subr.mxu0 0.0
  %898 = vmatpush1.msra.mxu0 0.0
  %899 = vmatprep.subr.mxu0 0.0
  %900 = vmatpush1.msra.mxu0 0.0
  %901 = vmatprep.subr.mxu0 0.0
  %902 = vmatpush1.msra.mxu0 0.0
  %903 = vmatprep.subr.mxu0 0.0
  %904 = vmatpush1.msra.mxu0 0.0
  %905 = vmatprep.subr.mxu0 0.0
  %906 = vmatpush1.msra.mxu0 0.0
  %907 = vmatprep.subr.mxu0 0.0
  %908 = vmatpush1.msra.mxu0 0.0
  %909 = vmatprep.subr.mxu0 0.0
  %910 = vmatpush1.msra.mxu0 0.0
  %911 = vmatprep.subr.mxu0 0.0
  %912 = vmatpush1.msra.mxu0 0.0
  %913 = vmatprep.subr.mxu0 0.0
  %914 = vmatpush1.msra.mxu0 0.0
  %915 = vmatprep.subr.mxu0 0.0
  %916 = vmatpush1.msra.mxu0 0.0
  %917 = vmatprep.subr.mxu0 0.0
  %918 = vmatpush1.msra.mxu0 0.0
  %919 = vmatprep.subr.mxu0 0.0
  %920 = vmatpush1.msra.mxu0 0.0
  %921 = vmatprep.subr.mxu0 %v717
  %922 = vmatpush1.msra.mxu0 %v716
  %923 = vmatprep.subr.mxu0 %v713
  %924 = vmatpush1.msra.mxu0 %v712
  %925 = vmatprep.subr.mxu0 0.0
  %926 = vmatpush2.msra.mxu0 0.0
  %927 = vmatprep.subr.mxu0 0.0
  %928 = vmatpush2.msra.mxu0 0.0
  %929 = vmatprep.subr.mxu0 0.0
  %930 = vmatpush2.msra.mxu0 0.0
  %931 = vmatprep.subr.mxu0 0.0
  %932 = vmatpush2.msra.mxu0 0.0
  %933 = vmatprep.subr.mxu0 0.0
  %934 = vmatpush2.msra.mxu0 0.0
  %935 = vmatprep.subr.mxu0 0.0
  %936 = vmatpush2.msra.mxu0 0.0
  %937 = vmatprep.subr.mxu0 0.0
  %938 = vmatpush2.msra.mxu0 0.0
  %939 = vmatprep.subr.mxu0 0.0
  %940 = vmatpush2.msra.mxu0 0.0
  %941 = vmatprep.subr.mxu0 0.0
  %942 = vmatpush2.msra.mxu0 0.0
  %943 = vmatprep.subr.mxu0 0.0
  %944 = vmatpush2.msra.mxu0 0.0
  %945 = vmatprep.subr.mxu0 0.0
  %946 = vmatpush2.msra.mxu0 0.0
  %947 = vmatprep.subr.mxu0 0.0
  %948 = vmatpush2.msra.mxu0 0.0
  %949 = vmatprep.subr.mxu0 0.0
  %950 = vmatpush2.msra.mxu0 0.0
  %951 = vmatprep.subr.mxu0 0.0
  %952 = vmatpush2.msra.mxu0 0.0
  %953 = vmatprep.subr.mxu0 0.0
  %954 = vmatpush2.msra.mxu0 0.0
  %955 = vmatprep.subr.mxu0 0.0
  %956 = vmatpush2.msra.mxu0 0.0
  %957 = vmatprep.mubr.f32.mxu0 0.0
  %958 = vmatmul.mubr.f32.gmra.mxu0 %v793
  %v959 = vpop.f32.mrf.mxu0
  %v960 = vadd.f32 0.0, %v959
  %v961 = vpop.f32.mrf.mxu0
  %v962 = vadd.f32 0.0, %v961
  %963 = vmatprep.mubr.f32.mxu0 0.0
  %964 = vmatmul.mubr.f32.gmra.mxu0 %v796
  %v965 = vpop.f32.mrf.mxu0
  %v966 = vadd.f32 0.0, %v965
  %v967 = vpop.f32.mrf.mxu0
  %v968 = vadd.f32 0.0, %v967
  %969 = vmatprep.mubr.f32.mxu0 0.0
  %970 = vmatmul.mubr.f32.gmra.mxu0 %v799
  %v971 = vpop.f32.mrf.mxu0
  %v972 = vadd.f32 0.0, %v971
  %v973 = vpop.f32.mrf.mxu0
  %v974 = vadd.f32 0.0, %v973
  %975 = vmatprep.mubr.f32.mxu0 0.0
  %976 = vmatmul.mubr.f32.gmra.mxu0 %v802
  %v977 = vpop.f32.mrf.mxu0
  %v978 = vadd.f32 0.0, %v977
  %v979 = vpop.f32.mrf.mxu0
  %v980 = vadd.f32 0.0, %v979
  %981 = vdwg.mxu0
  %v983 = vsel %vm791, %v782, 0
  %v986 = vsel %vm791, %v783, 0
  %v989 = vsel %vm791, %v784, 0
  %v992 = vsel %vm791, %v785, 0
  %994 = vmatprep.subr.mxu0 0.0
  %995 = vmatpush1.msra.mxu0 0.0
  %996 = vmatprep.subr.mxu0 0.0
  %997 = vmatpush1.msra.mxu0 0.0
  %998 = vmatprep.subr.mxu0 0.0
  %999 = vmatpush1.msra.mxu0 0.0
  %1000 = vmatprep.subr.mxu0 0.0
  %1001 = vmatpush1.msra.mxu0 0.0
  %1002 = vmatprep.subr.mxu0 0.0
  %1003 = vmatpush1.msra.mxu0 0.0
  %1004 = vmatprep.subr.mxu0 0.0
  %1005 = vmatpush1.msra.mxu0 0.0
  %1006 = vmatprep.subr.mxu0 0.0
  %1007 = vmatpush1.msra.mxu0 0.0
  %1008 = vmatprep.subr.mxu0 0.0
  %1009 = vmatpush1.msra.mxu0 0.0
  %1010 = vmatprep.subr.mxu0 0.0
  %1011 = vmatpush1.msra.mxu0 0.0
  %1012 = vmatprep.subr.mxu0 0.0
  %1013 = vmatpush1.msra.mxu0 0.0
  %1014 = vmatprep.subr.mxu0 0.0
  %1015 = vmatpush1.msra.mxu0 0.0
  %1016 = vmatprep.subr.mxu0 0.0
  %1017 = vmatpush1.msra.mxu0 0.0
  %1018 = vmatprep.subr.mxu0 0.0
  %1019 = vmatpush1.msra.mxu0 0.0
  %1020 = vmatprep.subr.mxu0 0.0
  %1021 = vmatpush1.msra.mxu0 0.0
  %1022 = vmatprep.subr.mxu0 %v747
  %1023 = vmatpush1.msra.mxu0 %v746
  %1024 = vmatprep.subr.mxu0 %v743
  %1025 = vmatpush1.msra.mxu0 %v742
  %1026 = vmatprep.subr.mxu0 0.0
  %1027 = vmatpush2.msra.mxu0 0.0
  %1028 = vmatprep.subr.mxu0 0.0
  %1029 = vmatpush2.msra.mxu0 0.0
  %1030 = vmatprep.subr.mxu0 0.0
  %1031 = vmatpush2.msra.mxu0 0.0
  %1032 = vmatprep.subr.mxu0 0.0
  %1033 = vmatpush2.msra.mxu0 0.0
  %1034 = vmatprep.subr.mxu0 0.0
  %1035 = vmatpush2.msra.mxu0 0.0
  %1036 = vmatprep.subr.mxu0 0.0
  %1037 = vmatpush2.msra.mxu0 0.0
  %1038 = vmatprep.subr.mxu0 0.0
  %1039 = vmatpush2.msra.mxu0 0.0
  %1040 = vmatprep.subr.mxu0 0.0
  %1041 = vmatpush2.msra.mxu0 0.0
  %1042 = vmatprep.subr.mxu0 0.0
  %1043 = vmatpush2.msra.mxu0 0.0
  %1044 = vmatprep.subr.mxu0 0.0
  %1045 = vmatpush2.msra.mxu0 0.0
  %1046 = vmatprep.subr.mxu0 0.0
  %1047 = vmatpush2.msra.mxu0 0.0
  %1048 = vmatprep.subr.mxu0 0.0
  %1049 = vmatpush2.msra.mxu0 0.0
  %1050 = vmatprep.subr.mxu0 0.0
  %1051 = vmatpush2.msra.mxu0 0.0
  %1052 = vmatprep.subr.mxu0 0.0
  %1053 = vmatpush2.msra.mxu0 0.0
  %1054 = vmatprep.subr.mxu0 0.0
  %1055 = vmatpush2.msra.mxu0 0.0
  %1056 = vmatprep.subr.mxu0 0.0
  %1057 = vmatpush2.msra.mxu0 0.0
  %1058 = vmatprep.mubr.f32.mxu0 0.0
  %1059 = vmatmul.mubr.f32.gmra.mxu0 %v983
  %v1060 = vpop.f32.mrf.mxu0
  %v1061 = vadd.f32 %v871, %v1060
  %v1062 = vpop.f32.mrf.mxu0
  %v1063 = vadd.f32 %v873, %v1062
  %1064 = vmatprep.mubr.f32.mxu0 0.0
  %1065 = vmatmul.mubr.f32.gmra.mxu0 %v986
  %v1066 = vpop.f32.mrf.mxu0
  %v1067 = vadd.f32 %v877, %v1066
  %v1068 = vpop.f32.mrf.mxu0
  %v1069 = vadd.f32 %v879, %v1068
  %1070 = vmatprep.mubr.f32.mxu0 0.0
  %1071 = vmatmul.mubr.f32.gmra.mxu0 %v989
  %v1072 = vpop.f32.mrf.mxu0
  %v1073 = vadd.f32 %v883, %v1072
  %v1074 = vpop.f32.mrf.mxu0
  %v1075 = vadd.f32 %v885, %v1074
  %1076 = vmatprep.mubr.f32.mxu0 0.0
  %1077 = vmatmul.mubr.f32.gmra.mxu0 %v992
  %v1078 = vpop.f32.mrf.mxu0
  %v1079 = vadd.f32 %v889, %v1078
  %v1080 = vpop.f32.mrf.mxu0
  %v1081 = vadd.f32 %v891, %v1080
  %1082 = vdwg.mxu0
  %1083 = vmatprep.subr.mxu0 0.0
  %1084 = vmatpush1.msra.mxu0 0.0
  %1085 = vmatprep.subr.mxu0 0.0
  %1086 = vmatpush1.msra.mxu0 0.0
  %1087 = vmatprep.subr.mxu0 0.0
  %1088 = vmatpush1.msra.mxu0 0.0
  %1089 = vmatprep.subr.mxu0 0.0
  %1090 = vmatpush1.msra.mxu0 0.0
  %1091 = vmatprep.subr.mxu0 0.0
  %1092 = vmatpush1.msra.mxu0 0.0
  %1093 = vmatprep.subr.mxu0 0.0
  %1094 = vmatpush1.msra.mxu0 0.0
  %1095 = vmatprep.subr.mxu0 0.0
  %1096 = vmatpush1.msra.mxu0 0.0
  %1097 = vmatprep.subr.mxu0 0.0
  %1098 = vmatpush1.msra.mxu0 0.0
  %1099 = vmatprep.subr.mxu0 0.0
  %1100 = vmatpush1.msra.mxu0 0.0
  %1101 = vmatprep.subr.mxu0 0.0
  %1102 = vmatpush1.msra.mxu0 0.0
  %1103 = vmatprep.subr.mxu0 0.0
  %1104 = vmatpush1.msra.mxu0 0.0
  %1105 = vmatprep.subr.mxu0 0.0
  %1106 = vmatpush1.msra.mxu0 0.0
  %1107 = vmatprep.subr.mxu0 0.0
  %1108 = vmatpush1.msra.mxu0 0.0
  %1109 = vmatprep.subr.mxu0 0.0
  %1110 = vmatpush1.msra.mxu0 0.0
  %1111 = vmatprep.subr.mxu0 %v749
  %1112 = vmatpush1.msra.mxu0 %v748
  %1113 = vmatprep.subr.mxu0 %v745
  %1114 = vmatpush1.msra.mxu0 %v744
  %1115 = vmatprep.subr.mxu0 0.0
  %1116 = vmatpush2.msra.mxu0 0.0
  %1117 = vmatprep.subr.mxu0 0.0
  %1118 = vmatpush2.msra.mxu0 0.0
  %1119 = vmatprep.subr.mxu0 0.0
  %1120 = vmatpush2.msra.mxu0 0.0
  %1121 = vmatprep.subr.mxu0 0.0
  %1122 = vmatpush2.msra.mxu0 0.0
  %1123 = vmatprep.subr.mxu0 0.0
  %1124 = vmatpush2.msra.mxu0 0.0
  %1125 = vmatprep.subr.mxu0 0.0
  %1126 = vmatpush2.msra.mxu0 0.0
  %1127 = vmatprep.subr.mxu0 0.0
  %1128 = vmatpush2.msra.mxu0 0.0
  %1129 = vmatprep.subr.mxu0 0.0
  %1130 = vmatpush2.msra.mxu0 0.0
  %1131 = vmatprep.subr.mxu0 0.0
  %1132 = vmatpush2.msra.mxu0 0.0
  %1133 = vmatprep.subr.mxu0 0.0
  %1134 = vmatpush2.msra.mxu0 0.0
  %1135 = vmatprep.subr.mxu0 0.0
  %1136 = vmatpush2.msra.mxu0 0.0
  %1137 = vmatprep.subr.mxu0 0.0
  %1138 = vmatpush2.msra.mxu0 0.0
  %1139 = vmatprep.subr.mxu0 0.0
  %1140 = vmatpush2.msra.mxu0 0.0
  %1141 = vmatprep.subr.mxu0 0.0
  %1142 = vmatpush2.msra.mxu0 0.0
  %1143 = vmatprep.subr.mxu0 0.0
  %1144 = vmatpush2.msra.mxu0 0.0
  %1145 = vmatprep.subr.mxu0 0.0
  %1146 = vmatpush2.msra.mxu0 0.0
  %1147 = vmatprep.mubr.f32.mxu0 0.0
  %1148 = vmatmul.mubr.f32.gmra.mxu0 %v983
  %v1149 = vpop.f32.mrf.mxu0
  %v1150 = vadd.f32 %v960, %v1149
  %v1151 = vpop.f32.mrf.mxu0
  %v1152 = vadd.f32 %v962, %v1151
  %1153 = vmatprep.mubr.f32.mxu0 0.0
  %1154 = vmatmul.mubr.f32.gmra.mxu0 %v986
  %v1155 = vpop.f32.mrf.mxu0
  %v1156 = vadd.f32 %v966, %v1155
  %v1157 = vpop.f32.mrf.mxu0
  %v1158 = vadd.f32 %v968, %v1157
  %1159 = vmatprep.mubr.f32.mxu0 0.0
  %1160 = vmatmul.mubr.f32.gmra.mxu0 %v989
  %v1161 = vpop.f32.mrf.mxu0
  %v1162 = vadd.f32 %v972, %v1161
  %v1163 = vpop.f32.mrf.mxu0
  %v1164 = vadd.f32 %v974, %v1163
  %1165 = vmatprep.mubr.f32.mxu0 0.0
  %1166 = vmatmul.mubr.f32.gmra.mxu0 %v992
  %v1167 = vpop.f32.mrf.mxu0
  %v1168 = vadd.f32 %v978, %v1167
  %v1169 = vpop.f32.mrf.mxu0
  %v1170 = vadd.f32 %v980, %v1169
  %1171 = vdwg.mxu0
  %s1172 = scalar_lea.vmem %s3, 64
  %v1173 = vld [vmem:[%s1172] sm:$0xff]
  %v1174 = vld [vmem:[%s1172 + $0x8] sm:$0xff]
  %v1175 = vld [vmem:[%s1172 + $0x10] sm:$0xff]
  %v1176 = vld [vmem:[%s1172 + $0x18] sm:$0xff]
  %v1178 = vsel %vm791, %v1173, 0
  %v1181 = vsel %vm791, %v1174, 0
  %v1184 = vsel %vm791, %v1175, 0
  %v1187 = vsel %vm791, %v1176, 0
  %1189 = vmatprep.subr.mxu0 0.0
  %1190 = vmatpush1.msra.mxu0 0.0
  %1191 = vmatprep.subr.mxu0 0.0
  %1192 = vmatpush1.msra.mxu0 0.0
  %1193 = vmatprep.subr.mxu0 0.0
  %1194 = vmatpush1.msra.mxu0 0.0
  %1195 = vmatprep.subr.mxu0 0.0
  %1196 = vmatpush1.msra.mxu0 0.0
  %1197 = vmatprep.subr.mxu0 0.0
  %1198 = vmatpush1.msra.mxu0 0.0
  %1199 = vmatprep.subr.mxu0 0.0
  %1200 = vmatpush1.msra.mxu0 0.0
  %1201 = vmatprep.subr.mxu0 0.0
  %1202 = vmatpush1.msra.mxu0 0.0
  %1203 = vmatprep.subr.mxu0 0.0
  %1204 = vmatpush1.msra.mxu0 0.0
  %1205 = vmatprep.subr.mxu0 0.0
  %1206 = vmatpush1.msra.mxu0 0.0
  %1207 = vmatprep.subr.mxu0 0.0
  %1208 = vmatpush1.msra.mxu0 0.0
  %1209 = vmatprep.subr.mxu0 0.0
  %1210 = vmatpush1.msra.mxu0 0.0
  %1211 = vmatprep.subr.mxu0 0.0
  %1212 = vmatpush1.msra.mxu0 0.0
  %1213 = vmatprep.subr.mxu0 0.0
  %1214 = vmatpush1.msra.mxu0 0.0
  %1215 = vmatprep.subr.mxu0 0.0
  %1216 = vmatpush1.msra.mxu0 0.0
  %1217 = vmatprep.subr.mxu0 %v779
  %1218 = vmatpush1.msra.mxu0 %v778
  %1219 = vmatprep.subr.mxu0 %v775
  %1220 = vmatpush1.msra.mxu0 %v774
  %1221 = vmatprep.subr.mxu0 0.0
  %1222 = vmatpush2.msra.mxu0 0.0
  %1223 = vmatprep.subr.mxu0 0.0
  %1224 = vmatpush2.msra.mxu0 0.0
  %1225 = vmatprep.subr.mxu0 0.0
  %1226 = vmatpush2.msra.mxu0 0.0
  %1227 = vmatprep.subr.mxu0 0.0
  %1228 = vmatpush2.msra.mxu0 0.0
  %1229 = vmatprep.subr.mxu0 0.0
  %1230 = vmatpush2.msra.mxu0 0.0
  %1231 = vmatprep.subr.mxu0 0.0
  %1232 = vmatpush2.msra.mxu0 0.0
  %1233 = vmatprep.subr.mxu0 0.0
  %1234 = vmatpush2.msra.mxu0 0.0
  %1235 = vmatprep.subr.mxu0 0.0
  %1236 = vmatpush2.msra.mxu0 0.0
  %1237 = vmatprep.subr.mxu0 0.0
  %1238 = vmatpush2.msra.mxu0 0.0
  %1239 = vmatprep.subr.mxu0 0.0
  %1240 = vmatpush2.msra.mxu0 0.0
  %1241 = vmatprep.subr.mxu0 0.0
  %1242 = vmatpush2.msra.mxu0 0.0
  %1243 = vmatprep.subr.mxu0 0.0
  %1244 = vmatpush2.msra.mxu0 0.0
  %1245 = vmatprep.subr.mxu0 0.0
  %1246 = vmatpush2.msra.mxu0 0.0
  %1247 = vmatprep.subr.mxu0 0.0
  %1248 = vmatpush2.msra.mxu0 0.0
  %1249 = vmatprep.subr.mxu0 0.0
  %1250 = vmatpush2.msra.mxu0 0.0
  %1251 = vmatprep.subr.mxu0 0.0
  %1252 = vmatpush2.msra.mxu0 0.0
  %1253 = vmatprep.mubr.f32.mxu0 0.0
  %1254 = vmatmul.mubr.f32.gmra.mxu0 %v1178
  %v1255 = vpop.f32.mrf.mxu0
  %v1256 = vadd.f32 0.0, %v1255
  %v1257 = vpop.f32.mrf.mxu0
  %v1258 = vadd.f32 0.0, %v1257
  %1259 = vmatprep.mubr.f32.mxu0 0.0
  %1260 = vmatmul.mubr.f32.gmra.mxu0 %v1181
  %v1261 = vpop.f32.mrf.mxu0
  %v1262 = vadd.f32 0.0, %v1261
  %v1263 = vpop.f32.mrf.mxu0
  %v1264 = vadd.f32 0.0, %v1263
  %1265 = vmatprep.mubr.f32.mxu0 0.0
  %1266 = vmatmul.mubr.f32.gmra.mxu0 %v1184
  %v1267 = vpop.f32.mrf.mxu0
  %v1268 = vadd.f32 0.0, %v1267
  %v1269 = vpop.f32.mrf.mxu0
  %v1270 = vadd.f32 0.0, %v1269
  %1271 = vmatprep.mubr.f32.mxu0 0.0
  %1272 = vmatmul.mubr.f32.gmra.mxu0 %v1187
  %v1273 = vpop.f32.mrf.mxu0
  %v1274 = vadd.f32 0.0, %v1273
  %v1275 = vpop.f32.mrf.mxu0
  %v1276 = vadd.f32 0.0, %v1275
  %1277 = vdwg.mxu0
  %1278 = vmatprep.subr.mxu0 0.0
  %1279 = vmatpush1.msra.mxu0 0.0
  %1280 = vmatprep.subr.mxu0 0.0
  %1281 = vmatpush1.msra.mxu0 0.0
  %1282 = vmatprep.subr.mxu0 0.0
  %1283 = vmatpush1.msra.mxu0 0.0
  %1284 = vmatprep.subr.mxu0 0.0
  %1285 = vmatpush1.msra.mxu0 0.0
  %1286 = vmatprep.subr.mxu0 0.0
  %1287 = vmatpush1.msra.mxu0 0.0
  %1288 = vmatprep.subr.mxu0 0.0
  %1289 = vmatpush1.msra.mxu0 0.0
  %1290 = vmatprep.subr.mxu0 0.0
  %1291 = vmatpush1.msra.mxu0 0.0
  %1292 = vmatprep.subr.mxu0 0.0
  %1293 = vmatpush1.msra.mxu0 0.0
  %1294 = vmatprep.subr.mxu0 0.0
  %1295 = vmatpush1.msra.mxu0 0.0
  %1296 = vmatprep.subr.mxu0 0.0
  %1297 = vmatpush1.msra.mxu0 0.0
  %1298 = vmatprep.subr.mxu0 0.0
  %1299 = vmatpush1.msra.mxu0 0.0
  %1300 = vmatprep.subr.mxu0 0.0
  %1301 = vmatpush1.msra.mxu0 0.0
  %1302 = vmatprep.subr.mxu0 0.0
  %1303 = vmatpush1.msra.mxu0 0.0
  %1304 = vmatprep.subr.mxu0 0.0
  %1305 = vmatpush1.msra.mxu0 0.0
  %1306 = vmatprep.subr.mxu0 %v781
  %1307 = vmatpush1.msra.mxu0 %v780
  %1308 = vmatprep.subr.mxu0 %v777
  %1309 = vmatpush1.msra.mxu0 %v776
  %1310 = vmatprep.subr.mxu0 0.0
  %1311 = vmatpush2.msra.mxu0 0.0
  %1312 = vmatprep.subr.mxu0 0.0
  %1313 = vmatpush2.msra.mxu0 0.0
  %1314 = vmatprep.subr.mxu0 0.0
  %1315 = vmatpush2.msra.mxu0 0.0
  %1316 = vmatprep.subr.mxu0 0.0
  %1317 = vmatpush2.msra.mxu0 0.0
  %1318 = vmatprep.subr.mxu0 0.0
  %1319 = vmatpush2.msra.mxu0 0.0
  %1320 = vmatprep.subr.mxu0 0.0
  %1321 = vmatpush2.msra.mxu0 0.0
  %1322 = vmatprep.subr.mxu0 0.0
  %1323 = vmatpush2.msra.mxu0 0.0
  %1324 = vmatprep.subr.mxu0 0.0
  %1325 = vmatpush2.msra.mxu0 0.0
  %1326 = vmatprep.subr.mxu0 0.0
  %1327 = vmatpush2.msra.mxu0 0.0
  %1328 = vmatprep.subr.mxu0 0.0
  %1329 = vmatpush2.msra.mxu0 0.0
  %1330 = vmatprep.subr.mxu0 0.0
  %1331 = vmatpush2.msra.mxu0 0.0
  %1332 = vmatprep.subr.mxu0 0.0
  %1333 = vmatpush2.msra.mxu0 0.0
  %1334 = vmatprep.subr.mxu0 0.0
  %1335 = vmatpush2.msra.mxu0 0.0
  %1336 = vmatprep.subr.mxu0 0.0
  %1337 = vmatpush2.msra.mxu0 0.0
  %1338 = vmatprep.subr.mxu0 0.0
  %1339 = vmatpush2.msra.mxu0 0.0
  %1340 = vmatprep.subr.mxu0 0.0
  %1341 = vmatpush2.msra.mxu0 0.0
  %1342 = vmatprep.mubr.f32.mxu0 0.0
  %1343 = vmatmul.mubr.f32.gmra.mxu0 %v1178
  %v1344 = vpop.f32.mrf.mxu0
  %v1345 = vadd.f32 0.0, %v1344
  %v1346 = vpop.f32.mrf.mxu0
  %v1347 = vadd.f32 0.0, %v1346
  %1348 = vmatprep.mubr.f32.mxu0 0.0
  %1349 = vmatmul.mubr.f32.gmra.mxu0 %v1181
  %v1350 = vpop.f32.mrf.mxu0
  %v1351 = vadd.f32 0.0, %v1350
  %v1352 = vpop.f32.mrf.mxu0
  %v1353 = vadd.f32 0.0, %v1352
  %1354 = vmatprep.mubr.f32.mxu0 0.0
  %1355 = vmatmul.mubr.f32.gmra.mxu0 %v1184
  %v1356 = vpop.f32.mrf.mxu0
  %v1357 = vadd.f32 0.0, %v1356
  %v1358 = vpop.f32.mrf.mxu0
  %v1359 = vadd.f32 0.0, %v1358
  %1360 = vmatprep.mubr.f32.mxu0 0.0
  %1361 = vmatmul.mubr.f32.gmra.mxu0 %v1187
  %v1362 = vpop.f32.mrf.mxu0
  %v1363 = vadd.f32 0.0, %v1362
  %v1364 = vpop.f32.mrf.mxu0
  %v1365 = vadd.f32 0.0, %v1364
  %1366 = vdwg.mxu0
  %v1367 = vadd.f32 %v1061, %v1256
  %v1368 = vadd.f32 %v1063, %v1258
  %v1369 = vadd.f32 %v1150, %v1345
  %v1370 = vadd.f32 %v1152, %v1347
  %v1371 = vadd.f32 %v1067, %v1262
  %v1372 = vadd.f32 %v1069, %v1264
  %v1373 = vadd.f32 %v1156, %v1351
  %v1374 = vadd.f32 %v1158, %v1353
  %v1375 = vadd.f32 %v1073, %v1268
  %v1376 = vadd.f32 %v1075, %v1270
  %v1377 = vadd.f32 %v1162, %v1357
  %v1378 = vadd.f32 %v1164, %v1359
  %v1379 = vadd.f32 %v1079, %v1274
  %v1380 = vadd.f32 %v1081, %v1276
  %v1381 = vadd.f32 %v1168, %v1363
  %v1382 = vadd.f32 %v1170, %v1365
  %v1383 = vld [vmem:[%s4] sm:$0xff]
  %v1384 = vld [vmem:[%s4 + $0x8] sm:$0xff]
  %v1385 = vld [vmem:[%s4 + $0x10] sm:$0xff]
  %v1386 = vld [vmem:[%s4 + $0x18] sm:$0xff]
  %1388 = vset.pattern.permute.xlu0 0
  %1389 = vperm.xlu0 %1388, %v1383
  %v1390 = vpop.permute.xlu0 %1389
  %1393 = vset.pattern.permute.xlu0 0
  %1394 = vperm.xlu0 %1393, %v1384
  %v1395 = vpop.permute.xlu0 %1394
  %1398 = vset.pattern.permute.xlu0 0
  %1399 = vperm.xlu0 %1398, %v1385
  %v1400 = vpop.permute.xlu0 %1399
  %1403 = vset.pattern.permute.xlu0 0
  %1404 = vperm.xlu0 %1403, %v1386
  %v1405 = vpop.permute.xlu0 %1404
  %v1407 = vadd.f32 %v1367, %v1390
  %v1408 = vadd.f32 %v1368, %v1390
  %v1409 = vadd.f32 %v1369, %v1390
  %v1410 = vadd.f32 %v1370, %v1390
  %v1411 = vadd.f32 %v1371, %v1395
  %v1412 = vadd.f32 %v1372, %v1395
  %v1413 = vadd.f32 %v1373, %v1395
  %v1414 = vadd.f32 %v1374, %v1395
  %v1415 = vadd.f32 %v1375, %v1400
  %v1416 = vadd.f32 %v1376, %v1400
  %v1417 = vadd.f32 %v1377, %v1400
  %v1418 = vadd.f32 %v1378, %v1400
  %v1419 = vadd.f32 %v1379, %v1405
  %v1420 = vadd.f32 %v1380, %v1405
  %v1421 = vadd.f32 %v1381, %v1405
  %v1422 = vadd.f32 %v1382, %v1405
  %v1423 = vmax.f32 %v1407, 0.0
  %v1424 = vmax.f32 %v1408, 0.0
  %v1425 = vmax.f32 %v1409, 0.0
  %v1426 = vmax.f32 %v1410, 0.0
  %v1427 = vmax.f32 %v1411, 0.0
  %v1428 = vmax.f32 %v1412, 0.0
  %v1429 = vmax.f32 %v1413, 0.0
  %v1430 = vmax.f32 %v1414, 0.0
  %v1431 = vmax.f32 %v1415, 0.0
  %v1432 = vmax.f32 %v1416, 0.0
  %v1433 = vmax.f32 %v1417, 0.0
  %v1434 = vmax.f32 %v1418, 0.0
  %v1435 = vmax.f32 %v1419, 0.0
  %v1436 = vmax.f32 %v1420, 0.0
  %v1437 = vmax.f32 %v1421, 0.0
  %v1438 = vmax.f32 %v1422, 0.0
  %1439 = vrot.lane.b32.xlu0 %v1423, 1
  %v1440 = vpop.permute.xlu0 %1439
  %1441 = vrot.lane.b32.xlu0 %v1427, 1
  %v1442 = vpop.permute.xlu0 %1441
  %1443 = vrot.lane.b32.xlu0 %v1431, 1
  %v1444 = vpop.permute.xlu0 %1443
  %1445 = vrot.lane.b32.xlu0 %v1435, 1
  %v1446 = vpop.permute.xlu0 %1445
  %1447 = vrot.lane.b32.xlu0 %v1424, 1
  %v1448 = vpop.permute.xlu0 %1447
  %1449 = vrot.lane.b32.xlu0 %v1428, 1
  %v1450 = vpop.permute.xlu0 %1449
  %1451 = vrot.lane.b32.xlu0 %v1432, 1
  %v1452 = vpop.permute.xlu0 %1451
  %1453 = vrot.lane.b32.xlu0 %v1436, 1
  %v1454 = vpop.permute.xlu0 %1453
  %1455 = vrot.lane.b32.xlu0 %v1425, 1
  %v1456 = vpop.permute.xlu0 %1455
  %1457 = vrot.lane.b32.xlu0 %v1429, 1
  %v1458 = vpop.permute.xlu0 %1457
  %1459 = vrot.lane.b32.xlu0 %v1433, 1
  %v1460 = vpop.permute.xlu0 %1459
  %1461 = vrot.lane.b32.xlu0 %v1437, 1
  %v1462 = vpop.permute.xlu0 %1461
  %1463 = vrot.lane.b32.xlu0 %v1426, 1
  %v1464 = vpop.permute.xlu0 %1463
  %1465 = vrot.lane.b32.xlu0 %v1430, 1
  %v1466 = vpop.permute.xlu0 %1465
  %1467 = vrot.lane.b32.xlu0 %v1434, 1
  %v1468 = vpop.permute.xlu0 %1467
  %1469 = vrot.lane.b32.xlu0 %v1438, 1
  %v1470 = vpop.permute.xlu0 %1469
  %v1471 = vsel %vm134, %v1456, %v1464
  %v1472 = vsel %vm134, %v1458, %v1466
  %v1473 = vsel %vm134, %v1460, %v1468
  %v1474 = vsel %vm134, %v1462, %v1470
  %v1475 = vsel %vm134, %v1448, %v1456
  %v1476 = vsel %vm134, %v1450, %v1458
  %v1477 = vsel %vm134, %v1452, %v1460
  %v1478 = vsel %vm134, %v1454, %v1462
  %v1479 = vsel %vm134, %v1440, %v1448
  %v1480 = vsel %vm134, %v1442, %v1450
  %v1481 = vsel %vm134, %v1444, %v1452
  %v1482 = vsel %vm134, %v1446, %v1454
  %v1483 = vsel %vm134, %v1464, %v1440
  %v1484 = vsel %vm134, %v1466, %v1442
  %v1485 = vsel %vm134, %v1468, %v1444
  %v1486 = vsel %vm134, %v1470, %v1446
  %v1487 = vmul.f32 %v1483, %v102
  %v1488 = vmul.f32 %v1479, %v103
  %v1489 = vmul.f32 %v1475, %v104
  %v1490 = vmul.f32 %v1471, %v105
  %v1491 = vmul.f32 %v1484, %v102
  %v1492 = vmul.f32 %v1480, %v103
  %v1493 = vmul.f32 %v1476, %v104
  %v1494 = vmul.f32 %v1472, %v105
  %v1495 = vmul.f32 %v1485, %v102
  %v1496 = vmul.f32 %v1481, %v103
  %v1497 = vmul.f32 %v1477, %v104
  %v1498 = vmul.f32 %v1473, %v105
  %v1499 = vmul.f32 %v1486, %v102
  %v1500 = vmul.f32 %v1482, %v103
  %v1501 = vmul.f32 %v1478, %v104
  %v1502 = vmul.f32 %v1474, %v105
  %1503 = vrot.lane.b32.xlu0 %v1423, 127
  %v1504 = vpop.permute.xlu0 %1503
  %1505 = vrot.lane.b32.xlu0 %v1427, 127
  %v1506 = vpop.permute.xlu0 %1505
  %1507 = vrot.lane.b32.xlu0 %v1431, 127
  %v1508 = vpop.permute.xlu0 %1507
  %1509 = vrot.lane.b32.xlu0 %v1435, 127
  %v1510 = vpop.permute.xlu0 %1509
  %1511 = vrot.lane.b32.xlu0 %v1424, 127
  %v1512 = vpop.permute.xlu0 %1511
  %1513 = vrot.lane.b32.xlu0 %v1428, 127
  %v1514 = vpop.permute.xlu0 %1513
  %1515 = vrot.lane.b32.xlu0 %v1432, 127
  %v1516 = vpop.permute.xlu0 %1515
  %1517 = vrot.lane.b32.xlu0 %v1436, 127
  %v1518 = vpop.permute.xlu0 %1517
  %1519 = vrot.lane.b32.xlu0 %v1425, 127
  %v1520 = vpop.permute.xlu0 %1519
  %1521 = vrot.lane.b32.xlu0 %v1429, 127
  %v1522 = vpop.permute.xlu0 %1521
  %1523 = vrot.lane.b32.xlu0 %v1433, 127
  %v1524 = vpop.permute.xlu0 %1523
  %1525 = vrot.lane.b32.xlu0 %v1437, 127
  %v1526 = vpop.permute.xlu0 %1525
  %1527 = vrot.lane.b32.xlu0 %v1426, 127
  %v1528 = vpop.permute.xlu0 %1527
  %1529 = vrot.lane.b32.xlu0 %v1430, 127
  %v1530 = vpop.permute.xlu0 %1529
  %1531 = vrot.lane.b32.xlu0 %v1434, 127
  %v1532 = vpop.permute.xlu0 %1531
  %1533 = vrot.lane.b32.xlu0 %v1438, 127
  %v1534 = vpop.permute.xlu0 %1533
  %v1535 = vsel %vm151, %v1520, %v1528
  %v1536 = vsel %vm151, %v1522, %v1530
  %v1537 = vsel %vm151, %v1524, %v1532
  %v1538 = vsel %vm151, %v1526, %v1534
  %v1539 = vsel %vm151, %v1512, %v1520
  %v1540 = vsel %vm151, %v1514, %v1522
  %v1541 = vsel %vm151, %v1516, %v1524
  %v1542 = vsel %vm151, %v1518, %v1526
  %v1543 = vsel %vm151, %v1504, %v1512
  %v1544 = vsel %vm151, %v1506, %v1514
  %v1545 = vsel %vm151, %v1508, %v1516
  %v1546 = vsel %vm151, %v1510, %v1518
  %v1547 = vsel %vm151, %v1528, %v1504
  %v1548 = vsel %vm151, %v1530, %v1506
  %v1549 = vsel %vm151, %v1532, %v1508
  %v1550 = vsel %vm151, %v1534, %v1510
  %v1551 = vmul.f32 %v1543, %v114
  %v1552 = vmul.f32 %v1539, %v115
  %v1553 = vmul.f32 %v1535, %v116
  %v1554 = vmul.f32 %v1547, %v117
  %v1555 = vmul.f32 %v1544, %v114
  %v1556 = vmul.f32 %v1540, %v115
  %v1557 = vmul.f32 %v1536, %v116
  %v1558 = vmul.f32 %v1548, %v117
  %v1559 = vmul.f32 %v1545, %v114
  %v1560 = vmul.f32 %v1541, %v115
  %v1561 = vmul.f32 %v1537, %v116
  %v1562 = vmul.f32 %v1549, %v117
  %v1563 = vmul.f32 %v1546, %v114
  %v1564 = vmul.f32 %v1542, %v115
  %v1565 = vmul.f32 %v1538, %v116
  %v1566 = vmul.f32 %v1550, %v117
  %v1567 = vld [vmem:[%s5] sm:$0xff]
  %v1568 = vld [vmem:[%s5 + $0x8] sm:$0xff]
  %v1569 = vld [vmem:[%s5 + $0x10] sm:$0xff]
  %v1570 = vld [vmem:[%s5 + $0x18] sm:$0xff]
  %v1571 = vld [vmem:[%s5 + $0x20] sm:$0xff]
  %v1572 = vld [vmem:[%s5 + $0x28] sm:$0xff]
  %v1573 = vld [vmem:[%s5 + $0x30] sm:$0xff]
  %v1574 = vld [vmem:[%s5 + $0x38] sm:$0xff]
  %s1575 = scalar_lea.vmem %s5, 64
  %v1576 = vld [vmem:[%s1575] sm:$0xff]
  %v1577 = vld [vmem:[%s1575 + $0x8] sm:$0xff]
  %v1578 = vld [vmem:[%s1575 + $0x10] sm:$0xff]
  %v1579 = vld [vmem:[%s1575 + $0x18] sm:$0xff]
  %v1580 = vld [vmem:[%s1575 + $0x20] sm:$0xff]
  %v1581 = vld [vmem:[%s1575 + $0x28] sm:$0xff]
  %v1582 = vld [vmem:[%s1575 + $0x30] sm:$0xff]
  %v1583 = vld [vmem:[%s1575 + $0x38] sm:$0xff]
  %vm1584 = vcmask 261120
  %v1586 = vsel %vm1584, %v1576, 0
  %v1589 = vsel %vm1584, %v1577, 0
  %v1592 = vsel %vm1584, %v1578, 0
  %v1595 = vsel %vm1584, %v1579, 0
  %v1598 = vsel %vm1584, %v1580, 0
  %v1601 = vsel %vm1584, %v1581, 0
  %v1604 = vsel %vm1584, %v1582, 0
  %v1607 = vsel %vm1584, %v1583, 0
  %1609 = vmatprep.subr.mxu0 0.0
  %1610 = vmatpush1.msra.mxu0 0.0
  %1611 = vmatprep.subr.mxu0 0.0
  %1612 = vmatpush1.msra.mxu0 0.0
  %1613 = vmatprep.subr.mxu0 0.0
  %1614 = vmatpush1.msra.mxu0 0.0
  %1615 = vmatprep.subr.mxu0 0.0
  %1616 = vmatpush1.msra.mxu0 0.0
  %1617 = vmatprep.subr.mxu0 0.0
  %1618 = vmatpush1.msra.mxu0 0.0
  %1619 = vmatprep.subr.mxu0 0.0
  %1620 = vmatpush1.msra.mxu0 0.0
  %1621 = vmatprep.subr.mxu0 0.0
  %1622 = vmatpush1.msra.mxu0 0.0
  %1623 = vmatprep.subr.mxu0 0.0
  %1624 = vmatpush1.msra.mxu0 0.0
  %1625 = vmatprep.subr.mxu0 0.0
  %1626 = vmatpush1.msra.mxu0 0.0
  %1627 = vmatprep.subr.mxu0 0.0
  %1628 = vmatpush1.msra.mxu0 0.0
  %1629 = vmatprep.subr.mxu0 0.0
  %1630 = vmatpush1.msra.mxu0 0.0
  %1631 = vmatprep.subr.mxu0 0.0
  %1632 = vmatpush1.msra.mxu0 0.0
  %1633 = vmatprep.subr.mxu0 %v1436
  %1634 = vmatpush1.msra.mxu0 %v1435
  %1635 = vmatprep.subr.mxu0 %v1432
  %1636 = vmatpush1.msra.mxu0 %v1431
  %1637 = vmatprep.subr.mxu0 %v1428
  %1638 = vmatpush1.msra.mxu0 %v1427
  %1639 = vmatprep.subr.mxu0 %v1424
  %1640 = vmatpush1.msra.mxu0 %v1423
  %1641 = vmatprep.subr.mxu0 0.0
  %1642 = vmatpush2.msra.mxu0 0.0
  %1643 = vmatprep.subr.mxu0 0.0
  %1644 = vmatpush2.msra.mxu0 0.0
  %1645 = vmatprep.subr.mxu0 0.0
  %1646 = vmatpush2.msra.mxu0 0.0
  %1647 = vmatprep.subr.mxu0 0.0
  %1648 = vmatpush2.msra.mxu0 0.0
  %1649 = vmatprep.subr.mxu0 0.0
  %1650 = vmatpush2.msra.mxu0 0.0
  %1651 = vmatprep.subr.mxu0 0.0
  %1652 = vmatpush2.msra.mxu0 0.0
  %1653 = vmatprep.subr.mxu0 0.0
  %1654 = vmatpush2.msra.mxu0 0.0
  %1655 = vmatprep.subr.mxu0 0.0
  %1656 = vmatpush2.msra.mxu0 0.0
  %1657 = vmatprep.subr.mxu0 0.0
  %1658 = vmatpush2.msra.mxu0 0.0
  %1659 = vmatprep.subr.mxu0 0.0
  %1660 = vmatpush2.msra.mxu0 0.0
  %1661 = vmatprep.subr.mxu0 0.0
  %1662 = vmatpush2.msra.mxu0 0.0
  %1663 = vmatprep.subr.mxu0 0.0
  %1664 = vmatpush2.msra.mxu0 0.0
  %1665 = vmatprep.subr.mxu0 0.0
  %1666 = vmatpush2.msra.mxu0 0.0
  %1667 = vmatprep.subr.mxu0 0.0
  %1668 = vmatpush2.msra.mxu0 0.0
  %1669 = vmatprep.subr.mxu0 0.0
  %1670 = vmatpush2.msra.mxu0 0.0
  %1671 = vmatprep.subr.mxu0 0.0
  %1672 = vmatpush2.msra.mxu0 0.0
  %1673 = vmatprep.mubr.f32.mxu0 0.0
  %1674 = vmatmul.mubr.f32.gmra.mxu0 %v1586
  %v1675 = vpop.f32.mrf.mxu0
  %v1676 = vadd.f32 0.0, %v1675
  %v1677 = vpop.f32.mrf.mxu0
  %v1678 = vadd.f32 0.0, %v1677
  %1679 = vmatprep.mubr.f32.mxu0 0.0
  %1680 = vmatmul.mubr.f32.gmra.mxu0 %v1589
  %v1681 = vpop.f32.mrf.mxu0
  %v1682 = vadd.f32 0.0, %v1681
  %v1683 = vpop.f32.mrf.mxu0
  %v1684 = vadd.f32 0.0, %v1683
  %1685 = vmatprep.mubr.f32.mxu0 0.0
  %1686 = vmatmul.mubr.f32.gmra.mxu0 %v1592
  %v1687 = vpop.f32.mrf.mxu0
  %v1688 = vadd.f32 0.0, %v1687
  %v1689 = vpop.f32.mrf.mxu0
  %v1690 = vadd.f32 0.0, %v1689
  %1691 = vmatprep.mubr.f32.mxu0 0.0
  %1692 = vmatmul.mubr.f32.gmra.mxu0 %v1595
  %v1693 = vpop.f32.mrf.mxu0
  %v1694 = vadd.f32 0.0, %v1693
  %v1695 = vpop.f32.mrf.mxu0
  %v1696 = vadd.f32 0.0, %v1695
  %1697 = vmatprep.mubr.f32.mxu0 0.0
  %1698 = vmatmul.mubr.f32.gmra.mxu0 %v1598
  %v1699 = vpop.f32.mrf.mxu0
  %v1700 = vadd.f32 0.0, %v1699
  %v1701 = vpop.f32.mrf.mxu0
  %v1702 = vadd.f32 0.0, %v1701
  %1703 = vmatprep.mubr.f32.mxu0 0.0
  %1704 = vmatmul.mubr.f32.gmra.mxu0 %v1601
  %v1705 = vpop.f32.mrf.mxu0
  %v1706 = vadd.f32 0.0, %v1705
  %v1707 = vpop.f32.mrf.mxu0
  %v1708 = vadd.f32 0.0, %v1707
  %1709 = vmatprep.mubr.f32.mxu0 0.0
  %1710 = vmatmul.mubr.f32.gmra.mxu0 %v1604
  %v1711 = vpop.f32.mrf.mxu0
  %v1712 = vadd.f32 0.0, %v1711
  %v1713 = vpop.f32.mrf.mxu0
  %v1714 = vadd.f32 0.0, %v1713
  %1715 = vmatprep.mubr.f32.mxu0 0.0
  %1716 = vmatmul.mubr.f32.gmra.mxu0 %v1607
  %v1717 = vpop.f32.mrf.mxu0
  %v1718 = vadd.f32 0.0, %v1717
  %v1719 = vpop.f32.mrf.mxu0
  %v1720 = vadd.f32 0.0, %v1719
  %1721 = vdwg.mxu0
  %1722 = vmatprep.subr.mxu0 0.0
  %1723 = vmatpush1.msra.mxu0 0.0
  %1724 = vmatprep.subr.mxu0 0.0
  %1725 = vmatpush1.msra.mxu0 0.0
  %1726 = vmatprep.subr.mxu0 0.0
  %1727 = vmatpush1.msra.mxu0 0.0
  %1728 = vmatprep.subr.mxu0 0.0
  %1729 = vmatpush1.msra.mxu0 0.0
  %1730 = vmatprep.subr.mxu0 0.0
  %1731 = vmatpush1.msra.mxu0 0.0
  %1732 = vmatprep.subr.mxu0 0.0
  %1733 = vmatpush1.msra.mxu0 0.0
  %1734 = vmatprep.subr.mxu0 0.0
  %1735 = vmatpush1.msra.mxu0 0.0
  %1736 = vmatprep.subr.mxu0 0.0
  %1737 = vmatpush1.msra.mxu0 0.0
  %1738 = vmatprep.subr.mxu0 0.0
  %1739 = vmatpush1.msra.mxu0 0.0
  %1740 = vmatprep.subr.mxu0 0.0
  %1741 = vmatpush1.msra.mxu0 0.0
  %1742 = vmatprep.subr.mxu0 0.0
  %1743 = vmatpush1.msra.mxu0 0.0
  %1744 = vmatprep.subr.mxu0 0.0
  %1745 = vmatpush1.msra.mxu0 0.0
  %1746 = vmatprep.subr.mxu0 %v1438
  %1747 = vmatpush1.msra.mxu0 %v1437
  %1748 = vmatprep.subr.mxu0 %v1434
  %1749 = vmatpush1.msra.mxu0 %v1433
  %1750 = vmatprep.subr.mxu0 %v1430
  %1751 = vmatpush1.msra.mxu0 %v1429
  %1752 = vmatprep.subr.mxu0 %v1426
  %1753 = vmatpush1.msra.mxu0 %v1425
  %1754 = vmatprep.subr.mxu0 0.0
  %1755 = vmatpush2.msra.mxu0 0.0
  %1756 = vmatprep.subr.mxu0 0.0
  %1757 = vmatpush2.msra.mxu0 0.0
  %1758 = vmatprep.subr.mxu0 0.0
  %1759 = vmatpush2.msra.mxu0 0.0
  %1760 = vmatprep.subr.mxu0 0.0
  %1761 = vmatpush2.msra.mxu0 0.0
  %1762 = vmatprep.subr.mxu0 0.0
  %1763 = vmatpush2.msra.mxu0 0.0
  %1764 = vmatprep.subr.mxu0 0.0
  %1765 = vmatpush2.msra.mxu0 0.0
  %1766 = vmatprep.subr.mxu0 0.0
  %1767 = vmatpush2.msra.mxu0 0.0
  %1768 = vmatprep.subr.mxu0 0.0
  %1769 = vmatpush2.msra.mxu0 0.0
  %1770 = vmatprep.subr.mxu0 0.0
  %1771 = vmatpush2.msra.mxu0 0.0
  %1772 = vmatprep.subr.mxu0 0.0
  %1773 = vmatpush2.msra.mxu0 0.0
  %1774 = vmatprep.subr.mxu0 0.0
  %1775 = vmatpush2.msra.mxu0 0.0
  %1776 = vmatprep.subr.mxu0 0.0
  %1777 = vmatpush2.msra.mxu0 0.0
  %1778 = vmatprep.subr.mxu0 0.0
  %1779 = vmatpush2.msra.mxu0 0.0
  %1780 = vmatprep.subr.mxu0 0.0
  %1781 = vmatpush2.msra.mxu0 0.0
  %1782 = vmatprep.subr.mxu0 0.0
  %1783 = vmatpush2.msra.mxu0 0.0
  %1784 = vmatprep.subr.mxu0 0.0
  %1785 = vmatpush2.msra.mxu0 0.0
  %1786 = vmatprep.mubr.f32.mxu0 0.0
  %1787 = vmatmul.mubr.f32.gmra.mxu0 %v1586
  %v1788 = vpop.f32.mrf.mxu0
  %v1789 = vadd.f32 0.0, %v1788
  %v1790 = vpop.f32.mrf.mxu0
  %v1791 = vadd.f32 0.0, %v1790
  %1792 = vmatprep.mubr.f32.mxu0 0.0
  %1793 = vmatmul.mubr.f32.gmra.mxu0 %v1589
  %v1794 = vpop.f32.mrf.mxu0
  %v1795 = vadd.f32 0.0, %v1794
  %v1796 = vpop.f32.mrf.mxu0
  %v1797 = vadd.f32 0.0, %v1796
  %1798 = vmatprep.mubr.f32.mxu0 0.0
  %1799 = vmatmul.mubr.f32.gmra.mxu0 %v1592
  %v1800 = vpop.f32.mrf.mxu0
  %v1801 = vadd.f32 0.0, %v1800
  %v1802 = vpop.f32.mrf.mxu0
  %v1803 = vadd.f32 0.0, %v1802
  %1804 = vmatprep.mubr.f32.mxu0 0.0
  %1805 = vmatmul.mubr.f32.gmra.mxu0 %v1595
  %v1806 = vpop.f32.mrf.mxu0
  %v1807 = vadd.f32 0.0, %v1806
  %v1808 = vpop.f32.mrf.mxu0
  %v1809 = vadd.f32 0.0, %v1808
  %1810 = vmatprep.mubr.f32.mxu0 0.0
  %1811 = vmatmul.mubr.f32.gmra.mxu0 %v1598
  %v1812 = vpop.f32.mrf.mxu0
  %v1813 = vadd.f32 0.0, %v1812
  %v1814 = vpop.f32.mrf.mxu0
  %v1815 = vadd.f32 0.0, %v1814
  %1816 = vmatprep.mubr.f32.mxu0 0.0
  %1817 = vmatmul.mubr.f32.gmra.mxu0 %v1601
  %v1818 = vpop.f32.mrf.mxu0
  %v1819 = vadd.f32 0.0, %v1818
  %v1820 = vpop.f32.mrf.mxu0
  %v1821 = vadd.f32 0.0, %v1820
  %1822 = vmatprep.mubr.f32.mxu0 0.0
  %1823 = vmatmul.mubr.f32.gmra.mxu0 %v1604
  %v1824 = vpop.f32.mrf.mxu0
  %v1825 = vadd.f32 0.0, %v1824
  %v1826 = vpop.f32.mrf.mxu0
  %v1827 = vadd.f32 0.0, %v1826
  %1828 = vmatprep.mubr.f32.mxu0 0.0
  %1829 = vmatmul.mubr.f32.gmra.mxu0 %v1607
  %v1830 = vpop.f32.mrf.mxu0
  %v1831 = vadd.f32 0.0, %v1830
  %v1832 = vpop.f32.mrf.mxu0
  %v1833 = vadd.f32 0.0, %v1832
  %1834 = vdwg.mxu0
  %v1836 = vsel %vm1584, %v1567, 0
  %v1839 = vsel %vm1584, %v1568, 0
  %v1842 = vsel %vm1584, %v1569, 0
  %v1845 = vsel %vm1584, %v1570, 0
  %v1848 = vsel %vm1584, %v1571, 0
  %v1851 = vsel %vm1584, %v1572, 0
  %v1854 = vsel %vm1584, %v1573, 0
  %v1857 = vsel %vm1584, %v1574, 0
  %1859 = vmatprep.subr.mxu0 0.0
  %1860 = vmatpush1.msra.mxu0 0.0
  %1861 = vmatprep.subr.mxu0 0.0
  %1862 = vmatpush1.msra.mxu0 0.0
  %1863 = vmatprep.subr.mxu0 0.0
  %1864 = vmatpush1.msra.mxu0 0.0
  %1865 = vmatprep.subr.mxu0 0.0
  %1866 = vmatpush1.msra.mxu0 0.0
  %1867 = vmatprep.subr.mxu0 0.0
  %1868 = vmatpush1.msra.mxu0 0.0
  %1869 = vmatprep.subr.mxu0 0.0
  %1870 = vmatpush1.msra.mxu0 0.0
  %1871 = vmatprep.subr.mxu0 0.0
  %1872 = vmatpush1.msra.mxu0 0.0
  %1873 = vmatprep.subr.mxu0 0.0
  %1874 = vmatpush1.msra.mxu0 0.0
  %1875 = vmatprep.subr.mxu0 0.0
  %1876 = vmatpush1.msra.mxu0 0.0
  %1877 = vmatprep.subr.mxu0 0.0
  %1878 = vmatpush1.msra.mxu0 0.0
  %1879 = vmatprep.subr.mxu0 0.0
  %1880 = vmatpush1.msra.mxu0 0.0
  %1881 = vmatprep.subr.mxu0 0.0
  %1882 = vmatpush1.msra.mxu0 0.0
  %1883 = vmatprep.subr.mxu0 %v1500
  %1884 = vmatpush1.msra.mxu0 %v1499
  %1885 = vmatprep.subr.mxu0 %v1496
  %1886 = vmatpush1.msra.mxu0 %v1495
  %1887 = vmatprep.subr.mxu0 %v1492
  %1888 = vmatpush1.msra.mxu0 %v1491
  %1889 = vmatprep.subr.mxu0 %v1488
  %1890 = vmatpush1.msra.mxu0 %v1487
  %1891 = vmatprep.subr.mxu0 0.0
  %1892 = vmatpush2.msra.mxu0 0.0
  %1893 = vmatprep.subr.mxu0 0.0
  %1894 = vmatpush2.msra.mxu0 0.0
  %1895 = vmatprep.subr.mxu0 0.0
  %1896 = vmatpush2.msra.mxu0 0.0
  %1897 = vmatprep.subr.mxu0 0.0
  %1898 = vmatpush2.msra.mxu0 0.0
  %1899 = vmatprep.subr.mxu0 0.0
  %1900 = vmatpush2.msra.mxu0 0.0
  %1901 = vmatprep.subr.mxu0 0.0
  %1902 = vmatpush2.msra.mxu0 0.0
  %1903 = vmatprep.subr.mxu0 0.0
  %1904 = vmatpush2.msra.mxu0 0.0
  %1905 = vmatprep.subr.mxu0 0.0
  %1906 = vmatpush2.msra.mxu0 0.0
  %1907 = vmatprep.subr.mxu0 0.0
  %1908 = vmatpush2.msra.mxu0 0.0
  %1909 = vmatprep.subr.mxu0 0.0
  %1910 = vmatpush2.msra.mxu0 0.0
  %1911 = vmatprep.subr.mxu0 0.0
  %1912 = vmatpush2.msra.mxu0 0.0
  %1913 = vmatprep.subr.mxu0 0.0
  %1914 = vmatpush2.msra.mxu0 0.0
  %1915 = vmatprep.subr.mxu0 0.0
  %1916 = vmatpush2.msra.mxu0 0.0
  %1917 = vmatprep.subr.mxu0 0.0
  %1918 = vmatpush2.msra.mxu0 0.0
  %1919 = vmatprep.subr.mxu0 0.0
  %1920 = vmatpush2.msra.mxu0 0.0
  %1921 = vmatprep.subr.mxu0 0.0
  %1922 = vmatpush2.msra.mxu0 0.0
  %1923 = vmatprep.mubr.f32.mxu0 0.0
  %1924 = vmatmul.mubr.f32.gmra.mxu0 %v1836
  %v1925 = vpop.f32.mrf.mxu0
  %v1926 = vadd.f32 %v1676, %v1925
  %v1927 = vpop.f32.mrf.mxu0
  %v1928 = vadd.f32 %v1678, %v1927
  %1929 = vmatprep.mubr.f32.mxu0 0.0
  %1930 = vmatmul.mubr.f32.gmra.mxu0 %v1839
  %v1931 = vpop.f32.mrf.mxu0
  %v1932 = vadd.f32 %v1682, %v1931
  %v1933 = vpop.f32.mrf.mxu0
  %v1934 = vadd.f32 %v1684, %v1933
  %1935 = vmatprep.mubr.f32.mxu0 0.0
  %1936 = vmatmul.mubr.f32.gmra.mxu0 %v1842
  %v1937 = vpop.f32.mrf.mxu0
  %v1938 = vadd.f32 %v1688, %v1937
  %v1939 = vpop.f32.mrf.mxu0
  %v1940 = vadd.f32 %v1690, %v1939
  %1941 = vmatprep.mubr.f32.mxu0 0.0
  %1942 = vmatmul.mubr.f32.gmra.mxu0 %v1845
  %v1943 = vpop.f32.mrf.mxu0
  %v1944 = vadd.f32 %v1694, %v1943
  %v1945 = vpop.f32.mrf.mxu0
  %v1946 = vadd.f32 %v1696, %v1945
  %1947 = vmatprep.mubr.f32.mxu0 0.0
  %1948 = vmatmul.mubr.f32.gmra.mxu0 %v1848
  %v1949 = vpop.f32.mrf.mxu0
  %v1950 = vadd.f32 %v1700, %v1949
  %v1951 = vpop.f32.mrf.mxu0
  %v1952 = vadd.f32 %v1702, %v1951
  %1953 = vmatprep.mubr.f32.mxu0 0.0
  %1954 = vmatmul.mubr.f32.gmra.mxu0 %v1851
  %v1955 = vpop.f32.mrf.mxu0
  %v1956 = vadd.f32 %v1706, %v1955
  %v1957 = vpop.f32.mrf.mxu0
  %v1958 = vadd.f32 %v1708, %v1957
  %1959 = vmatprep.mubr.f32.mxu0 0.0
  %1960 = vmatmul.mubr.f32.gmra.mxu0 %v1854
  %v1961 = vpop.f32.mrf.mxu0
  %v1962 = vadd.f32 %v1712, %v1961
  %v1963 = vpop.f32.mrf.mxu0
  %v1964 = vadd.f32 %v1714, %v1963
  %1965 = vmatprep.mubr.f32.mxu0 0.0
  %1966 = vmatmul.mubr.f32.gmra.mxu0 %v1857
  %v1967 = vpop.f32.mrf.mxu0
  %v1968 = vadd.f32 %v1718, %v1967
  %v1969 = vpop.f32.mrf.mxu0
  %v1970 = vadd.f32 %v1720, %v1969
  %1971 = vdwg.mxu0
  %1972 = vmatprep.subr.mxu0 0.0
  %1973 = vmatpush1.msra.mxu0 0.0
  %1974 = vmatprep.subr.mxu0 0.0
  %1975 = vmatpush1.msra.mxu0 0.0
  %1976 = vmatprep.subr.mxu0 0.0
  %1977 = vmatpush1.msra.mxu0 0.0
  %1978 = vmatprep.subr.mxu0 0.0
  %1979 = vmatpush1.msra.mxu0 0.0
  %1980 = vmatprep.subr.mxu0 0.0
  %1981 = vmatpush1.msra.mxu0 0.0
  %1982 = vmatprep.subr.mxu0 0.0
  %1983 = vmatpush1.msra.mxu0 0.0
  %1984 = vmatprep.subr.mxu0 0.0
  %1985 = vmatpush1.msra.mxu0 0.0
  %1986 = vmatprep.subr.mxu0 0.0
  %1987 = vmatpush1.msra.mxu0 0.0
  %1988 = vmatprep.subr.mxu0 0.0
  %1989 = vmatpush1.msra.mxu0 0.0
  %1990 = vmatprep.subr.mxu0 0.0
  %1991 = vmatpush1.msra.mxu0 0.0
  %1992 = vmatprep.subr.mxu0 0.0
  %1993 = vmatpush1.msra.mxu0 0.0
  %1994 = vmatprep.subr.mxu0 0.0
  %1995 = vmatpush1.msra.mxu0 0.0
  %1996 = vmatprep.subr.mxu0 %v1502
  %1997 = vmatpush1.msra.mxu0 %v1501
  %1998 = vmatprep.subr.mxu0 %v1498
  %1999 = vmatpush1.msra.mxu0 %v1497
  %2000 = vmatprep.subr.mxu0 %v1494
  %2001 = vmatpush1.msra.mxu0 %v1493
  %2002 = vmatprep.subr.mxu0 %v1490
  %2003 = vmatpush1.msra.mxu0 %v1489
  %2004 = vmatprep.subr.mxu0 0.0
  %2005 = vmatpush2.msra.mxu0 0.0
  %2006 = vmatprep.subr.mxu0 0.0
  %2007 = vmatpush2.msra.mxu0 0.0
  %2008 = vmatprep.subr.mxu0 0.0
  %2009 = vmatpush2.msra.mxu0 0.0
  %2010 = vmatprep.subr.mxu0 0.0
  %2011 = vmatpush2.msra.mxu0 0.0
  %2012 = vmatprep.subr.mxu0 0.0
  %2013 = vmatpush2.msra.mxu0 0.0
  %2014 = vmatprep.subr.mxu0 0.0
  %2015 = vmatpush2.msra.mxu0 0.0
  %2016 = vmatprep.subr.mxu0 0.0
  %2017 = vmatpush2.msra.mxu0 0.0
  %2018 = vmatprep.subr.mxu0 0.0
  %2019 = vmatpush2.msra.mxu0 0.0
  %2020 = vmatprep.subr.mxu0 0.0
  %2021 = vmatpush2.msra.mxu0 0.0
  %2022 = vmatprep.subr.mxu0 0.0
  %2023 = vmatpush2.msra.mxu0 0.0
  %2024 = vmatprep.subr.mxu0 0.0
  %2025 = vmatpush2.msra.mxu0 0.0
  %2026 = vmatprep.subr.mxu0 0.0
  %2027 = vmatpush2.msra.mxu0 0.0
  %2028 = vmatprep.subr.mxu0 0.0
  %2029 = vmatpush2.msra.mxu0 0.0
  %2030 = vmatprep.subr.mxu0 0.0
  %2031 = vmatpush2.msra.mxu0 0.0
  %2032 = vmatprep.subr.mxu0 0.0
  %2033 = vmatpush2.msra.mxu0 0.0
  %2034 = vmatprep.subr.mxu0 0.0
  %2035 = vmatpush2.msra.mxu0 0.0
  %2036 = vmatprep.mubr.f32.mxu0 0.0
  %2037 = vmatmul.mubr.f32.gmra.mxu0 %v1836
  %v2038 = vpop.f32.mrf.mxu0
  %v2039 = vadd.f32 %v1789, %v2038
  %v2040 = vpop.f32.mrf.mxu0
  %v2041 = vadd.f32 %v1791, %v2040
  %2042 = vmatprep.mubr.f32.mxu0 0.0
  %2043 = vmatmul.mubr.f32.gmra.mxu0 %v1839
  %v2044 = vpop.f32.mrf.mxu0
  %v2045 = vadd.f32 %v1795, %v2044
  %v2046 = vpop.f32.mrf.mxu0
  %v2047 = vadd.f32 %v1797, %v2046
  %2048 = vmatprep.mubr.f32.mxu0 0.0
  %2049 = vmatmul.mubr.f32.gmra.mxu0 %v1842
  %v2050 = vpop.f32.mrf.mxu0
  %v2051 = vadd.f32 %v1801, %v2050
  %v2052 = vpop.f32.mrf.mxu0
  %v2053 = vadd.f32 %v1803, %v2052
  %2054 = vmatprep.mubr.f32.mxu0 0.0
  %2055 = vmatmul.mubr.f32.gmra.mxu0 %v1845
  %v2056 = vpop.f32.mrf.mxu0
  %v2057 = vadd.f32 %v1807, %v2056
  %v2058 = vpop.f32.mrf.mxu0
  %v2059 = vadd.f32 %v1809, %v2058
  %2060 = vmatprep.mubr.f32.mxu0 0.0
  %2061 = vmatmul.mubr.f32.gmra.mxu0 %v1848
  %v2062 = vpop.f32.mrf.mxu0
  %v2063 = vadd.f32 %v1813, %v2062
  %v2064 = vpop.f32.mrf.mxu0
  %v2065 = vadd.f32 %v1815, %v2064
  %2066 = vmatprep.mubr.f32.mxu0 0.0
  %2067 = vmatmul.mubr.f32.gmra.mxu0 %v1851
  %v2068 = vpop.f32.mrf.mxu0
  %v2069 = vadd.f32 %v1819, %v2068
  %v2070 = vpop.f32.mrf.mxu0
  %v2071 = vadd.f32 %v1821, %v2070
  %2072 = vmatprep.mubr.f32.mxu0 0.0
  %2073 = vmatmul.mubr.f32.gmra.mxu0 %v1854
  %v2074 = vpop.f32.mrf.mxu0
  %v2075 = vadd.f32 %v1825, %v2074
  %v2076 = vpop.f32.mrf.mxu0
  %v2077 = vadd.f32 %v1827, %v2076
  %2078 = vmatprep.mubr.f32.mxu0 0.0
  %2079 = vmatmul.mubr.f32.gmra.mxu0 %v1857
  %v2080 = vpop.f32.mrf.mxu0
  %v2081 = vadd.f32 %v1831, %v2080
  %v2082 = vpop.f32.mrf.mxu0
  %v2083 = vadd.f32 %v1833, %v2082
  %2084 = vdwg.mxu0
  %s2085 = scalar_lea.vmem %s5, 128
  %v2086 = vld [vmem:[%s2085] sm:$0xff]
  %v2087 = vld [vmem:[%s2085 + $0x8] sm:$0xff]
  %v2088 = vld [vmem:[%s2085 + $0x10] sm:$0xff]
  %v2089 = vld [vmem:[%s2085 + $0x18] sm:$0xff]
  %v2090 = vld [vmem:[%s2085 + $0x20] sm:$0xff]
  %v2091 = vld [vmem:[%s2085 + $0x28] sm:$0xff]
  %v2092 = vld [vmem:[%s2085 + $0x30] sm:$0xff]
  %v2093 = vld [vmem:[%s2085 + $0x38] sm:$0xff]
  %v2095 = vsel %vm1584, %v2086, 0
  %v2098 = vsel %vm1584, %v2087, 0
  %v2101 = vsel %vm1584, %v2088, 0
  %v2104 = vsel %vm1584, %v2089, 0
  %v2107 = vsel %vm1584, %v2090, 0
  %v2110 = vsel %vm1584, %v2091, 0
  %v2113 = vsel %vm1584, %v2092, 0
  %v2116 = vsel %vm1584, %v2093, 0
  %2118 = vmatprep.subr.mxu0 0.0
  %2119 = vmatpush1.msra.mxu0 0.0
  %2120 = vmatprep.subr.mxu0 0.0
  %2121 = vmatpush1.msra.mxu0 0.0
  %2122 = vmatprep.subr.mxu0 0.0
  %2123 = vmatpush1.msra.mxu0 0.0
  %2124 = vmatprep.subr.mxu0 0.0
  %2125 = vmatpush1.msra.mxu0 0.0
  %2126 = vmatprep.subr.mxu0 0.0
  %2127 = vmatpush1.msra.mxu0 0.0
  %2128 = vmatprep.subr.mxu0 0.0
  %2129 = vmatpush1.msra.mxu0 0.0
  %2130 = vmatprep.subr.mxu0 0.0
  %2131 = vmatpush1.msra.mxu0 0.0
  %2132 = vmatprep.subr.mxu0 0.0
  %2133 = vmatpush1.msra.mxu0 0.0
  %2134 = vmatprep.subr.mxu0 0.0
  %2135 = vmatpush1.msra.mxu0 0.0
  %2136 = vmatprep.subr.mxu0 0.0
  %2137 = vmatpush1.msra.mxu0 0.0
  %2138 = vmatprep.subr.mxu0 0.0
  %2139 = vmatpush1.msra.mxu0 0.0
  %2140 = vmatprep.subr.mxu0 0.0
  %2141 = vmatpush1.msra.mxu0 0.0
  %2142 = vmatprep.subr.mxu0 %v1564
  %2143 = vmatpush1.msra.mxu0 %v1563
  %2144 = vmatprep.subr.mxu0 %v1560
  %2145 = vmatpush1.msra.mxu0 %v1559
  %2146 = vmatprep.subr.mxu0 %v1556
  %2147 = vmatpush1.msra.mxu0 %v1555
  %2148 = vmatprep.subr.mxu0 %v1552
  %2149 = vmatpush1.msra.mxu0 %v1551
  %2150 = vmatprep.subr.mxu0 0.0
  %2151 = vmatpush2.msra.mxu0 0.0
  %2152 = vmatprep.subr.mxu0 0.0
  %2153 = vmatpush2.msra.mxu0 0.0
  %2154 = vmatprep.subr.mxu0 0.0
  %2155 = vmatpush2.msra.mxu0 0.0
  %2156 = vmatprep.subr.mxu0 0.0
  %2157 = vmatpush2.msra.mxu0 0.0
  %2158 = vmatprep.subr.mxu0 0.0
  %2159 = vmatpush2.msra.mxu0 0.0
  %2160 = vmatprep.subr.mxu0 0.0
  %2161 = vmatpush2.msra.mxu0 0.0
  %2162 = vmatprep.subr.mxu0 0.0
  %2163 = vmatpush2.msra.mxu0 0.0
  %2164 = vmatprep.subr.mxu0 0.0
  %2165 = vmatpush2.msra.mxu0 0.0
  %2166 = vmatprep.subr.mxu0 0.0
  %2167 = vmatpush2.msra.mxu0 0.0
  %2168 = vmatprep.subr.mxu0 0.0
  %2169 = vmatpush2.msra.mxu0 0.0
  %2170 = vmatprep.subr.mxu0 0.0
  %2171 = vmatpush2.msra.mxu0 0.0
  %2172 = vmatprep.subr.mxu0 0.0
  %2173 = vmatpush2.msra.mxu0 0.0
  %2174 = vmatprep.subr.mxu0 0.0
  %2175 = vmatpush2.msra.mxu0 0.0
  %2176 = vmatprep.subr.mxu0 0.0
  %2177 = vmatpush2.msra.mxu0 0.0
  %2178 = vmatprep.subr.mxu0 0.0
  %2179 = vmatpush2.msra.mxu0 0.0
  %2180 = vmatprep.subr.mxu0 0.0
  %2181 = vmatpush2.msra.mxu0 0.0
  %2182 = vmatprep.mubr.f32.mxu0 0.0
  %2183 = vmatmul.mubr.f32.gmra.mxu0 %v2095
  %v2184 = vpop.f32.mrf.mxu0
  %v2185 = vadd.f32 0.0, %v2184
  %v2186 = vpop.f32.mrf.mxu0
  %v2187 = vadd.f32 0.0, %v2186
  %2188 = vmatprep.mubr.f32.mxu0 0.0
  %2189 = vmatmul.mubr.f32.gmra.mxu0 %v2098
  %v2190 = vpop.f32.mrf.mxu0
  %v2191 = vadd.f32 0.0, %v2190
  %v2192 = vpop.f32.mrf.mxu0
  %v2193 = vadd.f32 0.0, %v2192
  %2194 = vmatprep.mubr.f32.mxu0 0.0
  %2195 = vmatmul.mubr.f32.gmra.mxu0 %v2101
  %v2196 = vpop.f32.mrf.mxu0
  %v2197 = vadd.f32 0.0, %v2196
  %v2198 = vpop.f32.mrf.mxu0
  %v2199 = vadd.f32 0.0, %v2198
  %2200 = vmatprep.mubr.f32.mxu0 0.0
  %2201 = vmatmul.mubr.f32.gmra.mxu0 %v2104
  %v2202 = vpop.f32.mrf.mxu0
  %v2203 = vadd.f32 0.0, %v2202
  %v2204 = vpop.f32.mrf.mxu0
  %v2205 = vadd.f32 0.0, %v2204
  %2206 = vmatprep.mubr.f32.mxu0 0.0
  %2207 = vmatmul.mubr.f32.gmra.mxu0 %v2107
  %v2208 = vpop.f32.mrf.mxu0
  %v2209 = vadd.f32 0.0, %v2208
  %v2210 = vpop.f32.mrf.mxu0
  %v2211 = vadd.f32 0.0, %v2210
  %2212 = vmatprep.mubr.f32.mxu0 0.0
  %2213 = vmatmul.mubr.f32.gmra.mxu0 %v2110
  %v2214 = vpop.f32.mrf.mxu0
  %v2215 = vadd.f32 0.0, %v2214
  %v2216 = vpop.f32.mrf.mxu0
  %v2217 = vadd.f32 0.0, %v2216
  %2218 = vmatprep.mubr.f32.mxu0 0.0
  %2219 = vmatmul.mubr.f32.gmra.mxu0 %v2113
  %v2220 = vpop.f32.mrf.mxu0
  %v2221 = vadd.f32 0.0, %v2220
  %v2222 = vpop.f32.mrf.mxu0
  %v2223 = vadd.f32 0.0, %v2222
  %2224 = vmatprep.mubr.f32.mxu0 0.0
  %2225 = vmatmul.mubr.f32.gmra.mxu0 %v2116
  %v2226 = vpop.f32.mrf.mxu0
  %v2227 = vadd.f32 0.0, %v2226
  %v2228 = vpop.f32.mrf.mxu0
  %v2229 = vadd.f32 0.0, %v2228
  %2230 = vdwg.mxu0
  %2231 = vmatprep.subr.mxu0 0.0
  %2232 = vmatpush1.msra.mxu0 0.0
  %2233 = vmatprep.subr.mxu0 0.0
  %2234 = vmatpush1.msra.mxu0 0.0
  %2235 = vmatprep.subr.mxu0 0.0
  %2236 = vmatpush1.msra.mxu0 0.0
  %2237 = vmatprep.subr.mxu0 0.0
  %2238 = vmatpush1.msra.mxu0 0.0
  %2239 = vmatprep.subr.mxu0 0.0
  %2240 = vmatpush1.msra.mxu0 0.0
  %2241 = vmatprep.subr.mxu0 0.0
  %2242 = vmatpush1.msra.mxu0 0.0
  %2243 = vmatprep.subr.mxu0 0.0
  %2244 = vmatpush1.msra.mxu0 0.0
  %2245 = vmatprep.subr.mxu0 0.0
  %2246 = vmatpush1.msra.mxu0 0.0
  %2247 = vmatprep.subr.mxu0 0.0
  %2248 = vmatpush1.msra.mxu0 0.0
  %2249 = vmatprep.subr.mxu0 0.0
  %2250 = vmatpush1.msra.mxu0 0.0
  %2251 = vmatprep.subr.mxu0 0.0
  %2252 = vmatpush1.msra.mxu0 0.0
  %2253 = vmatprep.subr.mxu0 0.0
  %2254 = vmatpush1.msra.mxu0 0.0
  %2255 = vmatprep.subr.mxu0 %v1566
  %2256 = vmatpush1.msra.mxu0 %v1565
  %2257 = vmatprep.subr.mxu0 %v1562
  %2258 = vmatpush1.msra.mxu0 %v1561
  %2259 = vmatprep.subr.mxu0 %v1558
  %2260 = vmatpush1.msra.mxu0 %v1557
  %2261 = vmatprep.subr.mxu0 %v1554
  %2262 = vmatpush1.msra.mxu0 %v1553
  %2263 = vmatprep.subr.mxu0 0.0
  %2264 = vmatpush2.msra.mxu0 0.0
  %2265 = vmatprep.subr.mxu0 0.0
  %2266 = vmatpush2.msra.mxu0 0.0
  %2267 = vmatprep.subr.mxu0 0.0
  %2268 = vmatpush2.msra.mxu0 0.0
  %2269 = vmatprep.subr.mxu0 0.0
  %2270 = vmatpush2.msra.mxu0 0.0
  %2271 = vmatprep.subr.mxu0 0.0
  %2272 = vmatpush2.msra.mxu0 0.0
  %2273 = vmatprep.subr.mxu0 0.0
  %2274 = vmatpush2.msra.mxu0 0.0
  %2275 = vmatprep.subr.mxu0 0.0
  %2276 = vmatpush2.msra.mxu0 0.0
  %2277 = vmatprep.subr.mxu0 0.0
  %2278 = vmatpush2.msra.mxu0 0.0
  %2279 = vmatprep.subr.mxu0 0.0
  %2280 = vmatpush2.msra.mxu0 0.0
  %2281 = vmatprep.subr.mxu0 0.0
  %2282 = vmatpush2.msra.mxu0 0.0
  %2283 = vmatprep.subr.mxu0 0.0
  %2284 = vmatpush2.msra.mxu0 0.0
  %2285 = vmatprep.subr.mxu0 0.0
  %2286 = vmatpush2.msra.mxu0 0.0
  %2287 = vmatprep.subr.mxu0 0.0
  %2288 = vmatpush2.msra.mxu0 0.0
  %2289 = vmatprep.subr.mxu0 0.0
  %2290 = vmatpush2.msra.mxu0 0.0
  %2291 = vmatprep.subr.mxu0 0.0
  %2292 = vmatpush2.msra.mxu0 0.0
  %2293 = vmatprep.subr.mxu0 0.0
  %2294 = vmatpush2.msra.mxu0 0.0
  %2295 = vmatprep.mubr.f32.mxu0 0.0
  %2296 = vmatmul.mubr.f32.gmra.mxu0 %v2095
  %v2297 = vpop.f32.mrf.mxu0
  %v2298 = vadd.f32 0.0, %v2297
  %v2299 = vpop.f32.mrf.mxu0
  %v2300 = vadd.f32 0.0, %v2299
  %2301 = vmatprep.mubr.f32.mxu0 0.0
  %2302 = vmatmul.mubr.f32.gmra.mxu0 %v2098
  %v2303 = vpop.f32.mrf.mxu0
  %v2304 = vadd.f32 0.0, %v2303
  %v2305 = vpop.f32.mrf.mxu0
  %v2306 = vadd.f32 0.0, %v2305
  %2307 = vmatprep.mubr.f32.mxu0 0.0
  %2308 = vmatmul.mubr.f32.gmra.mxu0 %v2101
  %v2309 = vpop.f32.mrf.mxu0
  %v2310 = vadd.f32 0.0, %v2309
  %v2311 = vpop.f32.mrf.mxu0
  %v2312 = vadd.f32 0.0, %v2311
  %2313 = vmatprep.mubr.f32.mxu0 0.0
  %2314 = vmatmul.mubr.f32.gmra.mxu0 %v2104
  %v2315 = vpop.f32.mrf.mxu0
  %v2316 = vadd.f32 0.0, %v2315
  %v2317 = vpop.f32.mrf.mxu0
  %v2318 = vadd.f32 0.0, %v2317
  %2319 = vmatprep.mubr.f32.mxu0 0.0
  %2320 = vmatmul.mubr.f32.gmra.mxu0 %v2107
  %v2321 = vpop.f32.mrf.mxu0
  %v2322 = vadd.f32 0.0, %v2321
  %v2323 = vpop.f32.mrf.mxu0
  %v2324 = vadd.f32 0.0, %v2323
  %2325 = vmatprep.mubr.f32.mxu0 0.0
  %2326 = vmatmul.mubr.f32.gmra.mxu0 %v2110
  %v2327 = vpop.f32.mrf.mxu0
  %v2328 = vadd.f32 0.0, %v2327
  %v2329 = vpop.f32.mrf.mxu0
  %v2330 = vadd.f32 0.0, %v2329
  %2331 = vmatprep.mubr.f32.mxu0 0.0
  %2332 = vmatmul.mubr.f32.gmra.mxu0 %v2113
  %v2333 = vpop.f32.mrf.mxu0
  %v2334 = vadd.f32 0.0, %v2333
  %v2335 = vpop.f32.mrf.mxu0
  %v2336 = vadd.f32 0.0, %v2335
  %2337 = vmatprep.mubr.f32.mxu0 0.0
  %2338 = vmatmul.mubr.f32.gmra.mxu0 %v2116
  %v2339 = vpop.f32.mrf.mxu0
  %v2340 = vadd.f32 0.0, %v2339
  %v2341 = vpop.f32.mrf.mxu0
  %v2342 = vadd.f32 0.0, %v2341
  %2343 = vdwg.mxu0
  %v2344 = vadd.f32 %v1926, %v2185
  %v2345 = vadd.f32 %v1928, %v2187
  %v2346 = vadd.f32 %v2039, %v2298
  %v2347 = vadd.f32 %v2041, %v2300
  %v2348 = vadd.f32 %v1932, %v2191
  %v2349 = vadd.f32 %v1934, %v2193
  %v2350 = vadd.f32 %v2045, %v2304
  %v2351 = vadd.f32 %v2047, %v2306
  %v2352 = vadd.f32 %v1938, %v2197
  %v2353 = vadd.f32 %v1940, %v2199
  %v2354 = vadd.f32 %v2051, %v2310
  %v2355 = vadd.f32 %v2053, %v2312
  %v2356 = vadd.f32 %v1944, %v2203
  %v2357 = vadd.f32 %v1946, %v2205
  %v2358 = vadd.f32 %v2057, %v2316
  %v2359 = vadd.f32 %v2059, %v2318
  %v2360 = vadd.f32 %v1950, %v2209
  %v2361 = vadd.f32 %v1952, %v2211
  %v2362 = vadd.f32 %v2063, %v2322
  %v2363 = vadd.f32 %v2065, %v2324
  %v2364 = vadd.f32 %v1956, %v2215
  %v2365 = vadd.f32 %v1958, %v2217
  %v2366 = vadd.f32 %v2069, %v2328
  %v2367 = vadd.f32 %v2071, %v2330
  %v2368 = vadd.f32 %v1962, %v2221
  %v2369 = vadd.f32 %v1964, %v2223
  %v2370 = vadd.f32 %v2075, %v2334
  %v2371 = vadd.f32 %v2077, %v2336
  %v2372 = vadd.f32 %v1968, %v2227
  %v2373 = vadd.f32 %v1970, %v2229
  %v2374 = vadd.f32 %v2081, %v2340
  %v2375 = vadd.f32 %v2083, %v2342
  %v2376 = vld [vmem:[%s6] sm:$0xff]
  %v2377 = vld [vmem:[%s6 + $0x8] sm:$0xff]
  %v2378 = vld [vmem:[%s6 + $0x10] sm:$0xff]
  %v2379 = vld [vmem:[%s6 + $0x18] sm:$0xff]
  %v2380 = vld [vmem:[%s6 + $0x20] sm:$0xff]
  %v2381 = vld [vmem:[%s6 + $0x28] sm:$0xff]
  %v2382 = vld [vmem:[%s6 + $0x30] sm:$0xff]
  %v2383 = vld [vmem:[%s6 + $0x38] sm:$0xff]
  %2385 = vset.pattern.permute.xlu0 0
  %2386 = vperm.xlu0 %2385, %v2376
  %v2387 = vpop.permute.xlu0 %2386
  %2390 = vset.pattern.permute.xlu0 0
  %2391 = vperm.xlu0 %2390, %v2377
  %v2392 = vpop.permute.xlu0 %2391
  %2395 = vset.pattern.permute.xlu0 0
  %2396 = vperm.xlu0 %2395, %v2378
  %v2397 = vpop.permute.xlu0 %2396
  %2400 = vset.pattern.permute.xlu0 0
  %2401 = vperm.xlu0 %2400, %v2379
  %v2402 = vpop.permute.xlu0 %2401
  %2405 = vset.pattern.permute.xlu0 0
  %2406 = vperm.xlu0 %2405, %v2380
  %v2407 = vpop.permute.xlu0 %2406
  %2410 = vset.pattern.permute.xlu0 0
  %2411 = vperm.xlu0 %2410, %v2381
  %v2412 = vpop.permute.xlu0 %2411
  %2415 = vset.pattern.permute.xlu0 0
  %2416 = vperm.xlu0 %2415, %v2382
  %v2417 = vpop.permute.xlu0 %2416
  %2420 = vset.pattern.permute.xlu0 0
  %2421 = vperm.xlu0 %2420, %v2383
  %v2422 = vpop.permute.xlu0 %2421
  %v2424 = vadd.f32 %v2344, %v2387
  %v2425 = vadd.f32 %v2345, %v2387
  %v2426 = vadd.f32 %v2346, %v2387
  %v2427 = vadd.f32 %v2347, %v2387
  %v2428 = vadd.f32 %v2348, %v2392
  %v2429 = vadd.f32 %v2349, %v2392
  %v2430 = vadd.f32 %v2350, %v2392
  %v2431 = vadd.f32 %v2351, %v2392
  %v2432 = vadd.f32 %v2352, %v2397
  %v2433 = vadd.f32 %v2353, %v2397
  %v2434 = vadd.f32 %v2354, %v2397
  %v2435 = vadd.f32 %v2355, %v2397
  %v2436 = vadd.f32 %v2356, %v2402
  %v2437 = vadd.f32 %v2357, %v2402
  %v2438 = vadd.f32 %v2358, %v2402
  %v2439 = vadd.f32 %v2359, %v2402
  %v2440 = vadd.f32 %v2360, %v2407
  %v2441 = vadd.f32 %v2361, %v2407
  %v2442 = vadd.f32 %v2362, %v2407
  %v2443 = vadd.f32 %v2363, %v2407
  %v2444 = vadd.f32 %v2364, %v2412
  %v2445 = vadd.f32 %v2365, %v2412
  %v2446 = vadd.f32 %v2366, %v2412
  %v2447 = vadd.f32 %v2367, %v2412
  %v2448 = vadd.f32 %v2368, %v2417
  %v2449 = vadd.f32 %v2369, %v2417
  %v2450 = vadd.f32 %v2370, %v2417
  %v2451 = vadd.f32 %v2371, %v2417
  %v2452 = vadd.f32 %v2372, %v2422
  %v2453 = vadd.f32 %v2373, %v2422
  %v2454 = vadd.f32 %v2374, %v2422
  %v2455 = vadd.f32 %v2375, %v2422
  %v2456 = vmax.f32 %v2424, 0.0
  %v2457 = vmax.f32 %v2425, 0.0
  %v2458 = vmax.f32 %v2426, 0.0
  %v2459 = vmax.f32 %v2427, 0.0
  %v2460 = vmax.f32 %v2428, 0.0
  %v2461 = vmax.f32 %v2429, 0.0
  %v2462 = vmax.f32 %v2430, 0.0
  %v2463 = vmax.f32 %v2431, 0.0
  %v2464 = vmax.f32 %v2432, 0.0
  %v2465 = vmax.f32 %v2433, 0.0
  %v2466 = vmax.f32 %v2434, 0.0
  %v2467 = vmax.f32 %v2435, 0.0
  %v2468 = vmax.f32 %v2436, 0.0
  %v2469 = vmax.f32 %v2437, 0.0
  %v2470 = vmax.f32 %v2438, 0.0
  %v2471 = vmax.f32 %v2439, 0.0
  %v2472 = vmax.f32 %v2440, 0.0
  %v2473 = vmax.f32 %v2441, 0.0
  %v2474 = vmax.f32 %v2442, 0.0
  %v2475 = vmax.f32 %v2443, 0.0
  %v2476 = vmax.f32 %v2444, 0.0
  %v2477 = vmax.f32 %v2445, 0.0
  %v2478 = vmax.f32 %v2446, 0.0
  %v2479 = vmax.f32 %v2447, 0.0
  %v2480 = vmax.f32 %v2448, 0.0
  %v2481 = vmax.f32 %v2449, 0.0
  %v2482 = vmax.f32 %v2450, 0.0
  %v2483 = vmax.f32 %v2451, 0.0
  %v2484 = vmax.f32 %v2452, 0.0
  %v2485 = vmax.f32 %v2453, 0.0
  %v2486 = vmax.f32 %v2454, 0.0
  %v2487 = vmax.f32 %v2455, 0.0
  %2488 = vrot.lane.b32.xlu0 %v2456, 1
  %v2489 = vpop.permute.xlu0 %2488
  %2490 = vrot.lane.b32.xlu0 %v2460, 1
  %v2491 = vpop.permute.xlu0 %2490
  %2492 = vrot.lane.b32.xlu0 %v2464, 1
  %v2493 = vpop.permute.xlu0 %2492
  %2494 = vrot.lane.b32.xlu0 %v2468, 1
  %v2495 = vpop.permute.xlu0 %2494
  %2496 = vrot.lane.b32.xlu0 %v2472, 1
  %v2497 = vpop.permute.xlu0 %2496
  %2498 = vrot.lane.b32.xlu0 %v2476, 1
  %v2499 = vpop.permute.xlu0 %2498
  %2500 = vrot.lane.b32.xlu0 %v2480, 1
  %v2501 = vpop.permute.xlu0 %2500
  %2502 = vrot.lane.b32.xlu0 %v2484, 1
  %v2503 = vpop.permute.xlu0 %2502
  %2504 = vrot.lane.b32.xlu0 %v2457, 1
  %v2505 = vpop.permute.xlu0 %2504
  %2506 = vrot.lane.b32.xlu0 %v2461, 1
  %v2507 = vpop.permute.xlu0 %2506
  %2508 = vrot.lane.b32.xlu0 %v2465, 1
  %v2509 = vpop.permute.xlu0 %2508
  %2510 = vrot.lane.b32.xlu0 %v2469, 1
  %v2511 = vpop.permute.xlu0 %2510
  %2512 = vrot.lane.b32.xlu0 %v2473, 1
  %v2513 = vpop.permute.xlu0 %2512
  %2514 = vrot.lane.b32.xlu0 %v2477, 1
  %v2515 = vpop.permute.xlu0 %2514
  %2516 = vrot.lane.b32.xlu0 %v2481, 1
  %v2517 = vpop.permute.xlu0 %2516
  %2518 = vrot.lane.b32.xlu0 %v2485, 1
  %v2519 = vpop.permute.xlu0 %2518
  %2520 = vrot.lane.b32.xlu0 %v2458, 1
  %v2521 = vpop.permute.xlu0 %2520
  %2522 = vrot.lane.b32.xlu0 %v2462, 1
  %v2523 = vpop.permute.xlu0 %2522
  %2524 = vrot.lane.b32.xlu0 %v2466, 1
  %v2525 = vpop.permute.xlu0 %2524
  %2526 = vrot.lane.b32.xlu0 %v2470, 1
  %v2527 = vpop.permute.xlu0 %2526
  %2528 = vrot.lane.b32.xlu0 %v2474, 1
  %v2529 = vpop.permute.xlu0 %2528
  %2530 = vrot.lane.b32.xlu0 %v2478, 1
  %v2531 = vpop.permute.xlu0 %2530
  %2532 = vrot.lane.b32.xlu0 %v2482, 1
  %v2533 = vpop.permute.xlu0 %2532
  %2534 = vrot.lane.b32.xlu0 %v2486, 1
  %v2535 = vpop.permute.xlu0 %2534
  %2536 = vrot.lane.b32.xlu0 %v2459, 1
  %v2537 = vpop.permute.xlu0 %2536
  %2538 = vrot.lane.b32.xlu0 %v2463, 1
  %v2539 = vpop.permute.xlu0 %2538
  %2540 = vrot.lane.b32.xlu0 %v2467, 1
  %v2541 = vpop.permute.xlu0 %2540
  %2542 = vrot.lane.b32.xlu0 %v2471, 1
  %v2543 = vpop.permute.xlu0 %2542
  %2544 = vrot.lane.b32.xlu0 %v2475, 1
  %v2545 = vpop.permute.xlu0 %2544
  %2546 = vrot.lane.b32.xlu0 %v2479, 1
  %v2547 = vpop.permute.xlu0 %2546
  %2548 = vrot.lane.b32.xlu0 %v2483, 1
  %v2549 = vpop.permute.xlu0 %2548
  %2550 = vrot.lane.b32.xlu0 %v2487, 1
  %v2551 = vpop.permute.xlu0 %2550
  %v2552 = vsel %vm134, %v2521, %v2537
  %v2553 = vsel %vm134, %v2523, %v2539
  %v2554 = vsel %vm134, %v2525, %v2541
  %v2555 = vsel %vm134, %v2527, %v2543
  %v2556 = vsel %vm134, %v2529, %v2545
  %v2557 = vsel %vm134, %v2531, %v2547
  %v2558 = vsel %vm134, %v2533, %v2549
  %v2559 = vsel %vm134, %v2535, %v2551
  %v2560 = vsel %vm134, %v2505, %v2521
  %v2561 = vsel %vm134, %v2507, %v2523
  %v2562 = vsel %vm134, %v2509, %v2525
  %v2563 = vsel %vm134, %v2511, %v2527
  %v2564 = vsel %vm134, %v2513, %v2529
  %v2565 = vsel %vm134, %v2515, %v2531
  %v2566 = vsel %vm134, %v2517, %v2533
  %v2567 = vsel %vm134, %v2519, %v2535
  %v2568 = vsel %vm134, %v2489, %v2505
  %v2569 = vsel %vm134, %v2491, %v2507
  %v2570 = vsel %vm134, %v2493, %v2509
  %v2571 = vsel %vm134, %v2495, %v2511
  %v2572 = vsel %vm134, %v2497, %v2513
  %v2573 = vsel %vm134, %v2499, %v2515
  %v2574 = vsel %vm134, %v2501, %v2517
  %v2575 = vsel %vm134, %v2503, %v2519
  %v2576 = vsel %vm134, %v2537, %v2489
  %v2577 = vsel %vm134, %v2539, %v2491
  %v2578 = vsel %vm134, %v2541, %v2493
  %v2579 = vsel %vm134, %v2543, %v2495
  %v2580 = vsel %vm134, %v2545, %v2497
  %v2581 = vsel %vm134, %v2547, %v2499
  %v2582 = vsel %vm134, %v2549, %v2501
  %v2583 = vsel %vm134, %v2551, %v2503
  %v2584 = vmul.f32 %v2576, %v102
  %v2585 = vmul.f32 %v2568, %v103
  %v2586 = vmul.f32 %v2560, %v104
  %v2587 = vmul.f32 %v2552, %v105
  %v2588 = vmul.f32 %v2577, %v102
  %v2589 = vmul.f32 %v2569, %v103
  %v2590 = vmul.f32 %v2561, %v104
  %v2591 = vmul.f32 %v2553, %v105
  %v2592 = vmul.f32 %v2578, %v102
  %v2593 = vmul.f32 %v2570, %v103
  %v2594 = vmul.f32 %v2562, %v104
  %v2595 = vmul.f32 %v2554, %v105
  %v2596 = vmul.f32 %v2579, %v102
  %v2597 = vmul.f32 %v2571, %v103
  %v2598 = vmul.f32 %v2563, %v104
  %v2599 = vmul.f32 %v2555, %v105
  %v2600 = vmul.f32 %v2580, %v102
  %v2601 = vmul.f32 %v2572, %v103
  %v2602 = vmul.f32 %v2564, %v104
  %v2603 = vmul.f32 %v2556, %v105
  %v2604 = vmul.f32 %v2581, %v102
  %v2605 = vmul.f32 %v2573, %v103
  %v2606 = vmul.f32 %v2565, %v104
  %v2607 = vmul.f32 %v2557, %v105
  %v2608 = vmul.f32 %v2582, %v102
  %v2609 = vmul.f32 %v2574, %v103
  %v2610 = vmul.f32 %v2566, %v104
  %v2611 = vmul.f32 %v2558, %v105
  %v2612 = vmul.f32 %v2583, %v102
  %v2613 = vmul.f32 %v2575, %v103
  %v2614 = vmul.f32 %v2567, %v104
  %v2615 = vmul.f32 %v2559, %v105
  %2616 = vrot.lane.b32.xlu0 %v2456, 127
  %v2617 = vpop.permute.xlu0 %2616
  %2618 = vrot.lane.b32.xlu0 %v2460, 127
  %v2619 = vpop.permute.xlu0 %2618
  %2620 = vrot.lane.b32.xlu0 %v2464, 127
  %v2621 = vpop.permute.xlu0 %2620
  %2622 = vrot.lane.b32.xlu0 %v2468, 127
  %v2623 = vpop.permute.xlu0 %2622
  %2624 = vrot.lane.b32.xlu0 %v2472, 127
  %v2625 = vpop.permute.xlu0 %2624
  %2626 = vrot.lane.b32.xlu0 %v2476, 127
  %v2627 = vpop.permute.xlu0 %2626
  %2628 = vrot.lane.b32.xlu0 %v2480, 127
  %v2629 = vpop.permute.xlu0 %2628
  %2630 = vrot.lane.b32.xlu0 %v2484, 127
  %v2631 = vpop.permute.xlu0 %2630
  %2632 = vrot.lane.b32.xlu0 %v2457, 127
  %v2633 = vpop.permute.xlu0 %2632
  %2634 = vrot.lane.b32.xlu0 %v2461, 127
  %v2635 = vpop.permute.xlu0 %2634
  %2636 = vrot.lane.b32.xlu0 %v2465, 127
  %v2637 = vpop.permute.xlu0 %2636
  %2638 = vrot.lane.b32.xlu0 %v2469, 127
  %v2639 = vpop.permute.xlu0 %2638
  %2640 = vrot.lane.b32.xlu0 %v2473, 127
  %v2641 = vpop.permute.xlu0 %2640
  %2642 = vrot.lane.b32.xlu0 %v2477, 127
  %v2643 = vpop.permute.xlu0 %2642
  %2644 = vrot.lane.b32.xlu0 %v2481, 127
  %v2645 = vpop.permute.xlu0 %2644
  %2646 = vrot.lane.b32.xlu0 %v2485, 127
  %v2647 = vpop.permute.xlu0 %2646
  %2648 = vrot.lane.b32.xlu0 %v2458, 127
  %v2649 = vpop.permute.xlu0 %2648
  %2650 = vrot.lane.b32.xlu0 %v2462, 127
  %v2651 = vpop.permute.xlu0 %2650
  %2652 = vrot.lane.b32.xlu0 %v2466, 127
  %v2653 = vpop.permute.xlu0 %2652
  %2654 = vrot.lane.b32.xlu0 %v2470, 127
  %v2655 = vpop.permute.xlu0 %2654
  %2656 = vrot.lane.b32.xlu0 %v2474, 127
  %v2657 = vpop.permute.xlu0 %2656
  %2658 = vrot.lane.b32.xlu0 %v2478, 127
  %v2659 = vpop.permute.xlu0 %2658
  %2660 = vrot.lane.b32.xlu0 %v2482, 127
  %v2661 = vpop.permute.xlu0 %2660
  %2662 = vrot.lane.b32.xlu0 %v2486, 127
  %v2663 = vpop.permute.xlu0 %2662
  %2664 = vrot.lane.b32.xlu0 %v2459, 127
  %v2665 = vpop.permute.xlu0 %2664
  %2666 = vrot.lane.b32.xlu0 %v2463, 127
  %v2667 = vpop.permute.xlu0 %2666
  %2668 = vrot.lane.b32.xlu0 %v2467, 127
  %v2669 = vpop.permute.xlu0 %2668
  %2670 = vrot.lane.b32.xlu0 %v2471, 127
  %v2671 = vpop.permute.xlu0 %2670
  %2672 = vrot.lane.b32.xlu0 %v2475, 127
  %v2673 = vpop.permute.xlu0 %2672
  %2674 = vrot.lane.b32.xlu0 %v2479, 127
  %v2675 = vpop.permute.xlu0 %2674
  %2676 = vrot.lane.b32.xlu0 %v2483, 127
  %v2677 = vpop.permute.xlu0 %2676
  %2678 = vrot.lane.b32.xlu0 %v2487, 127
  %v2679 = vpop.permute.xlu0 %2678
  %v2680 = vsel %vm151, %v2649, %v2665
  %v2681 = vsel %vm151, %v2651, %v2667
  %v2682 = vsel %vm151, %v2653, %v2669
  %v2683 = vsel %vm151, %v2655, %v2671
  %v2684 = vsel %vm151, %v2657, %v2673
  %v2685 = vsel %vm151, %v2659, %v2675
  %v2686 = vsel %vm151, %v2661, %v2677
  %v2687 = vsel %vm151, %v2663, %v2679
  %v2688 = vsel %vm151, %v2633, %v2649
  %v2689 = vsel %vm151, %v2635, %v2651
  %v2690 = vsel %vm151, %v2637, %v2653
  %v2691 = vsel %vm151, %v2639, %v2655
  %v2692 = vsel %vm151, %v2641, %v2657
  %v2693 = vsel %vm151, %v2643, %v2659
  %v2694 = vsel %vm151, %v2645, %v2661
  %v2695 = vsel %vm151, %v2647, %v2663
  %v2696 = vsel %vm151, %v2617, %v2633
  %v2697 = vsel %vm151, %v2619, %v2635
  %v2698 = vsel %vm151, %v2621, %v2637
  %v2699 = vsel %vm151, %v2623, %v2639
  %v2700 = vsel %vm151, %v2625, %v2641
  %v2701 = vsel %vm151, %v2627, %v2643
  %v2702 = vsel %vm151, %v2629, %v2645
  %v2703 = vsel %vm151, %v2631, %v2647
  %v2704 = vsel %vm151, %v2665, %v2617
  %v2705 = vsel %vm151, %v2667, %v2619
  %v2706 = vsel %vm151, %v2669, %v2621
  %v2707 = vsel %vm151, %v2671, %v2623
  %v2708 = vsel %vm151, %v2673, %v2625
  %v2709 = vsel %vm151, %v2675, %v2627
  %v2710 = vsel %vm151, %v2677, %v2629
  %v2711 = vsel %vm151, %v2679, %v2631
  %v2712 = vmul.f32 %v2696, %v114
  %v2713 = vmul.f32 %v2688, %v115
  %v2714 = vmul.f32 %v2680, %v116
  %v2715 = vmul.f32 %v2704, %v117
  %v2716 = vmul.f32 %v2697, %v114
  %v2717 = vmul.f32 %v2689, %v115
  %v2718 = vmul.f32 %v2681, %v116
  %v2719 = vmul.f32 %v2705, %v117
  %v2720 = vmul.f32 %v2698, %v114
  %v2721 = vmul.f32 %v2690, %v115
  %v2722 = vmul.f32 %v2682, %v116
  %v2723 = vmul.f32 %v2706, %v117
  %v2724 = vmul.f32 %v2699, %v114
  %v2725 = vmul.f32 %v2691, %v115
  %v2726 = vmul.f32 %v2683, %v116
  %v2727 = vmul.f32 %v2707, %v117
  %v2728 = vmul.f32 %v2700, %v114
  %v2729 = vmul.f32 %v2692, %v115
  %v2730 = vmul.f32 %v2684, %v116
  %v2731 = vmul.f32 %v2708, %v117
  %v2732 = vmul.f32 %v2701, %v114
  %v2733 = vmul.f32 %v2693, %v115
  %v2734 = vmul.f32 %v2685, %v116
  %v2735 = vmul.f32 %v2709, %v117
  %v2736 = vmul.f32 %v2702, %v114
  %v2737 = vmul.f32 %v2694, %v115
  %v2738 = vmul.f32 %v2686, %v116
  %v2739 = vmul.f32 %v2710, %v117
  %v2740 = vmul.f32 %v2703, %v114
  %v2741 = vmul.f32 %v2695, %v115
  %v2742 = vmul.f32 %v2687, %v116
  %v2743 = vmul.f32 %v2711, %v117
  %v2744 = vld [vmem:[%s7] sm:$0xff]
  %v2745 = vld [vmem:[%s7 + $0x8] sm:$0xff]
  %v2746 = vld [vmem:[%s7 + $0x10] sm:$0xff]
  %v2747 = vld [vmem:[%s7 + $0x18] sm:$0xff]
  %v2748 = vld [vmem:[%s7 + $0x20] sm:$0xff]
  %v2749 = vld [vmem:[%s7 + $0x28] sm:$0xff]
  %v2750 = vld [vmem:[%s7 + $0x30] sm:$0xff]
  %v2751 = vld [vmem:[%s7 + $0x38] sm:$0xff]
  %v2752 = vld [vmem:[%s7 + $0x40] sm:$0xff]
  %v2753 = vld [vmem:[%s7 + $0x48] sm:$0xff]
  %v2754 = vld [vmem:[%s7 + $0x50] sm:$0xff]
  %v2755 = vld [vmem:[%s7 + $0x58] sm:$0xff]
  %v2756 = vld [vmem:[%s7 + $0x60] sm:$0xff]
  %v2757 = vld [vmem:[%s7 + $0x68] sm:$0xff]
  %v2758 = vld [vmem:[%s7 + $0x70] sm:$0xff]
  %v2759 = vld [vmem:[%s7 + $0x78] sm:$0xff]
  %s2760 = scalar_lea.vmem %s7, 128
  %v2761 = vld [vmem:[%s2760] sm:$0xff]
  %v2762 = vld [vmem:[%s2760 + $0x8] sm:$0xff]
  %v2763 = vld [vmem:[%s2760 + $0x10] sm:$0xff]
  %v2764 = vld [vmem:[%s2760 + $0x18] sm:$0xff]
  %v2765 = vld [vmem:[%s2760 + $0x20] sm:$0xff]
  %v2766 = vld [vmem:[%s2760 + $0x28] sm:$0xff]
  %v2767 = vld [vmem:[%s2760 + $0x30] sm:$0xff]
  %v2768 = vld [vmem:[%s2760 + $0x38] sm:$0xff]
  %v2769 = vld [vmem:[%s2760 + $0x40] sm:$0xff]
  %v2770 = vld [vmem:[%s2760 + $0x48] sm:$0xff]
  %v2771 = vld [vmem:[%s2760 + $0x50] sm:$0xff]
  %v2772 = vld [vmem:[%s2760 + $0x58] sm:$0xff]
  %v2773 = vld [vmem:[%s2760 + $0x60] sm:$0xff]
  %v2774 = vld [vmem:[%s2760 + $0x68] sm:$0xff]
  %v2775 = vld [vmem:[%s2760 + $0x70] sm:$0xff]
  %v2776 = vld [vmem:[%s2760 + $0x78] sm:$0xff]
  %vm2777 = vcmask 523264
  %v2779 = vsel %vm2777, %v2761, 0
  %v2782 = vsel %vm2777, %v2762, 0
  %v2785 = vsel %vm2777, %v2763, 0
  %v2788 = vsel %vm2777, %v2764, 0
  %v2791 = vsel %vm2777, %v2765, 0
  %v2794 = vsel %vm2777, %v2766, 0
  %v2797 = vsel %vm2777, %v2767, 0
  %v2800 = vsel %vm2777, %v2768, 0
  %v2803 = vsel %vm2777, %v2769, 0
  %v2806 = vsel %vm2777, %v2770, 0
  %v2809 = vsel %vm2777, %v2771, 0
  %v2812 = vsel %vm2777, %v2772, 0
  %v2815 = vsel %vm2777, %v2773, 0
  %v2818 = vsel %vm2777, %v2774, 0
  %v2821 = vsel %vm2777, %v2775, 0
  %v2824 = vsel %vm2777, %v2776, 0
  %2826 = vmatprep.subr.mxu0 0.0
  %2827 = vmatpush1.msra.mxu0 0.0
  %2828 = vmatprep.subr.mxu0 0.0
  %2829 = vmatpush1.msra.mxu0 0.0
  %2830 = vmatprep.subr.mxu0 0.0
  %2831 = vmatpush1.msra.mxu0 0.0
  %2832 = vmatprep.subr.mxu0 0.0
  %2833 = vmatpush1.msra.mxu0 0.0
  %2834 = vmatprep.subr.mxu0 0.0
  %2835 = vmatpush1.msra.mxu0 0.0
  %2836 = vmatprep.subr.mxu0 0.0
  %2837 = vmatpush1.msra.mxu0 0.0
  %2838 = vmatprep.subr.mxu0 0.0
  %2839 = vmatpush1.msra.mxu0 0.0
  %2840 = vmatprep.subr.mxu0 0.0
  %2841 = vmatpush1.msra.mxu0 0.0
  %2842 = vmatprep.subr.mxu0 %v2485
  %2843 = vmatpush1.msra.mxu0 %v2484
  %2844 = vmatprep.subr.mxu0 %v2481
  %2845 = vmatpush1.msra.mxu0 %v2480
  %2846 = vmatprep.subr.mxu0 %v2477
  %2847 = vmatpush1.msra.mxu0 %v2476
  %2848 = vmatprep.subr.mxu0 %v2473
  %2849 = vmatpush1.msra.mxu0 %v2472
  %2850 = vmatprep.subr.mxu0 %v2469
  %2851 = vmatpush1.msra.mxu0 %v2468
  %2852 = vmatprep.subr.mxu0 %v2465
  %2853 = vmatpush1.msra.mxu0 %v2464
  %2854 = vmatprep.subr.mxu0 %v2461
  %2855 = vmatpush1.msra.mxu0 %v2460
  %2856 = vmatprep.subr.mxu0 %v2457
  %2857 = vmatpush1.msra.mxu0 %v2456
  %2858 = vmatprep.subr.mxu0 0.0
  %2859 = vmatpush2.msra.mxu0 0.0
  %2860 = vmatprep.subr.mxu0 0.0
  %2861 = vmatpush2.msra.mxu0 0.0
  %2862 = vmatprep.subr.mxu0 0.0
  %2863 = vmatpush2.msra.mxu0 0.0
  %2864 = vmatprep.subr.mxu0 0.0
  %2865 = vmatpush2.msra.mxu0 0.0
  %2866 = vmatprep.subr.mxu0 0.0
  %2867 = vmatpush2.msra.mxu0 0.0
  %2868 = vmatprep.subr.mxu0 0.0
  %2869 = vmatpush2.msra.mxu0 0.0
  %2870 = vmatprep.subr.mxu0 0.0
  %2871 = vmatpush2.msra.mxu0 0.0
  %2872 = vmatprep.subr.mxu0 0.0
  %2873 = vmatpush2.msra.mxu0 0.0
  %2874 = vmatprep.subr.mxu0 0.0
  %2875 = vmatpush2.msra.mxu0 0.0
  %2876 = vmatprep.subr.mxu0 0.0
  %2877 = vmatpush2.msra.mxu0 0.0
  %2878 = vmatprep.subr.mxu0 0.0
  %2879 = vmatpush2.msra.mxu0 0.0
  %2880 = vmatprep.subr.mxu0 0.0
  %2881 = vmatpush2.msra.mxu0 0.0
  %2882 = vmatprep.subr.mxu0 0.0
  %2883 = vmatpush2.msra.mxu0 0.0
  %2884 = vmatprep.subr.mxu0 0.0
  %2885 = vmatpush2.msra.mxu0 0.0
  %2886 = vmatprep.subr.mxu0 0.0
  %2887 = vmatpush2.msra.mxu0 0.0
  %2888 = vmatprep.subr.mxu0 0.0
  %2889 = vmatpush2.msra.mxu0 0.0
  %2890 = vmatprep.mubr.f32.mxu0 0.0
  %2891 = vmatmul.mubr.f32.gmra.mxu0 %v2779
  %v2892 = vpop.f32.mrf.mxu0
  %v2893 = vadd.f32 0.0, %v2892
  %v2894 = vpop.f32.mrf.mxu0
  %v2895 = vadd.f32 0.0, %v2894
  %2896 = vmatprep.mubr.f32.mxu0 0.0
  %2897 = vmatmul.mubr.f32.gmra.mxu0 %v2782
  %v2898 = vpop.f32.mrf.mxu0
  %v2899 = vadd.f32 0.0, %v2898
  %v2900 = vpop.f32.mrf.mxu0
  %v2901 = vadd.f32 0.0, %v2900
  %2902 = vmatprep.mubr.f32.mxu0 0.0
  %2903 = vmatmul.mubr.f32.gmra.mxu0 %v2785
  %v2904 = vpop.f32.mrf.mxu0
  %v2905 = vadd.f32 0.0, %v2904
  %v2906 = vpop.f32.mrf.mxu0
  %v2907 = vadd.f32 0.0, %v2906
  %2908 = vmatprep.mubr.f32.mxu0 0.0
  %2909 = vmatmul.mubr.f32.gmra.mxu0 %v2788
  %v2910 = vpop.f32.mrf.mxu0
  %v2911 = vadd.f32 0.0, %v2910
  %v2912 = vpop.f32.mrf.mxu0
  %v2913 = vadd.f32 0.0, %v2912
  %2914 = vmatprep.mubr.f32.mxu0 0.0
  %2915 = vmatmul.mubr.f32.gmra.mxu0 %v2791
  %v2916 = vpop.f32.mrf.mxu0
  %v2917 = vadd.f32 0.0, %v2916
  %v2918 = vpop.f32.mrf.mxu0
  %v2919 = vadd.f32 0.0, %v2918
  %2920 = vmatprep.mubr.f32.mxu0 0.0
  %2921 = vmatmul.mubr.f32.gmra.mxu0 %v2794
  %v2922 = vpop.f32.mrf.mxu0
  %v2923 = vadd.f32 0.0, %v2922
  %v2924 = vpop.f32.mrf.mxu0
  %v2925 = vadd.f32 0.0, %v2924
  %2926 = vmatprep.mubr.f32.mxu0 0.0
  %2927 = vmatmul.mubr.f32.gmra.mxu0 %v2797
  %v2928 = vpop.f32.mrf.mxu0
  %v2929 = vadd.f32 0.0, %v2928
  %v2930 = vpop.f32.mrf.mxu0
  %v2931 = vadd.f32 0.0, %v2930
  %2932 = vmatprep.mubr.f32.mxu0 0.0
  %2933 = vmatmul.mubr.f32.gmra.mxu0 %v2800
  %v2934 = vpop.f32.mrf.mxu0
  %v2935 = vadd.f32 0.0, %v2934
  %v2936 = vpop.f32.mrf.mxu0
  %v2937 = vadd.f32 0.0, %v2936
  %2938 = vmatprep.mubr.f32.mxu0 0.0
  %2939 = vmatmul.mubr.f32.gmra.mxu0 %v2803
  %v2940 = vpop.f32.mrf.mxu0
  %v2941 = vadd.f32 0.0, %v2940
  %v2942 = vpop.f32.mrf.mxu0
  %v2943 = vadd.f32 0.0, %v2942
  %2944 = vmatprep.mubr.f32.mxu0 0.0
  %2945 = vmatmul.mubr.f32.gmra.mxu0 %v2806
  %v2946 = vpop.f32.mrf.mxu0
  %v2947 = vadd.f32 0.0, %v2946
  %v2948 = vpop.f32.mrf.mxu0
  %v2949 = vadd.f32 0.0, %v2948
  %2950 = vmatprep.mubr.f32.mxu0 0.0
  %2951 = vmatmul.mubr.f32.gmra.mxu0 %v2809
  %v2952 = vpop.f32.mrf.mxu0
  %v2953 = vadd.f32 0.0, %v2952
  %v2954 = vpop.f32.mrf.mxu0
  %v2955 = vadd.f32 0.0, %v2954
  %2956 = vmatprep.mubr.f32.mxu0 0.0
  %2957 = vmatmul.mubr.f32.gmra.mxu0 %v2812
  %v2958 = vpop.f32.mrf.mxu0
  %v2959 = vadd.f32 0.0, %v2958
  %v2960 = vpop.f32.mrf.mxu0
  %v2961 = vadd.f32 0.0, %v2960
  %2962 = vmatprep.mubr.f32.mxu0 0.0
  %2963 = vmatmul.mubr.f32.gmra.mxu0 %v2815
  %v2964 = vpop.f32.mrf.mxu0
  %v2965 = vadd.f32 0.0, %v2964
  %v2966 = vpop.f32.mrf.mxu0
  %v2967 = vadd.f32 0.0, %v2966
  %2968 = vmatprep.mubr.f32.mxu0 0.0
  %2969 = vmatmul.mubr.f32.gmra.mxu0 %v2818
  %v2970 = vpop.f32.mrf.mxu0
  %v2971 = vadd.f32 0.0, %v2970
  %v2972 = vpop.f32.mrf.mxu0
  %v2973 = vadd.f32 0.0, %v2972
  %2974 = vmatprep.mubr.f32.mxu0 0.0
  %2975 = vmatmul.mubr.f32.gmra.mxu0 %v2821
  %v2976 = vpop.f32.mrf.mxu0
  %v2977 = vadd.f32 0.0, %v2976
  %v2978 = vpop.f32.mrf.mxu0
  %v2979 = vadd.f32 0.0, %v2978
  %2980 = vmatprep.mubr.f32.mxu0 0.0
  %2981 = vmatmul.mubr.f32.gmra.mxu0 %v2824
  %v2982 = vpop.f32.mrf.mxu0
  %v2983 = vadd.f32 0.0, %v2982
  %v2984 = vpop.f32.mrf.mxu0
  %v2985 = vadd.f32 0.0, %v2984
  %2986 = vdwg.mxu0
  %2987 = vmatprep.subr.mxu0 0.0
  %2988 = vmatpush1.msra.mxu0 0.0
  %2989 = vmatprep.subr.mxu0 0.0
  %2990 = vmatpush1.msra.mxu0 0.0
  %2991 = vmatprep.subr.mxu0 0.0
  %2992 = vmatpush1.msra.mxu0 0.0
  %2993 = vmatprep.subr.mxu0 0.0
  %2994 = vmatpush1.msra.mxu0 0.0
  %2995 = vmatprep.subr.mxu0 0.0
  %2996 = vmatpush1.msra.mxu0 0.0
  %2997 = vmatprep.subr.mxu0 0.0
  %2998 = vmatpush1.msra.mxu0 0.0
  %2999 = vmatprep.subr.mxu0 0.0
  %3000 = vmatpush1.msra.mxu0 0.0
  %3001 = vmatprep.subr.mxu0 0.0
  %3002 = vmatpush1.msra.mxu0 0.0
  %3003 = vmatprep.subr.mxu0 %v2487
  %3004 = vmatpush1.msra.mxu0 %v2486
  %3005 = vmatprep.subr.mxu0 %v2483
  %3006 = vmatpush1.msra.mxu0 %v2482
  %3007 = vmatprep.subr.mxu0 %v2479
  %3008 = vmatpush1.msra.mxu0 %v2478
  %3009 = vmatprep.subr.mxu0 %v2475
  %3010 = vmatpush1.msra.mxu0 %v2474
  %3011 = vmatprep.subr.mxu0 %v2471
  %3012 = vmatpush1.msra.mxu0 %v2470
  %3013 = vmatprep.subr.mxu0 %v2467
  %3014 = vmatpush1.msra.mxu0 %v2466
  %3015 = vmatprep.subr.mxu0 %v2463
  %3016 = vmatpush1.msra.mxu0 %v2462
  %3017 = vmatprep.subr.mxu0 %v2459
  %3018 = vmatpush1.msra.mxu0 %v2458
  %3019 = vmatprep.subr.mxu0 0.0
  %3020 = vmatpush2.msra.mxu0 0.0
  %3021 = vmatprep.subr.mxu0 0.0
  %3022 = vmatpush2.msra.mxu0 0.0
  %3023 = vmatprep.subr.mxu0 0.0
  %3024 = vmatpush2.msra.mxu0 0.0
  %3025 = vmatprep.subr.mxu0 0.0
  %3026 = vmatpush2.msra.mxu0 0.0
  %3027 = vmatprep.subr.mxu0 0.0
  %3028 = vmatpush2.msra.mxu0 0.0
  %3029 = vmatprep.subr.mxu0 0.0
  %3030 = vmatpush2.msra.mxu0 0.0
  %3031 = vmatprep.subr.mxu0 0.0
  %3032 = vmatpush2.msra.mxu0 0.0
  %3033 = vmatprep.subr.mxu0 0.0
  %3034 = vmatpush2.msra.mxu0 0.0
  %3035 = vmatprep.subr.mxu0 0.0
  %3036 = vmatpush2.msra.mxu0 0.0
  %3037 = vmatprep.subr.mxu0 0.0
  %3038 = vmatpush2.msra.mxu0 0.0
  %3039 = vmatprep.subr.mxu0 0.0
  %3040 = vmatpush2.msra.mxu0 0.0
  %3041 = vmatprep.subr.mxu0 0.0
  %3042 = vmatpush2.msra.mxu0 0.0
  %3043 = vmatprep.subr.mxu0 0.0
  %3044 = vmatpush2.msra.mxu0 0.0
  %3045 = vmatprep.subr.mxu0 0.0
  %3046 = vmatpush2.msra.mxu0 0.0
  %3047 = vmatprep.subr.mxu0 0.0
  %3048 = vmatpush2.msra.mxu0 0.0
  %3049 = vmatprep.subr.mxu0 0.0
  %3050 = vmatpush2.msra.mxu0 0.0
  %3051 = vmatprep.mubr.f32.mxu0 0.0
  %3052 = vmatmul.mubr.f32.gmra.mxu0 %v2779
  %v3053 = vpop.f32.mrf.mxu0
  %v3054 = vadd.f32 0.0, %v3053
  %v3055 = vpop.f32.mrf.mxu0
  %v3056 = vadd.f32 0.0, %v3055
  %3057 = vmatprep.mubr.f32.mxu0 0.0
  %3058 = vmatmul.mubr.f32.gmra.mxu0 %v2782
  %v3059 = vpop.f32.mrf.mxu0
  %v3060 = vadd.f32 0.0, %v3059
  %v3061 = vpop.f32.mrf.mxu0
  %v3062 = vadd.f32 0.0, %v3061
  %3063 = vmatprep.mubr.f32.mxu0 0.0
  %3064 = vmatmul.mubr.f32.gmra.mxu0 %v2785
  %v3065 = vpop.f32.mrf.mxu0
  %v3066 = vadd.f32 0.0, %v3065
  %v3067 = vpop.f32.mrf.mxu0
  %v3068 = vadd.f32 0.0, %v3067
  %3069 = vmatprep.mubr.f32.mxu0 0.0
  %3070 = vmatmul.mubr.f32.gmra.mxu0 %v2788
  %v3071 = vpop.f32.mrf.mxu0
  %v3072 = vadd.f32 0.0, %v3071
  %v3073 = vpop.f32.mrf.mxu0
  %v3074 = vadd.f32 0.0, %v3073
  %3075 = vmatprep.mubr.f32.mxu0 0.0
  %3076 = vmatmul.mubr.f32.gmra.mxu0 %v2791
  %v3077 = vpop.f32.mrf.mxu0
  %v3078 = vadd.f32 0.0, %v3077
  %v3079 = vpop.f32.mrf.mxu0
  %v3080 = vadd.f32 0.0, %v3079
  %3081 = vmatprep.mubr.f32.mxu0 0.0
  %3082 = vmatmul.mubr.f32.gmra.mxu0 %v2794
  %v3083 = vpop.f32.mrf.mxu0
  %v3084 = vadd.f32 0.0, %v3083
  %v3085 = vpop.f32.mrf.mxu0
  %v3086 = vadd.f32 0.0, %v3085
  %3087 = vmatprep.mubr.f32.mxu0 0.0
  %3088 = vmatmul.mubr.f32.gmra.mxu0 %v2797
  %v3089 = vpop.f32.mrf.mxu0
  %v3090 = vadd.f32 0.0, %v3089
  %v3091 = vpop.f32.mrf.mxu0
  %v3092 = vadd.f32 0.0, %v3091
  %3093 = vmatprep.mubr.f32.mxu0 0.0
  %3094 = vmatmul.mubr.f32.gmra.mxu0 %v2800
  %v3095 = vpop.f32.mrf.mxu0
  %v3096 = vadd.f32 0.0, %v3095
  %v3097 = vpop.f32.mrf.mxu0
  %v3098 = vadd.f32 0.0, %v3097
  %3099 = vmatprep.mubr.f32.mxu0 0.0
  %3100 = vmatmul.mubr.f32.gmra.mxu0 %v2803
  %v3101 = vpop.f32.mrf.mxu0
  %v3102 = vadd.f32 0.0, %v3101
  %v3103 = vpop.f32.mrf.mxu0
  %v3104 = vadd.f32 0.0, %v3103
  %3105 = vmatprep.mubr.f32.mxu0 0.0
  %3106 = vmatmul.mubr.f32.gmra.mxu0 %v2806
  %v3107 = vpop.f32.mrf.mxu0
  %v3108 = vadd.f32 0.0, %v3107
  %v3109 = vpop.f32.mrf.mxu0
  %v3110 = vadd.f32 0.0, %v3109
  %3111 = vmatprep.mubr.f32.mxu0 0.0
  %3112 = vmatmul.mubr.f32.gmra.mxu0 %v2809
  %v3113 = vpop.f32.mrf.mxu0
  %v3114 = vadd.f32 0.0, %v3113
  %v3115 = vpop.f32.mrf.mxu0
  %v3116 = vadd.f32 0.0, %v3115
  %3117 = vmatprep.mubr.f32.mxu0 0.0
  %3118 = vmatmul.mubr.f32.gmra.mxu0 %v2812
  %v3119 = vpop.f32.mrf.mxu0
  %v3120 = vadd.f32 0.0, %v3119
  %v3121 = vpop.f32.mrf.mxu0
  %v3122 = vadd.f32 0.0, %v3121
  %3123 = vmatprep.mubr.f32.mxu0 0.0
  %3124 = vmatmul.mubr.f32.gmra.mxu0 %v2815
  %v3125 = vpop.f32.mrf.mxu0
  %v3126 = vadd.f32 0.0, %v3125
  %v3127 = vpop.f32.mrf.mxu0
  %v3128 = vadd.f32 0.0, %v3127
  %3129 = vmatprep.mubr.f32.mxu0 0.0
  %3130 = vmatmul.mubr.f32.gmra.mxu0 %v2818
  %v3131 = vpop.f32.mrf.mxu0
  %v3132 = vadd.f32 0.0, %v3131
  %v3133 = vpop.f32.mrf.mxu0
  %v3134 = vadd.f32 0.0, %v3133
  %3135 = vmatprep.mubr.f32.mxu0 0.0
  %3136 = vmatmul.mubr.f32.gmra.mxu0 %v2821
  %v3137 = vpop.f32.mrf.mxu0
  %v3138 = vadd.f32 0.0, %v3137
  %v3139 = vpop.f32.mrf.mxu0
  %v3140 = vadd.f32 0.0, %v3139
  %3141 = vmatprep.mubr.f32.mxu0 0.0
  %3142 = vmatmul.mubr.f32.gmra.mxu0 %v2824
  %v3143 = vpop.f32.mrf.mxu0
  %v3144 = vadd.f32 0.0, %v3143
  %v3145 = vpop.f32.mrf.mxu0
  %v3146 = vadd.f32 0.0, %v3145
  %3147 = vdwg.mxu0
  %v3149 = vsel %vm2777, %v2744, 0
  %v3152 = vsel %vm2777, %v2745, 0
  %v3155 = vsel %vm2777, %v2746, 0
  %v3158 = vsel %vm2777, %v2747, 0
  %v3161 = vsel %vm2777, %v2748, 0
  %v3164 = vsel %vm2777, %v2749, 0
  %v3167 = vsel %vm2777, %v2750, 0
  %v3170 = vsel %vm2777, %v2751, 0
  %v3173 = vsel %vm2777, %v2752, 0
  %v3176 = vsel %vm2777, %v2753, 0
  %v3179 = vsel %vm2777, %v2754, 0
  %v3182 = vsel %vm2777, %v2755, 0
  %v3185 = vsel %vm2777, %v2756, 0
  %v3188 = vsel %vm2777, %v2757, 0
  %v3191 = vsel %vm2777, %v2758, 0
  %v3194 = vsel %vm2777, %v2759, 0
  %3196 = vmatprep.subr.mxu0 0.0
  %3197 = vmatpush1.msra.mxu0 0.0
  %3198 = vmatprep.subr.mxu0 0.0
  %3199 = vmatpush1.msra.mxu0 0.0
  %3200 = vmatprep.subr.mxu0 0.0
  %3201 = vmatpush1.msra.mxu0 0.0
  %3202 = vmatprep.subr.mxu0 0.0
  %3203 = vmatpush1.msra.mxu0 0.0
  %3204 = vmatprep.subr.mxu0 0.0
  %3205 = vmatpush1.msra.mxu0 0.0
  %3206 = vmatprep.subr.mxu0 0.0
  %3207 = vmatpush1.msra.mxu0 0.0
  %3208 = vmatprep.subr.mxu0 0.0
  %3209 = vmatpush1.msra.mxu0 0.0
  %3210 = vmatprep.subr.mxu0 0.0
  %3211 = vmatpush1.msra.mxu0 0.0
  %3212 = vmatprep.subr.mxu0 %v2613
  %3213 = vmatpush1.msra.mxu0 %v2612
  %3214 = vmatprep.subr.mxu0 %v2609
  %3215 = vmatpush1.msra.mxu0 %v2608
  %3216 = vmatprep.subr.mxu0 %v2605
  %3217 = vmatpush1.msra.mxu0 %v2604
  %3218 = vmatprep.subr.mxu0 %v2601
  %3219 = vmatpush1.msra.mxu0 %v2600
  %3220 = vmatprep.subr.mxu0 %v2597
  %3221 = vmatpush1.msra.mxu0 %v2596
  %3222 = vmatprep.subr.mxu0 %v2593
  %3223 = vmatpush1.msra.mxu0 %v2592
  %3224 = vmatprep.subr.mxu0 %v2589
  %3225 = vmatpush1.msra.mxu0 %v2588
  %3226 = vmatprep.subr.mxu0 %v2585
  %3227 = vmatpush1.msra.mxu0 %v2584
  %3228 = vmatprep.subr.mxu0 0.0
  %3229 = vmatpush2.msra.mxu0 0.0
  %3230 = vmatprep.subr.mxu0 0.0
  %3231 = vmatpush2.msra.mxu0 0.0
  %3232 = vmatprep.subr.mxu0 0.0
  %3233 = vmatpush2.msra.mxu0 0.0
  %3234 = vmatprep.subr.mxu0 0.0
  %3235 = vmatpush2.msra.mxu0 0.0
  %3236 = vmatprep.subr.mxu0 0.0
  %3237 = vmatpush2.msra.mxu0 0.0
  %3238 = vmatprep.subr.mxu0 0.0
  %3239 = vmatpush2.msra.mxu0 0.0
  %3240 = vmatprep.subr.mxu0 0.0
  %3241 = vmatpush2.msra.mxu0 0.0
  %3242 = vmatprep.subr.mxu0 0.0
  %3243 = vmatpush2.msra.mxu0 0.0
  %3244 = vmatprep.subr.mxu0 0.0
  %3245 = vmatpush2.msra.mxu0 0.0
  %3246 = vmatprep.subr.mxu0 0.0
  %3247 = vmatpush2.msra.mxu0 0.0
  %3248 = vmatprep.subr.mxu0 0.0
  %3249 = vmatpush2.msra.mxu0 0.0
  %3250 = vmatprep.subr.mxu0 0.0
  %3251 = vmatpush2.msra.mxu0 0.0
  %3252 = vmatprep.subr.mxu0 0.0
  %3253 = vmatpush2.msra.mxu0 0.0
  %3254 = vmatprep.subr.mxu0 0.0
  %3255 = vmatpush2.msra.mxu0 0.0
  %3256 = vmatprep.subr.mxu0 0.0
  %3257 = vmatpush2.msra.mxu0 0.0
  %3258 = vmatprep.subr.mxu0 0.0
  %3259 = vmatpush2.msra.mxu0 0.0
  %3260 = vmatprep.mubr.f32.mxu0 0.0
  %3261 = vmatmul.mubr.f32.gmra.mxu0 %v3149
  %v3262 = vpop.f32.mrf.mxu0
  %v3263 = vadd.f32 %v2893, %v3262
  %v3264 = vpop.f32.mrf.mxu0
  %v3265 = vadd.f32 %v2895, %v3264
  %3266 = vmatprep.mubr.f32.mxu0 0.0
  %3267 = vmatmul.mubr.f32.gmra.mxu0 %v3152
  %v3268 = vpop.f32.mrf.mxu0
  %v3269 = vadd.f32 %v2899, %v3268
  %v3270 = vpop.f32.mrf.mxu0
  %v3271 = vadd.f32 %v2901, %v3270
  %3272 = vmatprep.mubr.f32.mxu0 0.0
  %3273 = vmatmul.mubr.f32.gmra.mxu0 %v3155
  %v3274 = vpop.f32.mrf.mxu0
  %v3275 = vadd.f32 %v2905, %v3274
  %v3276 = vpop.f32.mrf.mxu0
  %v3277 = vadd.f32 %v2907, %v3276
  %3278 = vmatprep.mubr.f32.mxu0 0.0
  %3279 = vmatmul.mubr.f32.gmra.mxu0 %v3158
  %v3280 = vpop.f32.mrf.mxu0
  %v3281 = vadd.f32 %v2911, %v3280
  %v3282 = vpop.f32.mrf.mxu0
  %v3283 = vadd.f32 %v2913, %v3282
  %3284 = vmatprep.mubr.f32.mxu0 0.0
  %3285 = vmatmul.mubr.f32.gmra.mxu0 %v3161
  %v3286 = vpop.f32.mrf.mxu0
  %v3287 = vadd.f32 %v2917, %v3286
  %v3288 = vpop.f32.mrf.mxu0
  %v3289 = vadd.f32 %v2919, %v3288
  %3290 = vmatprep.mubr.f32.mxu0 0.0
  %3291 = vmatmul.mubr.f32.gmra.mxu0 %v3164
  %v3292 = vpop.f32.mrf.mxu0
  %v3293 = vadd.f32 %v2923, %v3292
  %v3294 = vpop.f32.mrf.mxu0
  %v3295 = vadd.f32 %v2925, %v3294
  %3296 = vmatprep.mubr.f32.mxu0 0.0
  %3297 = vmatmul.mubr.f32.gmra.mxu0 %v3167
  %v3298 = vpop.f32.mrf.mxu0
  %v3299 = vadd.f32 %v2929, %v3298
  %v3300 = vpop.f32.mrf.mxu0
  %v3301 = vadd.f32 %v2931, %v3300
  %3302 = vmatprep.mubr.f32.mxu0 0.0
  %3303 = vmatmul.mubr.f32.gmra.mxu0 %v3170
  %v3304 = vpop.f32.mrf.mxu0
  %v3305 = vadd.f32 %v2935, %v3304
  %v3306 = vpop.f32.mrf.mxu0
  %v3307 = vadd.f32 %v2937, %v3306
  %3308 = vmatprep.mubr.f32.mxu0 0.0
  %3309 = vmatmul.mubr.f32.gmra.mxu0 %v3173
  %v3310 = vpop.f32.mrf.mxu0
  %v3311 = vadd.f32 %v2941, %v3310
  %v3312 = vpop.f32.mrf.mxu0
  %v3313 = vadd.f32 %v2943, %v3312
  %3314 = vmatprep.mubr.f32.mxu0 0.0
  %3315 = vmatmul.mubr.f32.gmra.mxu0 %v3176
  %v3316 = vpop.f32.mrf.mxu0
  %v3317 = vadd.f32 %v2947, %v3316
  %v3318 = vpop.f32.mrf.mxu0
  %v3319 = vadd.f32 %v2949, %v3318
  %3320 = vmatprep.mubr.f32.mxu0 0.0
  %3321 = vmatmul.mubr.f32.gmra.mxu0 %v3179
  %v3322 = vpop.f32.mrf.mxu0
  %v3323 = vadd.f32 %v2953, %v3322
  %v3324 = vpop.f32.mrf.mxu0
  %v3325 = vadd.f32 %v2955, %v3324
  %3326 = vmatprep.mubr.f32.mxu0 0.0
  %3327 = vmatmul.mubr.f32.gmra.mxu0 %v3182
  %v3328 = vpop.f32.mrf.mxu0
  %v3329 = vadd.f32 %v2959, %v3328
  %v3330 = vpop.f32.mrf.mxu0
  %v3331 = vadd.f32 %v2961, %v3330
  %3332 = vmatprep.mubr.f32.mxu0 0.0
  %3333 = vmatmul.mubr.f32.gmra.mxu0 %v3185
  %v3334 = vpop.f32.mrf.mxu0
  %v3335 = vadd.f32 %v2965, %v3334
  %v3336 = vpop.f32.mrf.mxu0
  %v3337 = vadd.f32 %v2967, %v3336
  %3338 = vmatprep.mubr.f32.mxu0 0.0
  %3339 = vmatmul.mubr.f32.gmra.mxu0 %v3188
  %v3340 = vpop.f32.mrf.mxu0
  %v3341 = vadd.f32 %v2971, %v3340
  %v3342 = vpop.f32.mrf.mxu0
  %v3343 = vadd.f32 %v2973, %v3342
  %3344 = vmatprep.mubr.f32.mxu0 0.0
  %3345 = vmatmul.mubr.f32.gmra.mxu0 %v3191
  %v3346 = vpop.f32.mrf.mxu0
  %v3347 = vadd.f32 %v2977, %v3346
  %v3348 = vpop.f32.mrf.mxu0
  %v3349 = vadd.f32 %v2979, %v3348
  %3350 = vmatprep.mubr.f32.mxu0 0.0
  %3351 = vmatmul.mubr.f32.gmra.mxu0 %v3194
  %v3352 = vpop.f32.mrf.mxu0
  %v3353 = vadd.f32 %v2983, %v3352
  %v3354 = vpop.f32.mrf.mxu0
  %v3355 = vadd.f32 %v2985, %v3354
  %3356 = vdwg.mxu0
  %3357 = vmatprep.subr.mxu0 0.0
  %3358 = vmatpush1.msra.mxu0 0.0
  %3359 = vmatprep.subr.mxu0 0.0
  %3360 = vmatpush1.msra.mxu0 0.0
  %3361 = vmatprep.subr.mxu0 0.0
  %3362 = vmatpush1.msra.mxu0 0.0
  %3363 = vmatprep.subr.mxu0 0.0
  %3364 = vmatpush1.msra.mxu0 0.0
  %3365 = vmatprep.subr.mxu0 0.0
  %3366 = vmatpush1.msra.mxu0 0.0
  %3367 = vmatprep.subr.mxu0 0.0
  %3368 = vmatpush1.msra.mxu0 0.0
  %3369 = vmatprep.subr.mxu0 0.0
  %3370 = vmatpush1.msra.mxu0 0.0
  %3371 = vmatprep.subr.mxu0 0.0
  %3372 = vmatpush1.msra.mxu0 0.0
  %3373 = vmatprep.subr.mxu0 %v2615
  %3374 = vmatpush1.msra.mxu0 %v2614
  %3375 = vmatprep.subr.mxu0 %v2611
  %3376 = vmatpush1.msra.mxu0 %v2610
  %3377 = vmatprep.subr.mxu0 %v2607
  %3378 = vmatpush1.msra.mxu0 %v2606
  %3379 = vmatprep.subr.mxu0 %v2603
  %3380 = vmatpush1.msra.mxu0 %v2602
  %3381 = vmatprep.subr.mxu0 %v2599
  %3382 = vmatpush1.msra.mxu0 %v2598
  %3383 = vmatprep.subr.mxu0 %v2595
  %3384 = vmatpush1.msra.mxu0 %v2594
  %3385 = vmatprep.subr.mxu0 %v2591
  %3386 = vmatpush1.msra.mxu0 %v2590
  %3387 = vmatprep.subr.mxu0 %v2587
  %3388 = vmatpush1.msra.mxu0 %v2586
  %3389 = vmatprep.subr.mxu0 0.0
  %3390 = vmatpush2.msra.mxu0 0.0
  %3391 = vmatprep.subr.mxu0 0.0
  %3392 = vmatpush2.msra.mxu0 0.0
  %3393 = vmatprep.subr.mxu0 0.0
  %3394 = vmatpush2.msra.mxu0 0.0
  %3395 = vmatprep.subr.mxu0 0.0
  %3396 = vmatpush2.msra.mxu0 0.0
  %3397 = vmatprep.subr.mxu0 0.0
  %3398 = vmatpush2.msra.mxu0 0.0
  %3399 = vmatprep.subr.mxu0 0.0
  %3400 = vmatpush2.msra.mxu0 0.0
  %3401 = vmatprep.subr.mxu0 0.0
  %3402 = vmatpush2.msra.mxu0 0.0
  %3403 = vmatprep.subr.mxu0 0.0
  %3404 = vmatpush2.msra.mxu0 0.0
  %3405 = vmatprep.subr.mxu0 0.0
  %3406 = vmatpush2.msra.mxu0 0.0
  %3407 = vmatprep.subr.mxu0 0.0
  %3408 = vmatpush2.msra.mxu0 0.0
  %3409 = vmatprep.subr.mxu0 0.0
  %3410 = vmatpush2.msra.mxu0 0.0
  %3411 = vmatprep.subr.mxu0 0.0
  %3412 = vmatpush2.msra.mxu0 0.0
  %3413 = vmatprep.subr.mxu0 0.0
  %3414 = vmatpush2.msra.mxu0 0.0
  %3415 = vmatprep.subr.mxu0 0.0
  %3416 = vmatpush2.msra.mxu0 0.0
  %3417 = vmatprep.subr.mxu0 0.0
  %3418 = vmatpush2.msra.mxu0 0.0
  %3419 = vmatprep.subr.mxu0 0.0
  %3420 = vmatpush2.msra.mxu0 0.0
  %3421 = vmatprep.mubr.f32.mxu0 0.0
  %3422 = vmatmul.mubr.f32.gmra.mxu0 %v3149
  %v3423 = vpop.f32.mrf.mxu0
  %v3424 = vadd.f32 %v3054, %v3423
  %v3425 = vpop.f32.mrf.mxu0
  %v3426 = vadd.f32 %v3056, %v3425
  %3427 = vmatprep.mubr.f32.mxu0 0.0
  %3428 = vmatmul.mubr.f32.gmra.mxu0 %v3152
  %v3429 = vpop.f32.mrf.mxu0
  %v3430 = vadd.f32 %v3060, %v3429
  %v3431 = vpop.f32.mrf.mxu0
  %v3432 = vadd.f32 %v3062, %v3431
  %3433 = vmatprep.mubr.f32.mxu0 0.0
  %3434 = vmatmul.mubr.f32.gmra.mxu0 %v3155
  %v3435 = vpop.f32.mrf.mxu0
  %v3436 = vadd.f32 %v3066, %v3435
  %v3437 = vpop.f32.mrf.mxu0
  %v3438 = vadd.f32 %v3068, %v3437
  %3439 = vmatprep.mubr.f32.mxu0 0.0
  %3440 = vmatmul.mubr.f32.gmra.mxu0 %v3158
  %v3441 = vpop.f32.mrf.mxu0
  %v3442 = vadd.f32 %v3072, %v3441
  %v3443 = vpop.f32.mrf.mxu0
  %v3444 = vadd.f32 %v3074, %v3443
  %3445 = vmatprep.mubr.f32.mxu0 0.0
  %3446 = vmatmul.mubr.f32.gmra.mxu0 %v3161
  %v3447 = vpop.f32.mrf.mxu0
  %v3448 = vadd.f32 %v3078, %v3447
  %v3449 = vpop.f32.mrf.mxu0
  %v3450 = vadd.f32 %v3080, %v3449
  %3451 = vmatprep.mubr.f32.mxu0 0.0
  %3452 = vmatmul.mubr.f32.gmra.mxu0 %v3164
  %v3453 = vpop.f32.mrf.mxu0
  %v3454 = vadd.f32 %v3084, %v3453
  %v3455 = vpop.f32.mrf.mxu0
  %v3456 = vadd.f32 %v3086, %v3455
  %3457 = vmatprep.mubr.f32.mxu0 0.0
  %3458 = vmatmul.mubr.f32.gmra.mxu0 %v3167
  %v3459 = vpop.f32.mrf.mxu0
  %v3460 = vadd.f32 %v3090, %v3459
  %v3461 = vpop.f32.mrf.mxu0
  %v3462 = vadd.f32 %v3092, %v3461
  %3463 = vmatprep.mubr.f32.mxu0 0.0
  %3464 = vmatmul.mubr.f32.gmra.mxu0 %v3170
  %v3465 = vpop.f32.mrf.mxu0
  %v3466 = vadd.f32 %v3096, %v3465
  %v3467 = vpop.f32.mrf.mxu0
  %v3468 = vadd.f32 %v3098, %v3467
  %3469 = vmatprep.mubr.f32.mxu0 0.0
  %3470 = vmatmul.mubr.f32.gmra.mxu0 %v3173
  %v3471 = vpop.f32.mrf.mxu0
  %v3472 = vadd.f32 %v3102, %v3471
  %v3473 = vpop.f32.mrf.mxu0
  %v3474 = vadd.f32 %v3104, %v3473
  %3475 = vmatprep.mubr.f32.mxu0 0.0
  %3476 = vmatmul.mubr.f32.gmra.mxu0 %v3176
  %v3477 = vpop.f32.mrf.mxu0
  %v3478 = vadd.f32 %v3108, %v3477
  %v3479 = vpop.f32.mrf.mxu0
  %v3480 = vadd.f32 %v3110, %v3479
  %3481 = vmatprep.mubr.f32.mxu0 0.0
  %3482 = vmatmul.mubr.f32.gmra.mxu0 %v3179
  %v3483 = vpop.f32.mrf.mxu0
  %v3484 = vadd.f32 %v3114, %v3483
  %v3485 = vpop.f32.mrf.mxu0
  %v3486 = vadd.f32 %v3116, %v3485
  %3487 = vmatprep.mubr.f32.mxu0 0.0
  %3488 = vmatmul.mubr.f32.gmra.mxu0 %v3182
  %v3489 = vpop.f32.mrf.mxu0
  %v3490 = vadd.f32 %v3120, %v3489
  %v3491 = vpop.f32.mrf.mxu0
  %v3492 = vadd.f32 %v3122, %v3491
  %3493 = vmatprep.mubr.f32.mxu0 0.0
  %3494 = vmatmul.mubr.f32.gmra.mxu0 %v3185
  %v3495 = vpop.f32.mrf.mxu0
  %v3496 = vadd.f32 %v3126, %v3495
  %v3497 = vpop.f32.mrf.mxu0
  %v3498 = vadd.f32 %v3128, %v3497
  %3499 = vmatprep.mubr.f32.mxu0 0.0
  %3500 = vmatmul.mubr.f32.gmra.mxu0 %v3188
  %v3501 = vpop.f32.mrf.mxu0
  %v3502 = vadd.f32 %v3132, %v3501
  %v3503 = vpop.f32.mrf.mxu0
  %v3504 = vadd.f32 %v3134, %v3503
  %3505 = vmatprep.mubr.f32.mxu0 0.0
  %3506 = vmatmul.mubr.f32.gmra.mxu0 %v3191
  %v3507 = vpop.f32.mrf.mxu0
  %v3508 = vadd.f32 %v3138, %v3507
  %v3509 = vpop.f32.mrf.mxu0
  %v3510 = vadd.f32 %v3140, %v3509
  %3511 = vmatprep.mubr.f32.mxu0 0.0
  %3512 = vmatmul.mubr.f32.gmra.mxu0 %v3194
  %v3513 = vpop.f32.mrf.mxu0
  %v3514 = vadd.f32 %v3144, %v3513
  %v3515 = vpop.f32.mrf.mxu0
  %v3516 = vadd.f32 %v3146, %v3515
  %3517 = vdwg.mxu0
  %s3518 = scalar_lea.vmem %s7, 256
  %v3519 = vld [vmem:[%s3518] sm:$0xff]
  %v3520 = vld [vmem:[%s3518 + $0x8] sm:$0xff]
  %v3521 = vld [vmem:[%s3518 + $0x10] sm:$0xff]
  %v3522 = vld [vmem:[%s3518 + $0x18] sm:$0xff]
  %v3523 = vld [vmem:[%s3518 + $0x20] sm:$0xff]
  %v3524 = vld [vmem:[%s3518 + $0x28] sm:$0xff]
  %v3525 = vld [vmem:[%s3518 + $0x30] sm:$0xff]
  %v3526 = vld [vmem:[%s3518 + $0x38] sm:$0xff]
  %v3527 = vld [vmem:[%s3518 + $0x40] sm:$0xff]
  %v3528 = vld [vmem:[%s3518 + $0x48] sm:$0xff]
  %v3529 = vld [vmem:[%s3518 + $0x50] sm:$0xff]
  %v3530 = vld [vmem:[%s3518 + $0x58] sm:$0xff]
  %v3531 = vld [vmem:[%s3518 + $0x60] sm:$0xff]
  %v3532 = vld [vmem:[%s3518 + $0x68] sm:$0xff]
  %v3533 = vld [vmem:[%s3518 + $0x70] sm:$0xff]
  %v3534 = vld [vmem:[%s3518 + $0x78] sm:$0xff]
  %v3536 = vsel %vm2777, %v3519, 0
  %v3539 = vsel %vm2777, %v3520, 0
  %v3542 = vsel %vm2777, %v3521, 0
  %v3545 = vsel %vm2777, %v3522, 0
  %v3548 = vsel %vm2777, %v3523, 0
  %v3551 = vsel %vm2777, %v3524, 0
  %v3554 = vsel %vm2777, %v3525, 0
  %v3557 = vsel %vm2777, %v3526, 0
  %v3560 = vsel %vm2777, %v3527, 0
  %v3563 = vsel %vm2777, %v3528, 0
  %v3566 = vsel %vm2777, %v3529, 0
  %v3569 = vsel %vm2777, %v3530, 0
  %v3572 = vsel %vm2777, %v3531, 0
  %v3575 = vsel %vm2777, %v3532, 0
  %v3578 = vsel %vm2777, %v3533, 0
  %v3581 = vsel %vm2777, %v3534, 0
  %3583 = vmatprep.subr.mxu0 0.0
  %3584 = vmatpush1.msra.mxu0 0.0
  %3585 = vmatprep.subr.mxu0 0.0
  %3586 = vmatpush1.msra.mxu0 0.0
  %3587 = vmatprep.subr.mxu0 0.0
  %3588 = vmatpush1.msra.mxu0 0.0
  %3589 = vmatprep.subr.mxu0 0.0
  %3590 = vmatpush1.msra.mxu0 0.0
  %3591 = vmatprep.subr.mxu0 0.0
  %3592 = vmatpush1.msra.mxu0 0.0
  %3593 = vmatprep.subr.mxu0 0.0
  %3594 = vmatpush1.msra.mxu0 0.0
  %3595 = vmatprep.subr.mxu0 0.0
  %3596 = vmatpush1.msra.mxu0 0.0
  %3597 = vmatprep.subr.mxu0 0.0
  %3598 = vmatpush1.msra.mxu0 0.0
  %3599 = vmatprep.subr.mxu0 %v2741
  %3600 = vmatpush1.msra.mxu0 %v2740
  %3601 = vmatprep.subr.mxu0 %v2737
  %3602 = vmatpush1.msra.mxu0 %v2736
  %3603 = vmatprep.subr.mxu0 %v2733
  %3604 = vmatpush1.msra.mxu0 %v2732
  %3605 = vmatprep.subr.mxu0 %v2729
  %3606 = vmatpush1.msra.mxu0 %v2728
  %3607 = vmatprep.subr.mxu0 %v2725
  %3608 = vmatpush1.msra.mxu0 %v2724
  %3609 = vmatprep.subr.mxu0 %v2721
  %3610 = vmatpush1.msra.mxu0 %v2720
  %3611 = vmatprep.subr.mxu0 %v2717
  %3612 = vmatpush1.msra.mxu0 %v2716
  %3613 = vmatprep.subr.mxu0 %v2713
  %3614 = vmatpush1.msra.mxu0 %v2712
  %3615 = vmatprep.subr.mxu0 0.0
  %3616 = vmatpush2.msra.mxu0 0.0
  %3617 = vmatprep.subr.mxu0 0.0
  %3618 = vmatpush2.msra.mxu0 0.0
  %3619 = vmatprep.subr.mxu0 0.0
  %3620 = vmatpush2.msra.mxu0 0.0
  %3621 = vmatprep.subr.mxu0 0.0
  %3622 = vmatpush2.msra.mxu0 0.0
  %3623 = vmatprep.subr.mxu0 0.0
  %3624 = vmatpush2.msra.mxu0 0.0
  %3625 = vmatprep.subr.mxu0 0.0
  %3626 = vmatpush2.msra.mxu0 0.0
  %3627 = vmatprep.subr.mxu0 0.0
  %3628 = vmatpush2.msra.mxu0 0.0
  %3629 = vmatprep.subr.mxu0 0.0
  %3630 = vmatpush2.msra.mxu0 0.0
  %3631 = vmatprep.subr.mxu0 0.0
  %3632 = vmatpush2.msra.mxu0 0.0
  %3633 = vmatprep.subr.mxu0 0.0
  %3634 = vmatpush2.msra.mxu0 0.0
  %3635 = vmatprep.subr.mxu0 0.0
  %3636 = vmatpush2.msra.mxu0 0.0
  %3637 = vmatprep.subr.mxu0 0.0
  %3638 = vmatpush2.msra.mxu0 0.0
  %3639 = vmatprep.subr.mxu0 0.0
  %3640 = vmatpush2.msra.mxu0 0.0
  %3641 = vmatprep.subr.mxu0 0.0
  %3642 = vmatpush2.msra.mxu0 0.0
  %3643 = vmatprep.subr.mxu0 0.0
  %3644 = vmatpush2.msra.mxu0 0.0
  %3645 = vmatprep.subr.mxu0 0.0
  %3646 = vmatpush2.msra.mxu0 0.0
  %3647 = vmatprep.mubr.f32.mxu0 0.0
  %3648 = vmatmul.mubr.f32.gmra.mxu0 %v3536
  %v3649 = vpop.f32.mrf.mxu0
  %v3650 = vadd.f32 0.0, %v3649
  %v3651 = vpop.f32.mrf.mxu0
  %v3652 = vadd.f32 0.0, %v3651
  %3653 = vmatprep.mubr.f32.mxu0 0.0
  %3654 = vmatmul.mubr.f32.gmra.mxu0 %v3539
  %v3655 = vpop.f32.mrf.mxu0
  %v3656 = vadd.f32 0.0, %v3655
  %v3657 = vpop.f32.mrf.mxu0
  %v3658 = vadd.f32 0.0, %v3657
  %3659 = vmatprep.mubr.f32.mxu0 0.0
  %3660 = vmatmul.mubr.f32.gmra.mxu0 %v3542
  %v3661 = vpop.f32.mrf.mxu0
  %v3662 = vadd.f32 0.0, %v3661
  %v3663 = vpop.f32.mrf.mxu0
  %v3664 = vadd.f32 0.0, %v3663
  %3665 = vmatprep.mubr.f32.mxu0 0.0
  %3666 = vmatmul.mubr.f32.gmra.mxu0 %v3545
  %v3667 = vpop.f32.mrf.mxu0
  %v3668 = vadd.f32 0.0, %v3667
  %v3669 = vpop.f32.mrf.mxu0
  %v3670 = vadd.f32 0.0, %v3669
  %3671 = vmatprep.mubr.f32.mxu0 0.0
  %3672 = vmatmul.mubr.f32.gmra.mxu0 %v3548
  %v3673 = vpop.f32.mrf.mxu0
  %v3674 = vadd.f32 0.0, %v3673
  %v3675 = vpop.f32.mrf.mxu0
  %v3676 = vadd.f32 0.0, %v3675
  %3677 = vmatprep.mubr.f32.mxu0 0.0
  %3678 = vmatmul.mubr.f32.gmra.mxu0 %v3551
  %v3679 = vpop.f32.mrf.mxu0
  %v3680 = vadd.f32 0.0, %v3679
  %v3681 = vpop.f32.mrf.mxu0
  %v3682 = vadd.f32 0.0, %v3681
  %3683 = vmatprep.mubr.f32.mxu0 0.0
  %3684 = vmatmul.mubr.f32.gmra.mxu0 %v3554
  %v3685 = vpop.f32.mrf.mxu0
  %v3686 = vadd.f32 0.0, %v3685
  %v3687 = vpop.f32.mrf.mxu0
  %v3688 = vadd.f32 0.0, %v3687
  %3689 = vmatprep.mubr.f32.mxu0 0.0
  %3690 = vmatmul.mubr.f32.gmra.mxu0 %v3557
  %v3691 = vpop.f32.mrf.mxu0
  %v3692 = vadd.f32 0.0, %v3691
  %v3693 = vpop.f32.mrf.mxu0
  %v3694 = vadd.f32 0.0, %v3693
  %3695 = vmatprep.mubr.f32.mxu0 0.0
  %3696 = vmatmul.mubr.f32.gmra.mxu0 %v3560
  %v3697 = vpop.f32.mrf.mxu0
  %v3698 = vadd.f32 0.0, %v3697
  %v3699 = vpop.f32.mrf.mxu0
  %v3700 = vadd.f32 0.0, %v3699
  %3701 = vmatprep.mubr.f32.mxu0 0.0
  %3702 = vmatmul.mubr.f32.gmra.mxu0 %v3563
  %v3703 = vpop.f32.mrf.mxu0
  %v3704 = vadd.f32 0.0, %v3703
  %v3705 = vpop.f32.mrf.mxu0
  %v3706 = vadd.f32 0.0, %v3705
  %3707 = vmatprep.mubr.f32.mxu0 0.0
  %3708 = vmatmul.mubr.f32.gmra.mxu0 %v3566
  %v3709 = vpop.f32.mrf.mxu0
  %v3710 = vadd.f32 0.0, %v3709
  %v3711 = vpop.f32.mrf.mxu0
  %v3712 = vadd.f32 0.0, %v3711
  %3713 = vmatprep.mubr.f32.mxu0 0.0
  %3714 = vmatmul.mubr.f32.gmra.mxu0 %v3569
  %v3715 = vpop.f32.mrf.mxu0
  %v3716 = vadd.f32 0.0, %v3715
  %v3717 = vpop.f32.mrf.mxu0
  %v3718 = vadd.f32 0.0, %v3717
  %3719 = vmatprep.mubr.f32.mxu0 0.0
  %3720 = vmatmul.mubr.f32.gmra.mxu0 %v3572
  %v3721 = vpop.f32.mrf.mxu0
  %v3722 = vadd.f32 0.0, %v3721
  %v3723 = vpop.f32.mrf.mxu0
  %v3724 = vadd.f32 0.0, %v3723
  %3725 = vmatprep.mubr.f32.mxu0 0.0
  %3726 = vmatmul.mubr.f32.gmra.mxu0 %v3575
  %v3727 = vpop.f32.mrf.mxu0
  %v3728 = vadd.f32 0.0, %v3727
  %v3729 = vpop.f32.mrf.mxu0
  %v3730 = vadd.f32 0.0, %v3729
  %3731 = vmatprep.mubr.f32.mxu0 0.0
  %3732 = vmatmul.mubr.f32.gmra.mxu0 %v3578
  %v3733 = vpop.f32.mrf.mxu0
  %v3734 = vadd.f32 0.0, %v3733
  %v3735 = vpop.f32.mrf.mxu0
  %v3736 = vadd.f32 0.0, %v3735
  %3737 = vmatprep.mubr.f32.mxu0 0.0
  %3738 = vmatmul.mubr.f32.gmra.mxu0 %v3581
  %v3739 = vpop.f32.mrf.mxu0
  %v3740 = vadd.f32 0.0, %v3739
  %v3741 = vpop.f32.mrf.mxu0
  %v3742 = vadd.f32 0.0, %v3741
  %3743 = vdwg.mxu0
  %3744 = vmatprep.subr.mxu0 0.0
  %3745 = vmatpush1.msra.mxu0 0.0
  %3746 = vmatprep.subr.mxu0 0.0
  %3747 = vmatpush1.msra.mxu0 0.0
  %3748 = vmatprep.subr.mxu0 0.0
  %3749 = vmatpush1.msra.mxu0 0.0
  %3750 = vmatprep.subr.mxu0 0.0
  %3751 = vmatpush1.msra.mxu0 0.0
  %3752 = vmatprep.subr.mxu0 0.0
  %3753 = vmatpush1.msra.mxu0 0.0
  %3754 = vmatprep.subr.mxu0 0.0
  %3755 = vmatpush1.msra.mxu0 0.0
  %3756 = vmatprep.subr.mxu0 0.0
  %3757 = vmatpush1.msra.mxu0 0.0
  %3758 = vmatprep.subr.mxu0 0.0
  %3759 = vmatpush1.msra.mxu0 0.0
  %3760 = vmatprep.subr.mxu0 %v2743
  %3761 = vmatpush1.msra.mxu0 %v2742
  %3762 = vmatprep.subr.mxu0 %v2739
  %3763 = vmatpush1.msra.mxu0 %v2738
  %3764 = vmatprep.subr.mxu0 %v2735
  %3765 = vmatpush1.msra.mxu0 %v2734
  %3766 = vmatprep.subr.mxu0 %v2731
  %3767 = vmatpush1.msra.mxu0 %v2730
  %3768 = vmatprep.subr.mxu0 %v2727
  %3769 = vmatpush1.msra.mxu0 %v2726
  %3770 = vmatprep.subr.mxu0 %v2723
  %3771 = vmatpush1.msra.mxu0 %v2722
  %3772 = vmatprep.subr.mxu0 %v2719
  %3773 = vmatpush1.msra.mxu0 %v2718
  %3774 = vmatprep.subr.mxu0 %v2715
  %3775 = vmatpush1.msra.mxu0 %v2714
  %3776 = vmatprep.subr.mxu0 0.0
  %3777 = vmatpush2.msra.mxu0 0.0
  %3778 = vmatprep.subr.mxu0 0.0
  %3779 = vmatpush2.msra.mxu0 0.0
  %3780 = vmatprep.subr.mxu0 0.0
  %3781 = vmatpush2.msra.mxu0 0.0
  %3782 = vmatprep.subr.mxu0 0.0
  %3783 = vmatpush2.msra.mxu0 0.0
  %3784 = vmatprep.subr.mxu0 0.0
  %3785 = vmatpush2.msra.mxu0 0.0
  %3786 = vmatprep.subr.mxu0 0.0
  %3787 = vmatpush2.msra.mxu0 0.0
  %3788 = vmatprep.subr.mxu0 0.0
  %3789 = vmatpush2.msra.mxu0 0.0
  %3790 = vmatprep.subr.mxu0 0.0
  %3791 = vmatpush2.msra.mxu0 0.0
  %3792 = vmatprep.subr.mxu0 0.0
  %3793 = vmatpush2.msra.mxu0 0.0
  %3794 = vmatprep.subr.mxu0 0.0
  %3795 = vmatpush2.msra.mxu0 0.0
  %3796 = vmatprep.subr.mxu0 0.0
  %3797 = vmatpush2.msra.mxu0 0.0
  %3798 = vmatprep.subr.mxu0 0.0
  %3799 = vmatpush2.msra.mxu0 0.0
  %3800 = vmatprep.subr.mxu0 0.0
  %3801 = vmatpush2.msra.mxu0 0.0
  %3802 = vmatprep.subr.mxu0 0.0
  %3803 = vmatpush2.msra.mxu0 0.0
  %3804 = vmatprep.subr.mxu0 0.0
  %3805 = vmatpush2.msra.mxu0 0.0
  %3806 = vmatprep.subr.mxu0 0.0
  %3807 = vmatpush2.msra.mxu0 0.0
  %3808 = vmatprep.mubr.f32.mxu0 0.0
  %3809 = vmatmul.mubr.f32.gmra.mxu0 %v3536
  %v3810 = vpop.f32.mrf.mxu0
  %v3811 = vadd.f32 0.0, %v3810
  %v3812 = vpop.f32.mrf.mxu0
  %v3813 = vadd.f32 0.0, %v3812
  %3814 = vmatprep.mubr.f32.mxu0 0.0
  %3815 = vmatmul.mubr.f32.gmra.mxu0 %v3539
  %v3816 = vpop.f32.mrf.mxu0
  %v3817 = vadd.f32 0.0, %v3816
  %v3818 = vpop.f32.mrf.mxu0
  %v3819 = vadd.f32 0.0, %v3818
  %3820 = vmatprep.mubr.f32.mxu0 0.0
  %3821 = vmatmul.mubr.f32.gmra.mxu0 %v3542
  %v3822 = vpop.f32.mrf.mxu0
  %v3823 = vadd.f32 0.0, %v3822
  %v3824 = vpop.f32.mrf.mxu0
  %v3825 = vadd.f32 0.0, %v3824
  %3826 = vmatprep.mubr.f32.mxu0 0.0
  %3827 = vmatmul.mubr.f32.gmra.mxu0 %v3545
  %v3828 = vpop.f32.mrf.mxu0
  %v3829 = vadd.f32 0.0, %v3828
  %v3830 = vpop.f32.mrf.mxu0
  %v3831 = vadd.f32 0.0, %v3830
  %3832 = vmatprep.mubr.f32.mxu0 0.0
  %3833 = vmatmul.mubr.f32.gmra.mxu0 %v3548
  %v3834 = vpop.f32.mrf.mxu0
  %v3835 = vadd.f32 0.0, %v3834
  %v3836 = vpop.f32.mrf.mxu0
  %v3837 = vadd.f32 0.0, %v3836
  %3838 = vmatprep.mubr.f32.mxu0 0.0
  %3839 = vmatmul.mubr.f32.gmra.mxu0 %v3551
  %v3840 = vpop.f32.mrf.mxu0
  %v3841 = vadd.f32 0.0, %v3840
  %v3842 = vpop.f32.mrf.mxu0
  %v3843 = vadd.f32 0.0, %v3842
  %3844 = vmatprep.mubr.f32.mxu0 0.0
  %3845 = vmatmul.mubr.f32.gmra.mxu0 %v3554
  %v3846 = vpop.f32.mrf.mxu0
  %v3847 = vadd.f32 0.0, %v3846
  %v3848 = vpop.f32.mrf.mxu0
  %v3849 = vadd.f32 0.0, %v3848
  %3850 = vmatprep.mubr.f32.mxu0 0.0
  %3851 = vmatmul.mubr.f32.gmra.mxu0 %v3557
  %v3852 = vpop.f32.mrf.mxu0
  %v3853 = vadd.f32 0.0, %v3852
  %v3854 = vpop.f32.mrf.mxu0
  %v3855 = vadd.f32 0.0, %v3854
  %3856 = vmatprep.mubr.f32.mxu0 0.0
  %3857 = vmatmul.mubr.f32.gmra.mxu0 %v3560
  %v3858 = vpop.f32.mrf.mxu0
  %v3859 = vadd.f32 0.0, %v3858
  %v3860 = vpop.f32.mrf.mxu0
  %v3861 = vadd.f32 0.0, %v3860
  %3862 = vmatprep.mubr.f32.mxu0 0.0
  %3863 = vmatmul.mubr.f32.gmra.mxu0 %v3563
  %v3864 = vpop.f32.mrf.mxu0
  %v3865 = vadd.f32 0.0, %v3864
  %v3866 = vpop.f32.mrf.mxu0
  %v3867 = vadd.f32 0.0, %v3866
  %3868 = vmatprep.mubr.f32.mxu0 0.0
  %3869 = vmatmul.mubr.f32.gmra.mxu0 %v3566
  %v3870 = vpop.f32.mrf.mxu0
  %v3871 = vadd.f32 0.0, %v3870
  %v3872 = vpop.f32.mrf.mxu0
  %v3873 = vadd.f32 0.0, %v3872
  %3874 = vmatprep.mubr.f32.mxu0 0.0
  %3875 = vmatmul.mubr.f32.gmra.mxu0 %v3569
  %v3876 = vpop.f32.mrf.mxu0
  %v3877 = vadd.f32 0.0, %v3876
  %v3878 = vpop.f32.mrf.mxu0
  %v3879 = vadd.f32 0.0, %v3878
  %3880 = vmatprep.mubr.f32.mxu0 0.0
  %3881 = vmatmul.mubr.f32.gmra.mxu0 %v3572
  %v3882 = vpop.f32.mrf.mxu0
  %v3883 = vadd.f32 0.0, %v3882
  %v3884 = vpop.f32.mrf.mxu0
  %v3885 = vadd.f32 0.0, %v3884
  %3886 = vmatprep.mubr.f32.mxu0 0.0
  %3887 = vmatmul.mubr.f32.gmra.mxu0 %v3575
  %v3888 = vpop.f32.mrf.mxu0
  %v3889 = vadd.f32 0.0, %v3888
  %v3890 = vpop.f32.mrf.mxu0
  %v3891 = vadd.f32 0.0, %v3890
  %3892 = vmatprep.mubr.f32.mxu0 0.0
  %3893 = vmatmul.mubr.f32.gmra.mxu0 %v3578
  %v3894 = vpop.f32.mrf.mxu0
  %v3895 = vadd.f32 0.0, %v3894
  %v3896 = vpop.f32.mrf.mxu0
  %v3897 = vadd.f32 0.0, %v3896
  %3898 = vmatprep.mubr.f32.mxu0 0.0
  %3899 = vmatmul.mubr.f32.gmra.mxu0 %v3581
  %v3900 = vpop.f32.mrf.mxu0
  %v3901 = vadd.f32 0.0, %v3900
  %v3902 = vpop.f32.mrf.mxu0
  %v3903 = vadd.f32 0.0, %v3902
  %3904 = vdwg.mxu0
  %v3905 = vadd.f32 %v3263, %v3650
  %v3906 = vadd.f32 %v3265, %v3652
  %v3907 = vadd.f32 %v3424, %v3811
  %v3908 = vadd.f32 %v3426, %v3813
  %v3909 = vadd.f32 %v3269, %v3656
  %v3910 = vadd.f32 %v3271, %v3658
  %v3911 = vadd.f32 %v3430, %v3817
  %v3912 = vadd.f32 %v3432, %v3819
  %v3913 = vadd.f32 %v3275, %v3662
  %v3914 = vadd.f32 %v3277, %v3664
  %v3915 = vadd.f32 %v3436, %v3823
  %v3916 = vadd.f32 %v3438, %v3825
  %v3917 = vadd.f32 %v3281, %v3668
  %v3918 = vadd.f32 %v3283, %v3670
  %v3919 = vadd.f32 %v3442, %v3829
  %v3920 = vadd.f32 %v3444, %v3831
  %v3921 = vadd.f32 %v3287, %v3674
  %v3922 = vadd.f32 %v3289, %v3676
  %v3923 = vadd.f32 %v3448, %v3835
  %v3924 = vadd.f32 %v3450, %v3837
  %v3925 = vadd.f32 %v3293, %v3680
  %v3926 = vadd.f32 %v3295, %v3682
  %v3927 = vadd.f32 %v3454, %v3841
  %v3928 = vadd.f32 %v3456, %v3843
  %v3929 = vadd.f32 %v3299, %v3686
  %v3930 = vadd.f32 %v3301, %v3688
  %v3931 = vadd.f32 %v3460, %v3847
  %v3932 = vadd.f32 %v3462, %v3849
  %v3933 = vadd.f32 %v3305, %v3692
  %v3934 = vadd.f32 %v3307, %v3694
  %v3935 = vadd.f32 %v3466, %v3853
  %v3936 = vadd.f32 %v3468, %v3855
  %v3937 = vadd.f32 %v3311, %v3698
  %v3938 = vadd.f32 %v3313, %v3700
  %v3939 = vadd.f32 %v3472, %v3859
  %v3940 = vadd.f32 %v3474, %v3861
  %v3941 = vadd.f32 %v3317, %v3704
  %v3942 = vadd.f32 %v3319, %v3706
  %v3943 = vadd.f32 %v3478, %v3865
  %v3944 = vadd.f32 %v3480, %v3867
  %v3945 = vadd.f32 %v3323, %v3710
  %v3946 = vadd.f32 %v3325, %v3712
  %v3947 = vadd.f32 %v3484, %v3871
  %v3948 = vadd.f32 %v3486, %v3873
  %v3949 = vadd.f32 %v3329, %v3716
  %v3950 = vadd.f32 %v3331, %v3718
  %v3951 = vadd.f32 %v3490, %v3877
  %v3952 = vadd.f32 %v3492, %v3879
  %v3953 = vadd.f32 %v3335, %v3722
  %v3954 = vadd.f32 %v3337, %v3724
  %v3955 = vadd.f32 %v3496, %v3883
  %v3956 = vadd.f32 %v3498, %v3885
  %v3957 = vadd.f32 %v3341, %v3728
  %v3958 = vadd.f32 %v3343, %v3730
  %v3959 = vadd.f32 %v3502, %v3889
  %v3960 = vadd.f32 %v3504, %v3891
  %v3961 = vadd.f32 %v3347, %v3734
  %v3962 = vadd.f32 %v3349, %v3736
  %v3963 = vadd.f32 %v3508, %v3895
  %v3964 = vadd.f32 %v3510, %v3897
  %v3965 = vadd.f32 %v3353, %v3740
  %v3966 = vadd.f32 %v3355, %v3742
  %v3967 = vadd.f32 %v3514, %v3901
  %v3968 = vadd.f32 %v3516, %v3903
  %v3969 = vld [vmem:[%s8] sm:$0xff]
  %v3970 = vld [vmem:[%s8 + $0x8] sm:$0xff]
  %v3971 = vld [vmem:[%s8 + $0x10] sm:$0xff]
  %v3972 = vld [vmem:[%s8 + $0x18] sm:$0xff]
  %v3973 = vld [vmem:[%s8 + $0x20] sm:$0xff]
  %v3974 = vld [vmem:[%s8 + $0x28] sm:$0xff]
  %v3975 = vld [vmem:[%s8 + $0x30] sm:$0xff]
  %v3976 = vld [vmem:[%s8 + $0x38] sm:$0xff]
  %v3977 = vld [vmem:[%s8 + $0x40] sm:$0xff]
  %v3978 = vld [vmem:[%s8 + $0x48] sm:$0xff]
  %v3979 = vld [vmem:[%s8 + $0x50] sm:$0xff]
  %v3980 = vld [vmem:[%s8 + $0x58] sm:$0xff]
  %v3981 = vld [vmem:[%s8 + $0x60] sm:$0xff]
  %v3982 = vld [vmem:[%s8 + $0x68] sm:$0xff]
  %v3983 = vld [vmem:[%s8 + $0x70] sm:$0xff]
  %v3984 = vld [vmem:[%s8 + $0x78] sm:$0xff]
  %3986 = vset.pattern.permute.xlu0 0
  %3987 = vperm.xlu0 %3986, %v3969
  %v3988 = vpop.permute.xlu0 %3987
  %3991 = vset.pattern.permute.xlu0 0
  %3992 = vperm.xlu0 %3991, %v3970
  %v3993 = vpop.permute.xlu0 %3992
  %3996 = vset.pattern.permute.xlu0 0
  %3997 = vperm.xlu0 %3996, %v3971
  %v3998 = vpop.permute.xlu0 %3997
  %4001 = vset.pattern.permute.xlu0 0
  %4002 = vperm.xlu0 %4001, %v3972
  %v4003 = vpop.permute.xlu0 %4002
  %4006 = vset.pattern.permute.xlu0 0
  %4007 = vperm.xlu0 %4006, %v3973
  %v4008 = vpop.permute.xlu0 %4007
  %4011 = vset.pattern.permute.xlu0 0
  %4012 = vperm.xlu0 %4011, %v3974
  %v4013 = vpop.permute.xlu0 %4012
  %4016 = vset.pattern.permute.xlu0 0
  %4017 = vperm.xlu0 %4016, %v3975
  %v4018 = vpop.permute.xlu0 %4017
  %4021 = vset.pattern.permute.xlu0 0
  %4022 = vperm.xlu0 %4021, %v3976
  %v4023 = vpop.permute.xlu0 %4022
  %4026 = vset.pattern.permute.xlu0 0
  %4027 = vperm.xlu0 %4026, %v3977
  %v4028 = vpop.permute.xlu0 %4027
  %4031 = vset.pattern.permute.xlu0 0
  %4032 = vperm.xlu0 %4031, %v3978
  %v4033 = vpop.permute.xlu0 %4032
  %4036 = vset.pattern.permute.xlu0 0
  %4037 = vperm.xlu0 %4036, %v3979
  %v4038 = vpop.permute.xlu0 %4037
  %4041 = vset.pattern.permute.xlu0 0
  %4042 = vperm.xlu0 %4041, %v3980
  %v4043 = vpop.permute.xlu0 %4042
  %4046 = vset.pattern.permute.xlu0 0
  %4047 = vperm.xlu0 %4046, %v3981
  %v4048 = vpop.permute.xlu0 %4047
  %4051 = vset.pattern.permute.xlu0 0
  %4052 = vperm.xlu0 %4051, %v3982
  %v4053 = vpop.permute.xlu0 %4052
  %4056 = vset.pattern.permute.xlu0 0
  %4057 = vperm.xlu0 %4056, %v3983
  %v4058 = vpop.permute.xlu0 %4057
  %4061 = vset.pattern.permute.xlu0 0
  %4062 = vperm.xlu0 %4061, %v3984
  %v4063 = vpop.permute.xlu0 %4062
  %v4065 = vadd.f32 %v3905, %v3988
  %v4066 = vadd.f32 %v3906, %v3988
  %v4067 = vadd.f32 %v3907, %v3988
  %v4068 = vadd.f32 %v3908, %v3988
  %v4069 = vadd.f32 %v3909, %v3993
  %v4070 = vadd.f32 %v3910, %v3993
  %v4071 = vadd.f32 %v3911, %v3993
  %v4072 = vadd.f32 %v3912, %v3993
  %v4073 = vadd.f32 %v3913, %v3998
  %v4074 = vadd.f32 %v3914, %v3998
  %v4075 = vadd.f32 %v3915, %v3998
  %v4076 = vadd.f32 %v3916, %v3998
  %v4077 = vadd.f32 %v3917, %v4003
  %v4078 = vadd.f32 %v3918, %v4003
  %v4079 = vadd.f32 %v3919, %v4003
  %v4080 = vadd.f32 %v3920, %v4003
  %v4081 = vadd.f32 %v3921, %v4008
  %v4082 = vadd.f32 %v3922, %v4008
  %v4083 = vadd.f32 %v3923, %v4008
  %v4084 = vadd.f32 %v3924, %v4008
  %v4085 = vadd.f32 %v3925, %v4013
  %v4086 = vadd.f32 %v3926, %v4013
  %v4087 = vadd.f32 %v3927, %v4013
  %v4088 = vadd.f32 %v3928, %v4013
  %v4089 = vadd.f32 %v3929, %v4018
  %v4090 = vadd.f32 %v3930, %v4018
  %v4091 = vadd.f32 %v3931, %v4018
  %v4092 = vadd.f32 %v3932, %v4018
  %v4093 = vadd.f32 %v3933, %v4023
  %v4094 = vadd.f32 %v3934, %v4023
  %v4095 = vadd.f32 %v3935, %v4023
  %v4096 = vadd.f32 %v3936, %v4023
  %v4097 = vadd.f32 %v3937, %v4028
  %v4098 = vadd.f32 %v3938, %v4028
  %v4099 = vadd.f32 %v3939, %v4028
  %v4100 = vadd.f32 %v3940, %v4028
  %v4101 = vadd.f32 %v3941, %v4033
  %v4102 = vadd.f32 %v3942, %v4033
  %v4103 = vadd.f32 %v3943, %v4033
  %v4104 = vadd.f32 %v3944, %v4033
  %v4105 = vadd.f32 %v3945, %v4038
  %v4106 = vadd.f32 %v3946, %v4038
  %v4107 = vadd.f32 %v3947, %v4038
  %v4108 = vadd.f32 %v3948, %v4038
  %v4109 = vadd.f32 %v3949, %v4043
  %v4110 = vadd.f32 %v3950, %v4043
  %v4111 = vadd.f32 %v3951, %v4043
  %v4112 = vadd.f32 %v3952, %v4043
  %v4113 = vadd.f32 %v3953, %v4048
  %v4114 = vadd.f32 %v3954, %v4048
  %v4115 = vadd.f32 %v3955, %v4048
  %v4116 = vadd.f32 %v3956, %v4048
  %v4117 = vadd.f32 %v3957, %v4053
  %v4118 = vadd.f32 %v3958, %v4053
  %v4119 = vadd.f32 %v3959, %v4053
  %v4120 = vadd.f32 %v3960, %v4053
  %v4121 = vadd.f32 %v3961, %v4058
  %v4122 = vadd.f32 %v3962, %v4058
  %v4123 = vadd.f32 %v3963, %v4058
  %v4124 = vadd.f32 %v3964, %v4058
  %v4125 = vadd.f32 %v3965, %v4063
  %v4126 = vadd.f32 %v3966, %v4063
  %v4127 = vadd.f32 %v3967, %v4063
  %v4128 = vadd.f32 %v3968, %v4063
  %v4129 = vmax.f32 %v4065, 0.0
  %v4130 = vmax.f32 %v4066, 0.0
  %v4131 = vmax.f32 %v4067, 0.0
  %v4132 = vmax.f32 %v4068, 0.0
  %v4133 = vmax.f32 %v4069, 0.0
  %v4134 = vmax.f32 %v4070, 0.0
  %v4135 = vmax.f32 %v4071, 0.0
  %v4136 = vmax.f32 %v4072, 0.0
  %v4137 = vmax.f32 %v4073, 0.0
  %v4138 = vmax.f32 %v4074, 0.0
  %v4139 = vmax.f32 %v4075, 0.0
  %v4140 = vmax.f32 %v4076, 0.0
  %v4141 = vmax.f32 %v4077, 0.0
  %v4142 = vmax.f32 %v4078, 0.0
  %v4143 = vmax.f32 %v4079, 0.0
  %v4144 = vmax.f32 %v4080, 0.0
  %v4145 = vmax.f32 %v4081, 0.0
  %v4146 = vmax.f32 %v4082, 0.0
  %v4147 = vmax.f32 %v4083, 0.0
  %v4148 = vmax.f32 %v4084, 0.0
  %v4149 = vmax.f32 %v4085, 0.0
  %v4150 = vmax.f32 %v4086, 0.0
  %v4151 = vmax.f32 %v4087, 0.0
  %v4152 = vmax.f32 %v4088, 0.0
  %v4153 = vmax.f32 %v4089, 0.0
  %v4154 = vmax.f32 %v4090, 0.0
  %v4155 = vmax.f32 %v4091, 0.0
  %v4156 = vmax.f32 %v4092, 0.0
  %v4157 = vmax.f32 %v4093, 0.0
  %v4158 = vmax.f32 %v4094, 0.0
  %v4159 = vmax.f32 %v4095, 0.0
  %v4160 = vmax.f32 %v4096, 0.0
  %v4161 = vmax.f32 %v4097, 0.0
  %v4162 = vmax.f32 %v4098, 0.0
  %v4163 = vmax.f32 %v4099, 0.0
  %v4164 = vmax.f32 %v4100, 0.0
  %v4165 = vmax.f32 %v4101, 0.0
  %v4166 = vmax.f32 %v4102, 0.0
  %v4167 = vmax.f32 %v4103, 0.0
  %v4168 = vmax.f32 %v4104, 0.0
  %v4169 = vmax.f32 %v4105, 0.0
  %v4170 = vmax.f32 %v4106, 0.0
  %v4171 = vmax.f32 %v4107, 0.0
  %v4172 = vmax.f32 %v4108, 0.0
  %v4173 = vmax.f32 %v4109, 0.0
  %v4174 = vmax.f32 %v4110, 0.0
  %v4175 = vmax.f32 %v4111, 0.0
  %v4176 = vmax.f32 %v4112, 0.0
  %v4177 = vmax.f32 %v4113, 0.0
  %v4178 = vmax.f32 %v4114, 0.0
  %v4179 = vmax.f32 %v4115, 0.0
  %v4180 = vmax.f32 %v4116, 0.0
  %v4181 = vmax.f32 %v4117, 0.0
  %v4182 = vmax.f32 %v4118, 0.0
  %v4183 = vmax.f32 %v4119, 0.0
  %v4184 = vmax.f32 %v4120, 0.0
  %v4185 = vmax.f32 %v4121, 0.0
  %v4186 = vmax.f32 %v4122, 0.0
  %v4187 = vmax.f32 %v4123, 0.0
  %v4188 = vmax.f32 %v4124, 0.0
  %v4189 = vmax.f32 %v4125, 0.0
  %v4190 = vmax.f32 %v4126, 0.0
  %v4191 = vmax.f32 %v4127, 0.0
  %v4192 = vmax.f32 %v4128, 0.0
  %v4193 = vld [vmem:[%s11] sm:$0xff]
  %v4195 = vcombine.high %v4193, %v4193
  %v4197 = vunpack.c.l.s4 1983009808
  %v4198 = vunpack.c.0.s8 %v4197
  %v4199 = vlaneseq
  %v4200 = vshrl.u32 %v4199, 7
  %v4201 = vsub.s32 %v4198, %v4200
  %v4202 = vrot.slane %v4193, %v4201
  %v4204 = vunpack.c.l.s4 1983009808
  %v4205 = vunpack.c.0.s8 %v4204
  %v4206 = vlaneseq
  %v4207 = vshrl.u32 %v4206, 7
  %v4208 = vsub.s32 %v4205, %v4207
  %v4209 = vrot.slane %v4195, %v4208
  %v4210 = vcombine.high %v4202, %v4202
  %v4211 = vcombine.high %v4209, %v4209
  %4216 = vmatprep.subr.mxu0 0.0
  %4217 = vmatpush1.xpose.msra.mxu0 0.0
  %4218 = vmatprep.subr.mxu0 0.0
  %4219 = vmatpush1.xpose.msra.mxu0 0.0
  %4220 = vmatprep.subr.mxu0 0.0
  %4221 = vmatpush1.xpose.msra.mxu0 0.0
  %4222 = vmatprep.subr.mxu0 0.0
  %4223 = vmatpush1.xpose.msra.mxu0 0.0
  %4224 = vmatprep.subr.mxu0 0.0
  %4225 = vmatpush1.xpose.msra.mxu0 0.0
  %4226 = vmatprep.subr.mxu0 0.0
  %4227 = vmatpush1.xpose.msra.mxu0 0.0
  %4228 = vmatprep.subr.mxu0 0.0
  %4229 = vmatpush1.xpose.msra.mxu0 0.0
  %4230 = vmatprep.subr.mxu0 0.0
  %4231 = vmatpush1.xpose.msra.mxu0 0.0
  %4232 = vmatprep.subr.mxu0 0.0
  %4233 = vmatpush1.xpose.msra.mxu0 0.0
  %4234 = vmatprep.subr.mxu0 0.0
  %4235 = vmatpush1.xpose.msra.mxu0 0.0
  %4236 = vmatprep.subr.mxu0 0.0
  %4237 = vmatpush1.xpose.msra.mxu0 0.0
  %4238 = vmatprep.subr.mxu0 0.0
  %4239 = vmatpush1.xpose.msra.mxu0 0.0
  %4240 = vmatprep.subr.mxu0 0.0
  %4241 = vmatpush1.xpose.msra.mxu0 0.0
  %4242 = vmatprep.subr.mxu0 0.0
  %4243 = vmatpush1.xpose.msra.mxu0 0.0
  %4244 = vmatprep.subr.mxu0 0.0
  %4245 = vmatpush1.xpose.msra.mxu0 0.0
  %4246 = vmatprep.subr.mxu0 %v4210
  %4247 = vmatpush1.xpose.msra.mxu0 %v4202
  %4248 = vmatprep.subr.mxu0 0.0
  %4249 = vmatpush2.xpose.msra.mxu0 0.0
  %4250 = vmatprep.subr.mxu0 0.0
  %4251 = vmatpush2.xpose.msra.mxu0 0.0
  %4252 = vmatprep.subr.mxu0 0.0
  %4253 = vmatpush2.xpose.msra.mxu0 0.0
  %4254 = vmatprep.subr.mxu0 0.0
  %4255 = vmatpush2.xpose.msra.mxu0 0.0
  %4256 = vmatprep.subr.mxu0 0.0
  %4257 = vmatpush2.xpose.msra.mxu0 0.0
  %4258 = vmatprep.subr.mxu0 0.0
  %4259 = vmatpush2.xpose.msra.mxu0 0.0
  %4260 = vmatprep.subr.mxu0 0.0
  %4261 = vmatpush2.xpose.msra.mxu0 0.0
  %4262 = vmatprep.subr.mxu0 0.0
  %4263 = vmatpush2.xpose.msra.mxu0 0.0
  %4264 = vmatprep.subr.mxu0 0.0
  %4265 = vmatpush2.xpose.msra.mxu0 0.0
  %4266 = vmatprep.subr.mxu0 0.0
  %4267 = vmatpush2.xpose.msra.mxu0 0.0
  %4268 = vmatprep.subr.mxu0 0.0
  %4269 = vmatpush2.xpose.msra.mxu0 0.0
  %4270 = vmatprep.subr.mxu0 0.0
  %4271 = vmatpush2.xpose.msra.mxu0 0.0
  %4272 = vmatprep.subr.mxu0 0.0
  %4273 = vmatpush2.xpose.msra.mxu0 0.0
  %4274 = vmatprep.subr.mxu0 0.0
  %4275 = vmatpush2.xpose.msra.mxu0 0.0
  %4276 = vmatprep.subr.mxu0 0.0
  %4277 = vmatpush2.xpose.msra.mxu0 0.0
  %4278 = vmatprep.subr.mxu0 0.0
  %4279 = vmatpush2.xpose.msra.mxu0 0.0
  %4280 = vmatprep.mubr.f32.mxu0 %v4130
  %4281 = vmatmul.mubr.f32.gmra.mxu0 %v4129
  %v4282 = vpop.f32.mrf.mxu0
  %v4283 = vadd.f32 0.0, %v4282
  %v4284 = vpop.f32.mrf.mxu0
  %4285 = vmatprep.mubr.f32.mxu0 %v4134
  %4286 = vmatmul.mubr.f32.gmra.mxu0 %v4133
  %v4287 = vpop.f32.mrf.mxu0
  %v4288 = vadd.f32 0.0, %v4287
  %v4289 = vpop.f32.mrf.mxu0
  %4290 = vmatprep.mubr.f32.mxu0 %v4138
  %4291 = vmatmul.mubr.f32.gmra.mxu0 %v4137
  %v4292 = vpop.f32.mrf.mxu0
  %v4293 = vadd.f32 0.0, %v4292
  %v4294 = vpop.f32.mrf.mxu0
  %4295 = vmatprep.mubr.f32.mxu0 %v4142
  %4296 = vmatmul.mubr.f32.gmra.mxu0 %v4141
  %v4297 = vpop.f32.mrf.mxu0
  %v4298 = vadd.f32 0.0, %v4297
  %v4299 = vpop.f32.mrf.mxu0
  %4300 = vmatprep.mubr.f32.mxu0 %v4146
  %4301 = vmatmul.mubr.f32.gmra.mxu0 %v4145
  %v4302 = vpop.f32.mrf.mxu0
  %v4303 = vadd.f32 0.0, %v4302
  %v4304 = vpop.f32.mrf.mxu0
  %4305 = vmatprep.mubr.f32.mxu0 %v4150
  %4306 = vmatmul.mubr.f32.gmra.mxu0 %v4149
  %v4307 = vpop.f32.mrf.mxu0
  %v4308 = vadd.f32 0.0, %v4307
  %v4309 = vpop.f32.mrf.mxu0
  %4310 = vmatprep.mubr.f32.mxu0 %v4154
  %4311 = vmatmul.mubr.f32.gmra.mxu0 %v4153
  %v4312 = vpop.f32.mrf.mxu0
  %v4313 = vadd.f32 0.0, %v4312
  %v4314 = vpop.f32.mrf.mxu0
  %4315 = vmatprep.mubr.f32.mxu0 %v4158
  %4316 = vmatmul.mubr.f32.gmra.mxu0 %v4157
  %v4317 = vpop.f32.mrf.mxu0
  %v4318 = vadd.f32 0.0, %v4317
  %v4319 = vpop.f32.mrf.mxu0
  %4320 = vmatprep.mubr.f32.mxu0 %v4162
  %4321 = vmatmul.mubr.f32.gmra.mxu0 %v4161
  %v4322 = vpop.f32.mrf.mxu0
  %v4323 = vadd.f32 0.0, %v4322
  %v4324 = vpop.f32.mrf.mxu0
  %4325 = vmatprep.mubr.f32.mxu0 %v4166
  %4326 = vmatmul.mubr.f32.gmra.mxu0 %v4165
  %v4327 = vpop.f32.mrf.mxu0
  %v4328 = vadd.f32 0.0, %v4327
  %v4329 = vpop.f32.mrf.mxu0
  %4330 = vmatprep.mubr.f32.mxu0 %v4170
  %4331 = vmatmul.mubr.f32.gmra.mxu0 %v4169
  %v4332 = vpop.f32.mrf.mxu0
  %v4333 = vadd.f32 0.0, %v4332
  %v4334 = vpop.f32.mrf.mxu0
  %4335 = vmatprep.mubr.f32.mxu0 %v4174
  %4336 = vmatmul.mubr.f32.gmra.mxu0 %v4173
  %v4337 = vpop.f32.mrf.mxu0
  %v4338 = vadd.f32 0.0, %v4337
  %v4339 = vpop.f32.mrf.mxu0
  %4340 = vmatprep.mubr.f32.mxu0 %v4178
  %4341 = vmatmul.mubr.f32.gmra.mxu0 %v4177
  %v4342 = vpop.f32.mrf.mxu0
  %v4343 = vadd.f32 0.0, %v4342
  %v4344 = vpop.f32.mrf.mxu0
  %4345 = vmatprep.mubr.f32.mxu0 %v4182
  %4346 = vmatmul.mubr.f32.gmra.mxu0 %v4181
  %v4347 = vpop.f32.mrf.mxu0
  %v4348 = vadd.f32 0.0, %v4347
  %v4349 = vpop.f32.mrf.mxu0
  %4350 = vmatprep.mubr.f32.mxu0 %v4186
  %4351 = vmatmul.mubr.f32.gmra.mxu0 %v4185
  %v4352 = vpop.f32.mrf.mxu0
  %v4353 = vadd.f32 0.0, %v4352
  %v4354 = vpop.f32.mrf.mxu0
  %4355 = vmatprep.mubr.f32.mxu0 %v4190
  %4356 = vmatmul.mubr.f32.gmra.mxu0 %v4189
  %v4357 = vpop.f32.mrf.mxu0
  %v4358 = vadd.f32 0.0, %v4357
  %v4359 = vpop.f32.mrf.mxu0
  %4360 = vdwg.mxu0
  %4361 = vmatprep.subr.mxu0 0.0
  %4362 = vmatpush1.xpose.msra.mxu0 0.0
  %4363 = vmatprep.subr.mxu0 0.0
  %4364 = vmatpush1.xpose.msra.mxu0 0.0
  %4365 = vmatprep.subr.mxu0 0.0
  %4366 = vmatpush1.xpose.msra.mxu0 0.0
  %4367 = vmatprep.subr.mxu0 0.0
  %4368 = vmatpush1.xpose.msra.mxu0 0.0
  %4369 = vmatprep.subr.mxu0 0.0
  %4370 = vmatpush1.xpose.msra.mxu0 0.0
  %4371 = vmatprep.subr.mxu0 0.0
  %4372 = vmatpush1.xpose.msra.mxu0 0.0
  %4373 = vmatprep.subr.mxu0 0.0
  %4374 = vmatpush1.xpose.msra.mxu0 0.0
  %4375 = vmatprep.subr.mxu0 0.0
  %4376 = vmatpush1.xpose.msra.mxu0 0.0
  %4377 = vmatprep.subr.mxu0 0.0
  %4378 = vmatpush1.xpose.msra.mxu0 0.0
  %4379 = vmatprep.subr.mxu0 0.0
  %4380 = vmatpush1.xpose.msra.mxu0 0.0
  %4381 = vmatprep.subr.mxu0 0.0
  %4382 = vmatpush1.xpose.msra.mxu0 0.0
  %4383 = vmatprep.subr.mxu0 0.0
  %4384 = vmatpush1.xpose.msra.mxu0 0.0
  %4385 = vmatprep.subr.mxu0 0.0
  %4386 = vmatpush1.xpose.msra.mxu0 0.0
  %4387 = vmatprep.subr.mxu0 0.0
  %4388 = vmatpush1.xpose.msra.mxu0 0.0
  %4389 = vmatprep.subr.mxu0 0.0
  %4390 = vmatpush1.xpose.msra.mxu0 0.0
  %4391 = vmatprep.subr.mxu0 %v4211
  %4392 = vmatpush1.xpose.msra.mxu0 %v4209
  %4393 = vmatprep.subr.mxu0 0.0
  %4394 = vmatpush2.xpose.msra.mxu0 0.0
  %4395 = vmatprep.subr.mxu0 0.0
  %4396 = vmatpush2.xpose.msra.mxu0 0.0
  %4397 = vmatprep.subr.mxu0 0.0
  %4398 = vmatpush2.xpose.msra.mxu0 0.0
  %4399 = vmatprep.subr.mxu0 0.0
  %4400 = vmatpush2.xpose.msra.mxu0 0.0
  %4401 = vmatprep.subr.mxu0 0.0
  %4402 = vmatpush2.xpose.msra.mxu0 0.0
  %4403 = vmatprep.subr.mxu0 0.0
  %4404 = vmatpush2.xpose.msra.mxu0 0.0
  %4405 = vmatprep.subr.mxu0 0.0
  %4406 = vmatpush2.xpose.msra.mxu0 0.0
  %4407 = vmatprep.subr.mxu0 0.0
  %4408 = vmatpush2.xpose.msra.mxu0 0.0
  %4409 = vmatprep.subr.mxu0 0.0
  %4410 = vmatpush2.xpose.msra.mxu0 0.0
  %4411 = vmatprep.subr.mxu0 0.0
  %4412 = vmatpush2.xpose.msra.mxu0 0.0
  %4413 = vmatprep.subr.mxu0 0.0
  %4414 = vmatpush2.xpose.msra.mxu0 0.0
  %4415 = vmatprep.subr.mxu0 0.0
  %4416 = vmatpush2.xpose.msra.mxu0 0.0
  %4417 = vmatprep.subr.mxu0 0.0
  %4418 = vmatpush2.xpose.msra.mxu0 0.0
  %4419 = vmatprep.subr.mxu0 0.0
  %4420 = vmatpush2.xpose.msra.mxu0 0.0
  %4421 = vmatprep.subr.mxu0 0.0
  %4422 = vmatpush2.xpose.msra.mxu0 0.0
  %4423 = vmatprep.subr.mxu0 0.0
  %4424 = vmatpush2.xpose.msra.mxu0 0.0
  %4425 = vmatprep.mubr.f32.mxu0 %v4132
  %4426 = vmatmul.mubr.f32.gmra.mxu0 %v4131
  %v4427 = vpop.f32.mrf.mxu0
  %v4428 = vadd.f32 %v4283, %v4427
  %v4429 = vpop.f32.mrf.mxu0
  %4430 = vmatprep.mubr.f32.mxu0 %v4136
  %4431 = vmatmul.mubr.f32.gmra.mxu0 %v4135
  %v4432 = vpop.f32.mrf.mxu0
  %v4433 = vadd.f32 %v4288, %v4432
  %v4434 = vpop.f32.mrf.mxu0
  %4435 = vmatprep.mubr.f32.mxu0 %v4140
  %4436 = vmatmul.mubr.f32.gmra.mxu0 %v4139
  %v4437 = vpop.f32.mrf.mxu0
  %v4438 = vadd.f32 %v4293, %v4437
  %v4439 = vpop.f32.mrf.mxu0
  %4440 = vmatprep.mubr.f32.mxu0 %v4144
  %4441 = vmatmul.mubr.f32.gmra.mxu0 %v4143
  %v4442 = vpop.f32.mrf.mxu0
  %v4443 = vadd.f32 %v4298, %v4442
  %v4444 = vpop.f32.mrf.mxu0
  %4445 = vmatprep.mubr.f32.mxu0 %v4148
  %4446 = vmatmul.mubr.f32.gmra.mxu0 %v4147
  %v4447 = vpop.f32.mrf.mxu0
  %v4448 = vadd.f32 %v4303, %v4447
  %v4449 = vpop.f32.mrf.mxu0
  %4450 = vmatprep.mubr.f32.mxu0 %v4152
  %4451 = vmatmul.mubr.f32.gmra.mxu0 %v4151
  %v4452 = vpop.f32.mrf.mxu0
  %v4453 = vadd.f32 %v4308, %v4452
  %v4454 = vpop.f32.mrf.mxu0
  %4455 = vmatprep.mubr.f32.mxu0 %v4156
  %4456 = vmatmul.mubr.f32.gmra.mxu0 %v4155
  %v4457 = vpop.f32.mrf.mxu0
  %v4458 = vadd.f32 %v4313, %v4457
  %v4459 = vpop.f32.mrf.mxu0
  %4460 = vmatprep.mubr.f32.mxu0 %v4160
  %4461 = vmatmul.mubr.f32.gmra.mxu0 %v4159
  %v4462 = vpop.f32.mrf.mxu0
  %v4463 = vadd.f32 %v4318, %v4462
  %v4464 = vpop.f32.mrf.mxu0
  %4465 = vmatprep.mubr.f32.mxu0 %v4164
  %4466 = vmatmul.mubr.f32.gmra.mxu0 %v4163
  %v4467 = vpop.f32.mrf.mxu0
  %v4468 = vadd.f32 %v4323, %v4467
  %v4469 = vpop.f32.mrf.mxu0
  %4470 = vmatprep.mubr.f32.mxu0 %v4168
  %4471 = vmatmul.mubr.f32.gmra.mxu0 %v4167
  %v4472 = vpop.f32.mrf.mxu0
  %v4473 = vadd.f32 %v4328, %v4472
  %v4474 = vpop.f32.mrf.mxu0
  %4475 = vmatprep.mubr.f32.mxu0 %v4172
  %4476 = vmatmul.mubr.f32.gmra.mxu0 %v4171
  %v4477 = vpop.f32.mrf.mxu0
  %v4478 = vadd.f32 %v4333, %v4477
  %v4479 = vpop.f32.mrf.mxu0
  %4480 = vmatprep.mubr.f32.mxu0 %v4176
  %4481 = vmatmul.mubr.f32.gmra.mxu0 %v4175
  %v4482 = vpop.f32.mrf.mxu0
  %v4483 = vadd.f32 %v4338, %v4482
  %v4484 = vpop.f32.mrf.mxu0
  %4485 = vmatprep.mubr.f32.mxu0 %v4180
  %4486 = vmatmul.mubr.f32.gmra.mxu0 %v4179
  %v4487 = vpop.f32.mrf.mxu0
  %v4488 = vadd.f32 %v4343, %v4487
  %v4489 = vpop.f32.mrf.mxu0
  %4490 = vmatprep.mubr.f32.mxu0 %v4184
  %4491 = vmatmul.mubr.f32.gmra.mxu0 %v4183
  %v4492 = vpop.f32.mrf.mxu0
  %v4493 = vadd.f32 %v4348, %v4492
  %v4494 = vpop.f32.mrf.mxu0
  %4495 = vmatprep.mubr.f32.mxu0 %v4188
  %4496 = vmatmul.mubr.f32.gmra.mxu0 %v4187
  %v4497 = vpop.f32.mrf.mxu0
  %v4498 = vadd.f32 %v4353, %v4497
  %v4499 = vpop.f32.mrf.mxu0
  %4500 = vmatprep.mubr.f32.mxu0 %v4192
  %4501 = vmatmul.mubr.f32.gmra.mxu0 %v4191
  %v4502 = vpop.f32.mrf.mxu0
  %v4503 = vadd.f32 %v4358, %v4502
  %v4504 = vpop.f32.mrf.mxu0
  %4505 = vdwg.mxu0
  %v4506 = vld [vmem:[%s9] sm:$0x1f]
  %v4507 = vld [vmem:[%s10] sm:$0x1f]
  %4509 = vset.pattern.permute.xlu0 0
  %4510 = vperm.xlu0 %4509, %v4507
  %v4511 = vpop.permute.xlu0 %4510
  %4513 = vmatprep.subr.mxu0 0.0
  %4514 = vmatpush1.msra.mxu0 %v4503
  %4515 = vmatprep.subr.mxu0 0.0
  %4516 = vmatpush1.msra.mxu0 %v4498
  %4517 = vmatprep.subr.mxu0 0.0
  %4518 = vmatpush1.msra.mxu0 %v4493
  %4519 = vmatprep.subr.mxu0 0.0
  %4520 = vmatpush1.msra.mxu0 %v4488
  %4521 = vmatprep.subr.mxu0 0.0
  %4522 = vmatpush1.msra.mxu0 %v4483
  %4523 = vmatprep.subr.mxu0 0.0
  %4524 = vmatpush1.msra.mxu0 %v4478
  %4525 = vmatprep.subr.mxu0 0.0
  %4526 = vmatpush1.msra.mxu0 %v4473
  %4527 = vmatprep.subr.mxu0 0.0
  %4528 = vmatpush1.msra.mxu0 %v4468
  %4529 = vmatprep.subr.mxu0 0.0
  %4530 = vmatpush1.msra.mxu0 %v4463
  %4531 = vmatprep.subr.mxu0 0.0
  %4532 = vmatpush1.msra.mxu0 %v4458
  %4533 = vmatprep.subr.mxu0 0.0
  %4534 = vmatpush1.msra.mxu0 %v4453
  %4535 = vmatprep.subr.mxu0 0.0
  %4536 = vmatpush1.msra.mxu0 %v4448
  %4537 = vmatprep.subr.mxu0 0.0
  %4538 = vmatpush1.msra.mxu0 %v4443
  %4539 = vmatprep.subr.mxu0 0.0
  %4540 = vmatpush1.msra.mxu0 %v4438
  %4541 = vmatprep.subr.mxu0 0.0
  %4542 = vmatpush1.msra.mxu0 %v4433
  %4543 = vmatprep.subr.mxu0 0.0
  %4544 = vmatpush1.msra.mxu0 %v4428
  %4545 = vmatprep.subr.mxu0 0.0
  %4546 = vmatpush2.msra.mxu0 0.0
  %4547 = vmatprep.subr.mxu0 0.0
  %4548 = vmatpush2.msra.mxu0 0.0
  %4549 = vmatprep.subr.mxu0 0.0
  %4550 = vmatpush2.msra.mxu0 0.0
  %4551 = vmatprep.subr.mxu0 0.0
  %4552 = vmatpush2.msra.mxu0 0.0
  %4553 = vmatprep.subr.mxu0 0.0
  %4554 = vmatpush2.msra.mxu0 0.0
  %4555 = vmatprep.subr.mxu0 0.0
  %4556 = vmatpush2.msra.mxu0 0.0
  %4557 = vmatprep.subr.mxu0 0.0
  %4558 = vmatpush2.msra.mxu0 0.0
  %4559 = vmatprep.subr.mxu0 0.0
  %4560 = vmatpush2.msra.mxu0 0.0
  %4561 = vmatprep.subr.mxu0 0.0
  %4562 = vmatpush2.msra.mxu0 0.0
  %4563 = vmatprep.subr.mxu0 0.0
  %4564 = vmatpush2.msra.mxu0 0.0
  %4565 = vmatprep.subr.mxu0 0.0
  %4566 = vmatpush2.msra.mxu0 0.0
  %4567 = vmatprep.subr.mxu0 0.0
  %4568 = vmatpush2.msra.mxu0 0.0
  %4569 = vmatprep.subr.mxu0 0.0
  %4570 = vmatpush2.msra.mxu0 0.0
  %4571 = vmatprep.subr.mxu0 0.0
  %4572 = vmatpush2.msra.mxu0 0.0
  %4573 = vmatprep.subr.mxu0 0.0
  %4574 = vmatpush2.msra.mxu0 0.0
  %4575 = vmatprep.subr.mxu0 0.0
  %4576 = vmatpush2.msra.mxu0 0.0
  %4577 = vmatprep.mubr.f32.mxu0 0.0
  %4578 = vmatmul.mubr.f32.gmra.mxu0 %v4506
  %v4579 = vpop.f32.mrf.mxu0
  %v4580 = vadd.f32 %v4511, %v4579
  %v4581 = vpop.f32.mrf.mxu0
  %4582 = vdwg.mxu0
  %vm4583 = vcmask 12288
  %v4584 = vsel %vm4583, %v4580, -inf
  %v4585 = vrot.slane %v4584, 4
  %v4586 = vmax.f32 %v4584, %v4585
  %v4587 = vrot.slane %v4586, 2
  %v4588 = vmax.f32 %v4586, %v4587
  %v4589 = vrot.slane %v4588, 1
  %v4590 = vmax.f32 %v4588, %v4589
  %v4591 = vsub.f32 %v4580, %v4590
  %v4592 = vmul.f32 %v4591, 1.442695
  %v4593 = vpow.pop %v4592
  %v4594 = vsel %vm4583, %v4593, 0.0
  %v4595 = vrot.slane %v4594, 4
  %v4596 = vadd.f32 %v4594, %v4595
  %v4597 = vrot.slane %v4596, 2
  %v4598 = vadd.f32 %v4596, %v4597
  %v4599 = vrot.slane %v4598, 1
  %v4600 = vadd.f32 %v4598, %v4599
  %v4601 = vlog2.pop %v4600
  %v4602 = vmul.f32 %v4601, 0.6931472
  %v4603 = vadd.f32 %v4590, %v4602
  %v4604 = vsub.f32 %v4580, %v4603
  %4605 = vst.msk [vmem:[%s12] sm:$0x1f] %vm4583, %v4604
  // Predicated region
  $region50: #{tpu_custom_call.1} parent=0 // pred_check
    _
  $region51: #{tpu_custom_call.1} parent=0 // pred_check_branch
    %4607 = sbr.rel (0) target = $region53
  $region52: #{tpu_custom_call.1} parent=0 // pred_region
    _
  $region53: #{tpu_custom_call.1} parent=0 // pred_fallthru
    _
  // Predicated region
  $region54: #{tpu_custom_call.1} parent=0 // pred_check
    _
  $region55: #{tpu_custom_call.1} parent=0 // pred_check_branch
    %4609 = sbr.rel (0) target = $region57
  $region56: #{tpu_custom_call.1} parent=0 // pred_region
    _
  $region57: #{tpu_custom_call.1} parent=0 // pred_fallthru
    _

</llo_original>
